<compile_context>
chip_gen: v7x
topology: tpu7x:2x2x1
jax: 0.10.0
libtpu: 0.0.40
codegen_flags: <defaults>
</compile_context>

<pallas_src>
import functools

import jax
import jax.numpy as jnp
from jax.experimental import pallas as pl
from jax.experimental.pallas import tpu as pltpu


def _up2_layer(xs, w_e, w_o, b, out_ref):
    """One stride-2 / pad-1 / K-4 ConvTranspose1d (+ReLU), polyphase.

    xs:      list of per-batch (Ly, C_in) f32 arrays (original, not upsampled)
    w_e/w_o: (2*C_in, C_out) bf16 phase weights  (even = [W1; W3], odd = [W0; W2])
    b:       (1, C_out) f32 bias
    out_ref: (B * 2 * Ly, C_out) f32 VMEM scratch, written row-interleaved.
    """
    B = len(xs)
    Ly, C_in = xs[0].shape
    zrow = jnp.zeros((1, C_in), jnp.float32)
    lhs_e_parts, lhs_o_parts = [], []
    for xb in xs:
        xp = jnp.concatenate([zrow, xb, zrow], axis=0)            # (Ly+2, C_in)
        prev, cur, nxt = xp[0:Ly], xp[1:Ly + 1], xp[2:Ly + 2]
        # out[2m]   = x[m]   @ W[...,1] + x[m-1] @ W[...,3]  -> lhs [cur | prev]
        # out[2m+1] = x[m+1] @ W[...,0] + x[m]   @ W[...,2]  -> lhs [nxt | cur]
        lhs_e_parts.append(jnp.concatenate([cur, prev], axis=1))  # (Ly, 2*C_in)
        lhs_o_parts.append(jnp.concatenate([nxt, cur], axis=1))
    lhs_e = jnp.concatenate(lhs_e_parts, axis=0).astype(jnp.bfloat16)
    lhs_o = jnp.concatenate(lhs_o_parts, axis=0).astype(jnp.bfloat16)
    e = jnp.maximum(jnp.dot(lhs_e, w_e, preferred_element_type=jnp.float32) + b, 0.0)
    o = jnp.maximum(jnp.dot(lhs_o, w_o, preferred_element_type=jnp.float32) + b, 0.0)
    # Interleave the two phases: out row 2m <- e[m], row 2m+1 <- o[m].
    # TODO(synk): for long sequences replace the unrolled row stores with a
    # bulk strided store / grid tiling over the length axis.
    for bi in range(B):
        for m in range(Ly):
            src = bi * Ly + m
            dst = (bi * Ly + m) * 2
            out_ref[pl.ds(dst, 1), :] = e[src:src + 1, :]
            out_ref[pl.ds(dst + 1, 1), :] = o[src:src + 1, :]


def _decoder_kernel(x_ref, w1e_ref, w1o_ref, b1_ref,
                    w2e_ref, w2o_ref, b2_ref, w3_ref, b3_ref,
                    out_ref, y1_ref, y2_ref, y3_ref, *, B, L):
    L1, L2 = 2 * L, 4 * L
    L3 = 3 * L2 - 3
    L3p = y3_ref.shape[0]

    # ---- layer 1: 64 -> 512, stride 2, pad 1 (+ReLU) --------------------
    xs = [x_ref[bi] for bi in range(B)]                           # (L, 64) each
    _up2_layer(xs, w1e_ref[...], w1o_ref[...], b1_ref[...], y1_ref)

    # ---- layer 2: 512 -> 256, stride 2, pad 1 (+ReLU) -------------------
    y1s = [y1_ref[pl.ds(bi * L1, L1), :] for bi in range(B)]      # (L1, 512)
    _up2_layer(y1s, w2e_ref[...], w2o_ref[...], b2_ref[...], y2_ref)

    # ---- layer 3: 256 -> 4, stride 3, pad 2 (no ReLU) -------------------
    #   out[3q+0] = y2[q]   @ W3[...,2]
    #   out[3q+1] = y2[q]   @ W3[...,3] + y2[q+1] @ W3[...,0]
    #   out[3q+2] = y2[q+1] @ W3[...,1]
    # All three phases share one (., 512) @ (512, 12) matmul.
    nq = L2 - 1
    lhs3_parts = []
    for bi in range(B):
        y2b = y2_ref[pl.ds(bi * L2, L2), :]                       # (L2, 256)
        lhs3_parts.append(jnp.concatenate([y2b[0:nq], y2b[1:L2]], axis=1))
    lhs3 = jnp.concatenate(lhs3_parts, axis=0).astype(jnp.bfloat16)
    y3 = jnp.dot(lhs3, w3_ref[...], preferred_element_type=jnp.float32) + b3_ref[...]

    # Zero the sublane-alignment padding rows (93 -> 96) once.
    if L3p > L3:
        y3_ref[pl.ds(L3, L3p - L3), :] = jnp.zeros((L3p - L3, 4), jnp.float32)

    # Assemble each batch element as (L3p, 4) rows in j-order, then store it
    # lane-dense in the caller's NCL layout: out_ref[b] = (4, L3p).
    for bi in range(B):
        for r in range(3):
            zr = y3[bi * nq:(bi + 1) * nq, 4 * r:4 * r + 4]       # (nq, 4)
            for q in range(nq):
                y3_ref[pl.ds(3 * q + r, 1), :] = zr[q:q + 1, :]
        out_ref[bi] = jnp.transpose(y3_ref[...], (1, 0)).astype(out_ref.dtype)


def _pick_block_batch(n, l):
    """Batch elements folded per grid step (raises matmul M), keeping >= 2
    grid steps when possible so v7x can shard the parallel axis on both TCs."""
    target = max(1, min(8, 256 // max(l, 1)))
    divisors = [d for d in range(1, n + 1) if n % d == 0 and d <= target]
    if n >= 2:
        par = [d for d in divisors if n // d >= 2]
        if par:
            divisors = par
    return max(divisors)


def _prep_weights(params):
    bf16 = jnp.bfloat16
    w1, b1 = params["w1"], params["b1"]
    w2, b2 = params["w2"], params["b2"]
    w3, b3 = params["w3"], params["b3"]
    # Stride-2 layers: fold the two taps of each phase into the contraction.
    w1e = jnp.concatenate([w1[:, :, 1], w1[:, :, 3]], axis=0).astype(bf16)   # (128, 512)
    w1o = jnp.concatenate([w1[:, :, 0], w1[:, :, 2]], axis=0).astype(bf16)
    w2e = jnp.concatenate([w2[:, :, 1], w2[:, :, 3]], axis=0).astype(bf16)   # (1024, 256)
    w2o = jnp.concatenate([w2[:, :, 0], w2[:, :, 2]], axis=0).astype(bf16)
    # Stride-3 layer: all three phases in one (512, 12) RHS.
    c2 = w3.shape[0]
    z = jnp.zeros((c2, 4), w3.dtype)
    w3c = jnp.concatenate(
        [jnp.concatenate([w3[:, :, 2], w3[:, :, 3], z], axis=1),   # rows: y2[q]
         jnp.concatenate([z, w3[:, :, 0], w3[:, :, 1]], axis=1)],  # rows: y2[q+1]
        axis=0).astype(bf16)                                       # (512, 12)
    b1r = b1.reshape(1, -1).astype(jnp.float32)
    b2r = b2.reshape(1, -1).astype(jnp.float32)
    b3r = jnp.concatenate([b3, b3, b3]).reshape(1, 12).astype(jnp.float32)
    return w1e, w1o, b1r, w2e, w2o, b2r, w3c, b3r


def decoder_forward(params, x):
    """x: (N, 64, L) f32  ->  (N, 4, 12*L - 3) f32 (matches the PyTorch module)."""
    N, c_in, L = x.shape
    C1, C2, C3 = 512, 256, 4
    L1, L2 = 2 * L, 4 * L
    L3 = 3 * L2 - 3
    L3p = -(-L3 // 8) * 8
    B = _pick_block_batch(N, L)

    x_nlc = jnp.transpose(x, (0, 2, 1)).astype(jnp.float32)        # (N, L, 64)
    w1e, w1o, b1r, w2e, w2o, b2r, w3c, b3r = _prep_weights(params)

    kernel = functools.partial(_decoder_kernel, B=B, L=L)
    out = pl.pallas_call(
        kernel,
        out_shape=jax.ShapeDtypeStruct((N, C3, L3p), jnp.float32),
        grid_spec=pltpu.PrefetchScalarGridSpec(
            num_scalar_prefetch=0,
            grid=(N // B,),
            in_specs=[
                pl.BlockSpec((B, L, c_in), lambda n: (n, 0, 0)),
                pl.BlockSpec((2 * c_in, C1), lambda n: (0, 0)),
                pl.BlockSpec((2 * c_in, C1), lambda n: (0, 0)),
                pl.BlockSpec((1, C1), lambda n: (0, 0)),
                pl.BlockSpec((2 * C1, C2), lambda n: (0, 0)),
                pl.BlockSpec((2 * C1, C2), lambda n: (0, 0)),
                pl.BlockSpec((1, C2), lambda n: (0, 0)),
                pl.BlockSpec((2 * C2, 3 * C3), lambda n: (0, 0)),
                pl.BlockSpec((1, 3 * C3), lambda n: (0, 0)),
            ],
            out_specs=pl.BlockSpec((B, C3, L3p), lambda n: (n, 0, 0)),
            scratch_shapes=[
                pltpu.VMEM((B * L1, C1), jnp.float32),   # layer-1 activations
                pltpu.VMEM((B * L2, C2), jnp.float32),   # layer-2 activations
                pltpu.VMEM((L3p, C3), jnp.float32),      # layer-3 row assembly
            ],
        ),
        compiler_params=pltpu.CompilerParams(
            dimension_semantics=("parallel",)),
    )(x_nlc, w1e, w1o, b1r, w2e, w2o, b2r, w3c, b3r)

    return out[:, :, :L3]                                          # crop 96 -> 93


def init_decoder_params(key):
    """Deterministic synthetic params; shapes match the PyTorch module."""
    ks = jax.random.split(key, 6)

    def uinit(k, shape, fan):
        bound = 1.0 / jnp.sqrt(jnp.float32(fan))
        return jax.random.uniform(k, shape, jnp.float32, -bound, bound)

    # PyTorch ConvTranspose1d weight layout: (C_in, C_out, K)
    return {
        "w1": uinit(ks[0], (64, 512, 4), 64 * 4),
        "b1": uinit(ks[1], (512,), 64 * 4),
        "w2": uinit(ks[2], (512, 256, 4), 512 * 4),
        "b2": uinit(ks[3], (256,), 512 * 4),
        "w3": uinit(ks[4], (256, 4, 4), 256 * 4),
        "b3": uinit(ks[5], (4,), 256 * 4),
    }


if __name__ == "__main__":
    key = jax.random.PRNGKey(0)
    pkey, xkey = jax.random.split(key)
    params = init_decoder_params(pkey)

    # Small deterministic input: batch=2, channels=64, seq=8
    x = jax.random.normal(xkey, (2, 64, 8), jnp.float32)

    out = jax.jit(decoder_forward)(params, x)
    out = jax.block_until_ready(out)

    assert out.shape == (2, 4, 93), out.shape   # 8 -> 16 -> 32 -> 93
    assert jnp.all(jnp.isfinite(out))
    print("KERNEL_OK")
</pallas_src>

<mosaic_0001>
module attributes {stable_mosaic.version = 11 : i64} {
  func.func @_decoder_kernel(%arg0: i32, %arg1: memref<1x8x64xf32, #tpu.memory_space<vmem>>, %arg2: memref<128x512xbf16, #tpu.memory_space<vmem>>, %arg3: memref<128x512xbf16, #tpu.memory_space<vmem>>, %arg4: memref<1x512xf32, #tpu.memory_space<vmem>>, %arg5: memref<1024x256xbf16, #tpu.memory_space<vmem>>, %arg6: memref<1024x256xbf16, #tpu.memory_space<vmem>>, %arg7: memref<1x256xf32, #tpu.memory_space<vmem>>, %arg8: memref<512x12xbf16, #tpu.memory_space<vmem>>, %arg9: memref<1x12xf32, #tpu.memory_space<vmem>>, %arg10: memref<1x4x96xf32, #tpu.memory_space<vmem>>, %arg11: memref<16x512xf32, #tpu.memory_space<vmem>>, %arg12: memref<32x256xf32, #tpu.memory_space<vmem>>, %arg13: memref<96x4xf32, #tpu.memory_space<vmem>>) attributes {dimension_semantics = [#tpu.dimension_semantics<parallel>], iteration_bounds = array<i64: 2>, scalar_prefetch = 0 : i64, scratch_operands = 3 : i64, tpu.core_type = #tpu.core_type<tc>, window_params = [{transform_indices = @transform_0, window_bounds = array<i64: 1, 8, 64>}, {pipeline_mode = #tpu.pipeline_mode<synchronous>, transform_indices = @transform_1, window_bounds = array<i64: 128, 512>}, {pipeline_mode = #tpu.pipeline_mode<synchronous>, transform_indices = @transform_2, window_bounds = array<i64: 128, 512>}, {pipeline_mode = #tpu.pipeline_mode<synchronous>, transform_indices = @transform_3, window_bounds = array<i64: 1, 512>}, {pipeline_mode = #tpu.pipeline_mode<synchronous>, transform_indices = @transform_4, window_bounds = array<i64: 1024, 256>}, {pipeline_mode = #tpu.pipeline_mode<synchronous>, transform_indices = @transform_5, window_bounds = array<i64: 1024, 256>}, {pipeline_mode = #tpu.pipeline_mode<synchronous>, transform_indices = @transform_6, window_bounds = array<i64: 1, 256>}, {pipeline_mode = #tpu.pipeline_mode<synchronous>, transform_indices = @transform_7, window_bounds = array<i64: 512, 12>}, {pipeline_mode = #tpu.pipeline_mode<synchronous>, transform_indices = @transform_8, window_bounds = array<i64: 1, 12>}, {transform_indices = @transform_9, window_bounds = array<i64: 1, 4, 96>}]} {
    %c0 = arith.constant 0 : index
    %c0_0 = arith.constant 0 : index
    %c0_1 = arith.constant 0 : index
    %0 = vector.load %arg1[%c0, %c0_0, %c0_1] : memref<1x8x64xf32, #tpu.memory_space<vmem>>, vector<1x8x64xf32>
    %1 = vector.shape_cast %0 : vector<1x8x64xf32> to vector<8x64xf32>
    %c0_2 = arith.constant 0 : index
    %c0_3 = arith.constant 0 : index
    %2 = vector.load %arg2[%c0_2, %c0_3] : memref<128x512xbf16, #tpu.memory_space<vmem>>, vector<128x512xbf16>
    %c0_4 = arith.constant 0 : index
    %c0_5 = arith.constant 0 : index
    %3 = vector.load %arg3[%c0_4, %c0_5] : memref<128x512xbf16, #tpu.memory_space<vmem>>, vector<128x512xbf16>
    %c0_6 = arith.constant 0 : index
    %c0_7 = arith.constant 0 : index
    %4 = vector.load %arg4[%c0_6, %c0_7] : memref<1x512xf32, #tpu.memory_space<vmem>>, vector<1x512xf32>
    %cst = arith.constant 0.000000e+00 : f32
    %5 = vector.broadcast %cst : f32 to vector<1x64xf32>
    %6 = tpu.concatenate %5, %1, %5 in 0 : vector<1x64xf32>, vector<8x64xf32>, vector<1x64xf32> -> vector<10x64xf32>
    %7 = vector.extract_strided_slice %6 {offsets = [0, 0], sizes = [8, 64], strides = [1, 1]} : vector<10x64xf32> to vector<8x64xf32>
    %8 = vector.extract_strided_slice %6 {offsets = [1, 0], sizes = [8, 64], strides = [1, 1]} : vector<10x64xf32> to vector<8x64xf32>
    %9 = vector.extract_strided_slice %6 {offsets = [2, 0], sizes = [8, 64], strides = [1, 1]} : vector<10x64xf32> to vector<8x64xf32>
    %10 = tpu.concatenate %8, %7 in 1 : vector<8x64xf32>, vector<8x64xf32> -> vector<8x128xf32>
    %11 = tpu.concatenate %9, %8 in 1 : vector<8x64xf32>, vector<8x64xf32> -> vector<8x128xf32>
    %12 = arith.truncf %10 : vector<8x128xf32> to vector<8x128xbf16>
    %13 = arith.truncf %11 : vector<8x128xf32> to vector<8x128xbf16>
    %cst_8 = arith.constant dense<0.000000e+00> : vector<8x512xf32>
    %14 = tpu.matmul %12, %2, %cst_8 {dimension_numbers = #tpu.dot_dimension_numbers<[1], [0], [0], [1], [0, 0, 1, 1], [], []>} : vector<8x128xbf16>, vector<128x512xbf16>, vector<8x512xf32> -> vector<8x512xf32>
    %15 = vector.broadcast %4 : vector<1x512xf32> to vector<8x512xf32>
    %16 = arith.addf %14, %15 : vector<8x512xf32>
    %cst_9 = arith.constant 0.000000e+00 : f32
    %17 = vector.broadcast %cst_9 : f32 to vector<8x512xf32>
    %18 = arith.maximumf %16, %17 : vector<8x512xf32>
    %cst_10 = arith.constant dense<0.000000e+00> : vector<8x512xf32>
    %19 = tpu.matmul %13, %3, %cst_10 {dimension_numbers = #tpu.dot_dimension_numbers<[1], [0], [0], [1], [0, 0, 1, 1], [], []>} : vector<8x128xbf16>, vector<128x512xbf16>, vector<8x512xf32> -> vector<8x512xf32>
    %20 = vector.broadcast %4 : vector<1x512xf32> to vector<8x512xf32>
    %21 = arith.addf %19, %20 : vector<8x512xf32>
    %cst_11 = arith.constant 0.000000e+00 : f32
    %22 = vector.broadcast %cst_11 : f32 to vector<8x512xf32>
    %23 = arith.maximumf %21, %22 : vector<8x512xf32>
    %24 = vector.extract_strided_slice %18 {offsets = [0, 0], sizes = [1, 512], strides = [1, 1]} : vector<8x512xf32> to vector<1x512xf32>
    %c0_12 = arith.constant 0 : index
    %c0_13 = arith.constant 0 : index
    %25 = vector.load %arg11[%c0_12, %c0_13] : memref<16x512xf32, #tpu.memory_space<vmem>>, vector<1x512xf32>
    tpu.vector_store %arg11[%c0_12, %c0_13], %24 {strides = array<i32>} : memref<16x512xf32, #tpu.memory_space<vmem>>, vector<1x512xf32>,
    %26 = vector.extract_strided_slice %23 {offsets = [0, 0], sizes = [1, 512], strides = [1, 1]} : vector<8x512xf32> to vector<1x512xf32>
    %c1 = arith.constant 1 : index
    %c0_14 = arith.constant 0 : index
    %27 = vector.load %arg11[%c1, %c0_14] : memref<16x512xf32, #tpu.memory_space<vmem>>, vector<1x512xf32>
    tpu.vector_store %arg11[%c1, %c0_14], %26 {strides = array<i32>} : memref<16x512xf32, #tpu.memory_space<vmem>>, vector<1x512xf32>,
    %28 = vector.extract_strided_slice %18 {offsets = [1, 0], sizes = [1, 512], strides = [1, 1]} : vector<8x512xf32> to vector<1x512xf32>
    %c2 = arith.constant 2 : index
    %c0_15 = arith.constant 0 : index
    %29 = vector.load %arg11[%c2, %c0_15] : memref<16x512xf32, #tpu.memory_space<vmem>>, vector<1x512xf32>
    tpu.vector_store %arg11[%c2, %c0_15], %28 {strides = array<i32>} : memref<16x512xf32, #tpu.memory_space<vmem>>, vector<1x512xf32>,
    %30 = vector.extract_strided_slice %23 {offsets = [1, 0], sizes = [1, 512], strides = [1, 1]} : vector<8x512xf32> to vector<1x512xf32>
    %c3 = arith.constant 3 : index
    %c0_16 = arith.constant 0 : index
    %31 = vector.load %arg11[%c3, %c0_16] : memref<16x512xf32, #tpu.memory_space<vmem>>, vector<1x512xf32>
    tpu.vector_store %arg11[%c3, %c0_16], %30 {strides = array<i32>} : memref<16x512xf32, #tpu.memory_space<vmem>>, vector<1x512xf32>,
    %32 = vector.extract_strided_slice %18 {offsets = [2, 0], sizes = [1, 512], strides = [1, 1]} : vector<8x512xf32> to vector<1x512xf32>
    %c4 = arith.constant 4 : index
    %c0_17 = arith.constant 0 : index
    %33 = vector.load %arg11[%c4, %c0_17] : memref<16x512xf32, #tpu.memory_space<vmem>>, vector<1x512xf32>
    tpu.vector_store %arg11[%c4, %c0_17], %32 {strides = array<i32>} : memref<16x512xf32, #tpu.memory_space<vmem>>, vector<1x512xf32>,
    %34 = vector.extract_strided_slice %23 {offsets = [2, 0], sizes = [1, 512], strides = [1, 1]} : vector<8x512xf32> to vector<1x512xf32>
    %c5 = arith.constant 5 : index
    %c0_18 = arith.constant 0 : index
    %35 = vector.load %arg11[%c5, %c0_18] : memref<16x512xf32, #tpu.memory_space<vmem>>, vector<1x512xf32>
    tpu.vector_store %arg11[%c5, %c0_18], %34 {strides = array<i32>} : memref<16x512xf32, #tpu.memory_space<vmem>>, vector<1x512xf32>,
    %36 = vector.extract_strided_slice %18 {offsets = [3, 0], sizes = [1, 512], strides = [1, 1]} : vector<8x512xf32> to vector<1x512xf32>
    %c6 = arith.constant 6 : index
    %c0_19 = arith.constant 0 : index
    %37 = vector.load %arg11[%c6, %c0_19] : memref<16x512xf32, #tpu.memory_space<vmem>>, vector<1x512xf32>
    tpu.vector_store %arg11[%c6, %c0_19], %36 {strides = array<i32>} : memref<16x512xf32, #tpu.memory_space<vmem>>, vector<1x512xf32>,
    %38 = vector.extract_strided_slice %23 {offsets = [3, 0], sizes = [1, 512], strides = [1, 1]} : vector<8x512xf32> to vector<1x512xf32>
    %c7 = arith.constant 7 : index
    %c0_20 = arith.constant 0 : index
    %39 = vector.load %arg11[%c7, %c0_20] : memref<16x512xf32, #tpu.memory_space<vmem>>, vector<1x512xf32>
    tpu.vector_store %arg11[%c7, %c0_20], %38 {strides = array<i32>} : memref<16x512xf32, #tpu.memory_space<vmem>>, vector<1x512xf32>,
    %40 = vector.extract_strided_slice %18 {offsets = [4, 0], sizes = [1, 512], strides = [1, 1]} : vector<8x512xf32> to vector<1x512xf32>
    %c8 = arith.constant 8 : index
    %c0_21 = arith.constant 0 : index
    %41 = vector.load %arg11[%c8, %c0_21] : memref<16x512xf32, #tpu.memory_space<vmem>>, vector<1x512xf32>
    tpu.vector_store %arg11[%c8, %c0_21], %40 {strides = array<i32>} : memref<16x512xf32, #tpu.memory_space<vmem>>, vector<1x512xf32>,
    %42 = vector.extract_strided_slice %23 {offsets = [4, 0], sizes = [1, 512], strides = [1, 1]} : vector<8x512xf32> to vector<1x512xf32>
    %c9 = arith.constant 9 : index
    %c0_22 = arith.constant 0 : index
    %43 = vector.load %arg11[%c9, %c0_22] : memref<16x512xf32, #tpu.memory_space<vmem>>, vector<1x512xf32>
    tpu.vector_store %arg11[%c9, %c0_22], %42 {strides = array<i32>} : memref<16x512xf32, #tpu.memory_space<vmem>>, vector<1x512xf32>,
    %44 = vector.extract_strided_slice %18 {offsets = [5, 0], sizes = [1, 512], strides = [1, 1]} : vector<8x512xf32> to vector<1x512xf32>
    %c10 = arith.constant 10 : index
    %c0_23 = arith.constant 0 : index
    %45 = vector.load %arg11[%c10, %c0_23] : memref<16x512xf32, #tpu.memory_space<vmem>>, vector<1x512xf32>
    tpu.vector_store %arg11[%c10, %c0_23], %44 {strides = array<i32>} : memref<16x512xf32, #tpu.memory_space<vmem>>, vector<1x512xf32>,
    %46 = vector.extract_strided_slice %23 {offsets = [5, 0], sizes = [1, 512], strides = [1, 1]} : vector<8x512xf32> to vector<1x512xf32>
    %c11 = arith.constant 11 : index
    %c0_24 = arith.constant 0 : index
    %47 = vector.load %arg11[%c11, %c0_24] : memref<16x512xf32, #tpu.memory_space<vmem>>, vector<1x512xf32>
    tpu.vector_store %arg11[%c11, %c0_24], %46 {strides = array<i32>} : memref<16x512xf32, #tpu.memory_space<vmem>>, vector<1x512xf32>,
    %48 = vector.extract_strided_slice %18 {offsets = [6, 0], sizes = [1, 512], strides = [1, 1]} : vector<8x512xf32> to vector<1x512xf32>
    %c12 = arith.constant 12 : index
    %c0_25 = arith.constant 0 : index
    %49 = vector.load %arg11[%c12, %c0_25] : memref<16x512xf32, #tpu.memory_space<vmem>>, vector<1x512xf32>
    tpu.vector_store %arg11[%c12, %c0_25], %48 {strides = array<i32>} : memref<16x512xf32, #tpu.memory_space<vmem>>, vector<1x512xf32>,
    %50 = vector.extract_strided_slice %23 {offsets = [6, 0], sizes = [1, 512], strides = [1, 1]} : vector<8x512xf32> to vector<1x512xf32>
    %c13 = arith.constant 13 : index
    %c0_26 = arith.constant 0 : index
    %51 = vector.load %arg11[%c13, %c0_26] : memref<16x512xf32, #tpu.memory_space<vmem>>, vector<1x512xf32>
    tpu.vector_store %arg11[%c13, %c0_26], %50 {strides = array<i32>} : memref<16x512xf32, #tpu.memory_space<vmem>>, vector<1x512xf32>,
    %52 = vector.extract_strided_slice %18 {offsets = [7, 0], sizes = [1, 512], strides = [1, 1]} : vector<8x512xf32> to vector<1x512xf32>
    %c14 = arith.constant 14 : index
    %c0_27 = arith.constant 0 : index
    %53 = vector.load %arg11[%c14, %c0_27] : memref<16x512xf32, #tpu.memory_space<vmem>>, vector<1x512xf32>
    tpu.vector_store %arg11[%c14, %c0_27], %52 {strides = array<i32>} : memref<16x512xf32, #tpu.memory_space<vmem>>, vector<1x512xf32>,
    %54 = vector.extract_strided_slice %23 {offsets = [7, 0], sizes = [1, 512], strides = [1, 1]} : vector<8x512xf32> to vector<1x512xf32>
    %c15 = arith.constant 15 : index
    %c0_28 = arith.constant 0 : index
    %55 = vector.load %arg11[%c15, %c0_28] : memref<16x512xf32, #tpu.memory_space<vmem>>, vector<1x512xf32>
    tpu.vector_store %arg11[%c15, %c0_28], %54 {strides = array<i32>} : memref<16x512xf32, #tpu.memory_space<vmem>>, vector<1x512xf32>,
    %c0_29 = arith.constant 0 : index
    %c0_30 = arith.constant 0 : index
    %56 = vector.load %arg11[%c0_29, %c0_30] : memref<16x512xf32, #tpu.memory_space<vmem>>, vector<16x512xf32>
    %c0_31 = arith.constant 0 : index
    %c0_32 = arith.constant 0 : index
    %57 = vector.load %arg5[%c0_31, %c0_32] : memref<1024x256xbf16, #tpu.memory_space<vmem>>, vector<1024x256xbf16>
    %c0_33 = arith.constant 0 : index
    %c0_34 = arith.constant 0 : index
    %58 = vector.load %arg6[%c0_33, %c0_34] : memref<1024x256xbf16, #tpu.memory_space<vmem>>, vector<1024x256xbf16>
    %c0_35 = arith.constant 0 : index
    %c0_36 = arith.constant 0 : index
    %59 = vector.load %arg7[%c0_35, %c0_36] : memref<1x256xf32, #tpu.memory_space<vmem>>, vector<1x256xf32>
    %cst_37 = arith.constant 0.000000e+00 : f32
    %60 = vector.broadcast %cst_37 : f32 to vector<1x512xf32>
    %61 = tpu.concatenate %60, %56, %60 in 0 : vector<1x512xf32>, vector<16x512xf32>, vector<1x512xf32> -> vector<18x512xf32>
    %62 = vector.extract_strided_slice %61 {offsets = [0, 0], sizes = [16, 512], strides = [1, 1]} : vector<18x512xf32> to vector<16x512xf32>
    %63 = vector.extract_strided_slice %61 {offsets = [1, 0], sizes = [16, 512], strides = [1, 1]} : vector<18x512xf32> to vector<16x512xf32>
    %64 = vector.extract_strided_slice %61 {offsets = [2, 0], sizes = [16, 512], strides = [1, 1]} : vector<18x512xf32> to vector<16x512xf32>
    %65 = tpu.concatenate %63, %62 in 1 : vector<16x512xf32>, vector<16x512xf32> -> vector<16x1024xf32>
    %66 = tpu.concatenate %64, %63 in 1 : vector<16x512xf32>, vector<16x512xf32> -> vector<16x1024xf32>
    %67 = arith.truncf %65 : vector<16x1024xf32> to vector<16x1024xbf16>
    %68 = arith.truncf %66 : vector<16x1024xf32> to vector<16x1024xbf16>
    %cst_38 = arith.constant dense<0.000000e+00> : vector<16x256xf32>
    %69 = tpu.matmul %67, %57, %cst_38 {dimension_numbers = #tpu.dot_dimension_numbers<[1], [0], [0], [1], [0, 0, 1, 1], [], []>} : vector<16x1024xbf16>, vector<1024x256xbf16>, vector<16x256xf32> -> vector<16x256xf32>
    %70 = vector.broadcast %59 : vector<1x256xf32> to vector<16x256xf32>
    %71 = arith.addf %69, %70 : vector<16x256xf32>
    %cst_39 = arith.constant 0.000000e+00 : f32
    %72 = vector.broadcast %cst_39 : f32 to vector<16x256xf32>
    %73 = arith.maximumf %71, %72 : vector<16x256xf32>
    %cst_40 = arith.constant dense<0.000000e+00> : vector<16x256xf32>
    %74 = tpu.matmul %68, %58, %cst_40 {dimension_numbers = #tpu.dot_dimension_numbers<[1], [0], [0], [1], [0, 0, 1, 1], [], []>} : vector<16x1024xbf16>, vector<1024x256xbf16>, vector<16x256xf32> -> vector<16x256xf32>
    %75 = vector.broadcast %59 : vector<1x256xf32> to vector<16x256xf32>
    %76 = arith.addf %74, %75 : vector<16x256xf32>
    %cst_41 = arith.constant 0.000000e+00 : f32
    %77 = vector.broadcast %cst_41 : f32 to vector<16x256xf32>
    %78 = arith.maximumf %76, %77 : vector<16x256xf32>
    %79 = vector.extract_strided_slice %73 {offsets = [0, 0], sizes = [1, 256], strides = [1, 1]} : vector<16x256xf32> to vector<1x256xf32>
    %c0_42 = arith.constant 0 : index
    %c0_43 = arith.constant 0 : index
    %80 = vector.load %arg12[%c0_42, %c0_43] : memref<32x256xf32, #tpu.memory_space<vmem>>, vector<1x256xf32>
    tpu.vector_store %arg12[%c0_42, %c0_43], %79 {strides = array<i32>} : memref<32x256xf32, #tpu.memory_space<vmem>>, vector<1x256xf32>,
    %81 = vector.extract_strided_slice %78 {offsets = [0, 0], sizes = [1, 256], strides = [1, 1]} : vector<16x256xf32> to vector<1x256xf32>
    %c1_44 = arith.constant 1 : index
    %c0_45 = arith.constant 0 : index
    %82 = vector.load %arg12[%c1_44, %c0_45] : memref<32x256xf32, #tpu.memory_space<vmem>>, vector<1x256xf32>
    tpu.vector_store %arg12[%c1_44, %c0_45], %81 {strides = array<i32>} : memref<32x256xf32, #tpu.memory_space<vmem>>, vector<1x256xf32>,
    %83 = vector.extract_strided_slice %73 {offsets = [1, 0], sizes = [1, 256], strides = [1, 1]} : vector<16x256xf32> to vector<1x256xf32>
    %c2_46 = arith.constant 2 : index
    %c0_47 = arith.constant 0 : index
    %84 = vector.load %arg12[%c2_46, %c0_47] : memref<32x256xf32, #tpu.memory_space<vmem>>, vector<1x256xf32>
    tpu.vector_store %arg12[%c2_46, %c0_47], %83 {strides = array<i32>} : memref<32x256xf32, #tpu.memory_space<vmem>>, vector<1x256xf32>,
    %85 = vector.extract_strided_slice %78 {offsets = [1, 0], sizes = [1, 256], strides = [1, 1]} : vector<16x256xf32> to vector<1x256xf32>
    %c3_48 = arith.constant 3 : index
    %c0_49 = arith.constant 0 : index
    %86 = vector.load %arg12[%c3_48, %c0_49] : memref<32x256xf32, #tpu.memory_space<vmem>>, vector<1x256xf32>
    tpu.vector_store %arg12[%c3_48, %c0_49], %85 {strides = array<i32>} : memref<32x256xf32, #tpu.memory_space<vmem>>, vector<1x256xf32>,
    %87 = vector.extract_strided_slice %73 {offsets = [2, 0], sizes = [1, 256], strides = [1, 1]} : vector<16x256xf32> to vector<1x256xf32>
    %c4_50 = arith.constant 4 : index
    %c0_51 = arith.constant 0 : index
    %88 = vector.load %arg12[%c4_50, %c0_51] : memref<32x256xf32, #tpu.memory_space<vmem>>, vector<1x256xf32>
    tpu.vector_store %arg12[%c4_50, %c0_51], %87 {strides = array<i32>} : memref<32x256xf32, #tpu.memory_space<vmem>>, vector<1x256xf32>,
    %89 = vector.extract_strided_slice %78 {offsets = [2, 0], sizes = [1, 256], strides = [1, 1]} : vector<16x256xf32> to vector<1x256xf32>
    %c5_52 = arith.constant 5 : index
    %c0_53 = arith.constant 0 : index
    %90 = vector.load %arg12[%c5_52, %c0_53] : memref<32x256xf32, #tpu.memory_space<vmem>>, vector<1x256xf32>
    tpu.vector_store %arg12[%c5_52, %c0_53], %89 {strides = array<i32>} : memref<32x256xf32, #tpu.memory_space<vmem>>, vector<1x256xf32>,
    %91 = vector.extract_strided_slice %73 {offsets = [3, 0], sizes = [1, 256], strides = [1, 1]} : vector<16x256xf32> to vector<1x256xf32>
    %c6_54 = arith.constant 6 : index
    %c0_55 = arith.constant 0 : index
    %92 = vector.load %arg12[%c6_54, %c0_55] : memref<32x256xf32, #tpu.memory_space<vmem>>, vector<1x256xf32>
    tpu.vector_store %arg12[%c6_54, %c0_55], %91 {strides = array<i32>} : memref<32x256xf32, #tpu.memory_space<vmem>>, vector<1x256xf32>,
    %93 = vector.extract_strided_slice %78 {offsets = [3, 0], sizes = [1, 256], strides = [1, 1]} : vector<16x256xf32> to vector<1x256xf32>
    %c7_56 = arith.constant 7 : index
    %c0_57 = arith.constant 0 : index
    %94 = vector.load %arg12[%c7_56, %c0_57] : memref<32x256xf32, #tpu.memory_space<vmem>>, vector<1x256xf32>
    tpu.vector_store %arg12[%c7_56, %c0_57], %93 {strides = array<i32>} : memref<32x256xf32, #tpu.memory_space<vmem>>, vector<1x256xf32>,
    %95 = vector.extract_strided_slice %73 {offsets = [4, 0], sizes = [1, 256], strides = [1, 1]} : vector<16x256xf32> to vector<1x256xf32>
    %c8_58 = arith.constant 8 : index
    %c0_59 = arith.constant 0 : index
    %96 = vector.load %arg12[%c8_58, %c0_59] : memref<32x256xf32, #tpu.memory_space<vmem>>, vector<1x256xf32>
    tpu.vector_store %arg12[%c8_58, %c0_59], %95 {strides = array<i32>} : memref<32x256xf32, #tpu.memory_space<vmem>>, vector<1x256xf32>,
    %97 = vector.extract_strided_slice %78 {offsets = [4, 0], sizes = [1, 256], strides = [1, 1]} : vector<16x256xf32> to vector<1x256xf32>
    %c9_60 = arith.constant 9 : index
    %c0_61 = arith.constant 0 : index
    %98 = vector.load %arg12[%c9_60, %c0_61] : memref<32x256xf32, #tpu.memory_space<vmem>>, vector<1x256xf32>
    tpu.vector_store %arg12[%c9_60, %c0_61], %97 {strides = array<i32>} : memref<32x256xf32, #tpu.memory_space<vmem>>, vector<1x256xf32>,
    %99 = vector.extract_strided_slice %73 {offsets = [5, 0], sizes = [1, 256], strides = [1, 1]} : vector<16x256xf32> to vector<1x256xf32>
    %c10_62 = arith.constant 10 : index
    %c0_63 = arith.constant 0 : index
    %100 = vector.load %arg12[%c10_62, %c0_63] : memref<32x256xf32, #tpu.memory_space<vmem>>, vector<1x256xf32>
    tpu.vector_store %arg12[%c10_62, %c0_63], %99 {strides = array<i32>} : memref<32x256xf32, #tpu.memory_space<vmem>>, vector<1x256xf32>,
    %101 = vector.extract_strided_slice %78 {offsets = [5, 0], sizes = [1, 256], strides = [1, 1]} : vector<16x256xf32> to vector<1x256xf32>
    %c11_64 = arith.constant 11 : index
    %c0_65 = arith.constant 0 : index
    %102 = vector.load %arg12[%c11_64, %c0_65] : memref<32x256xf32, #tpu.memory_space<vmem>>, vector<1x256xf32>
    tpu.vector_store %arg12[%c11_64, %c0_65], %101 {strides = array<i32>} : memref<32x256xf32, #tpu.memory_space<vmem>>, vector<1x256xf32>,
    %103 = vector.extract_strided_slice %73 {offsets = [6, 0], sizes = [1, 256], strides = [1, 1]} : vector<16x256xf32> to vector<1x256xf32>
    %c12_66 = arith.constant 12 : index
    %c0_67 = arith.constant 0 : index
    %104 = vector.load %arg12[%c12_66, %c0_67] : memref<32x256xf32, #tpu.memory_space<vmem>>, vector<1x256xf32>
    tpu.vector_store %arg12[%c12_66, %c0_67], %103 {strides = array<i32>} : memref<32x256xf32, #tpu.memory_space<vmem>>, vector<1x256xf32>,
    %105 = vector.extract_strided_slice %78 {offsets = [6, 0], sizes = [1, 256], strides = [1, 1]} : vector<16x256xf32> to vector<1x256xf32>
    %c13_68 = arith.constant 13 : index
    %c0_69 = arith.constant 0 : index
    %106 = vector.load %arg12[%c13_68, %c0_69] : memref<32x256xf32, #tpu.memory_space<vmem>>, vector<1x256xf32>
    tpu.vector_store %arg12[%c13_68, %c0_69], %105 {strides = array<i32>} : memref<32x256xf32, #tpu.memory_space<vmem>>, vector<1x256xf32>,
    %107 = vector.extract_strided_slice %73 {offsets = [7, 0], sizes = [1, 256], strides = [1, 1]} : vector<16x256xf32> to vector<1x256xf32>
    %c14_70 = arith.constant 14 : index
    %c0_71 = arith.constant 0 : index
    %108 = vector.load %arg12[%c14_70, %c0_71] : memref<32x256xf32, #tpu.memory_space<vmem>>, vector<1x256xf32>
    tpu.vector_store %arg12[%c14_70, %c0_71], %107 {strides = array<i32>} : memref<32x256xf32, #tpu.memory_space<vmem>>, vector<1x256xf32>,
    %109 = vector.extract_strided_slice %78 {offsets = [7, 0], sizes = [1, 256], strides = [1, 1]} : vector<16x256xf32> to vector<1x256xf32>
    %c15_72 = arith.constant 15 : index
    %c0_73 = arith.constant 0 : index
    %110 = vector.load %arg12[%c15_72, %c0_73] : memref<32x256xf32, #tpu.memory_space<vmem>>, vector<1x256xf32>
    tpu.vector_store %arg12[%c15_72, %c0_73], %109 {strides = array<i32>} : memref<32x256xf32, #tpu.memory_space<vmem>>, vector<1x256xf32>,
    %111 = vector.extract_strided_slice %73 {offsets = [8, 0], sizes = [1, 256], strides = [1, 1]} : vector<16x256xf32> to vector<1x256xf32>
    %c16 = arith.constant 16 : index
    %c0_74 = arith.constant 0 : index
    %112 = vector.load %arg12[%c16, %c0_74] : memref<32x256xf32, #tpu.memory_space<vmem>>, vector<1x256xf32>
    tpu.vector_store %arg12[%c16, %c0_74], %111 {strides = array<i32>} : memref<32x256xf32, #tpu.memory_space<vmem>>, vector<1x256xf32>,
    %113 = vector.extract_strided_slice %78 {offsets = [8, 0], sizes = [1, 256], strides = [1, 1]} : vector<16x256xf32> to vector<1x256xf32>
    %c17 = arith.constant 17 : index
    %c0_75 = arith.constant 0 : index
    %114 = vector.load %arg12[%c17, %c0_75] : memref<32x256xf32, #tpu.memory_space<vmem>>, vector<1x256xf32>
    tpu.vector_store %arg12[%c17, %c0_75], %113 {strides = array<i32>} : memref<32x256xf32, #tpu.memory_space<vmem>>, vector<1x256xf32>,
    %115 = vector.extract_strided_slice %73 {offsets = [9, 0], sizes = [1, 256], strides = [1, 1]} : vector<16x256xf32> to vector<1x256xf32>
    %c18 = arith.constant 18 : index
    %c0_76 = arith.constant 0 : index
    %116 = vector.load %arg12[%c18, %c0_76] : memref<32x256xf32, #tpu.memory_space<vmem>>, vector<1x256xf32>
    tpu.vector_store %arg12[%c18, %c0_76], %115 {strides = array<i32>} : memref<32x256xf32, #tpu.memory_space<vmem>>, vector<1x256xf32>,
    %117 = vector.extract_strided_slice %78 {offsets = [9, 0], sizes = [1, 256], strides = [1, 1]} : vector<16x256xf32> to vector<1x256xf32>
    %c19 = arith.constant 19 : index
    %c0_77 = arith.constant 0 : index
    %118 = vector.load %arg12[%c19, %c0_77] : memref<32x256xf32, #tpu.memory_space<vmem>>, vector<1x256xf32>
    tpu.vector_store %arg12[%c19, %c0_77], %117 {strides = array<i32>} : memref<32x256xf32, #tpu.memory_space<vmem>>, vector<1x256xf32>,
    %119 = vector.extract_strided_slice %73 {offsets = [10, 0], sizes = [1, 256], strides = [1, 1]} : vector<16x256xf32> to vector<1x256xf32>
    %c20 = arith.constant 20 : index
    %c0_78 = arith.constant 0 : index
    %120 = vector.load %arg12[%c20, %c0_78] : memref<32x256xf32, #tpu.memory_space<vmem>>, vector<1x256xf32>
    tpu.vector_store %arg12[%c20, %c0_78], %119 {strides = array<i32>} : memref<32x256xf32, #tpu.memory_space<vmem>>, vector<1x256xf32>,
    %121 = vector.extract_strided_slice %78 {offsets = [10, 0], sizes = [1, 256], strides = [1, 1]} : vector<16x256xf32> to vector<1x256xf32>
    %c21 = arith.constant 21 : index
    %c0_79 = arith.constant 0 : index
    %122 = vector.load %arg12[%c21, %c0_79] : memref<32x256xf32, #tpu.memory_space<vmem>>, vector<1x256xf32>
    tpu.vector_store %arg12[%c21, %c0_79], %121 {strides = array<i32>} : memref<32x256xf32, #tpu.memory_space<vmem>>, vector<1x256xf32>,
    %123 = vector.extract_strided_slice %73 {offsets = [11, 0], sizes = [1, 256], strides = [1, 1]} : vector<16x256xf32> to vector<1x256xf32>
    %c22 = arith.constant 22 : index
    %c0_80 = arith.constant 0 : index
    %124 = vector.load %arg12[%c22, %c0_80] : memref<32x256xf32, #tpu.memory_space<vmem>>, vector<1x256xf32>
    tpu.vector_store %arg12[%c22, %c0_80], %123 {strides = array<i32>} : memref<32x256xf32, #tpu.memory_space<vmem>>, vector<1x256xf32>,
    %125 = vector.extract_strided_slice %78 {offsets = [11, 0], sizes = [1, 256], strides = [1, 1]} : vector<16x256xf32> to vector<1x256xf32>
    %c23 = arith.constant 23 : index
    %c0_81 = arith.constant 0 : index
    %126 = vector.load %arg12[%c23, %c0_81] : memref<32x256xf32, #tpu.memory_space<vmem>>, vector<1x256xf32>
    tpu.vector_store %arg12[%c23, %c0_81], %125 {strides = array<i32>} : memref<32x256xf32, #tpu.memory_space<vmem>>, vector<1x256xf32>,
    %127 = vector.extract_strided_slice %73 {offsets = [12, 0], sizes = [1, 256], strides = [1, 1]} : vector<16x256xf32> to vector<1x256xf32>
    %c24 = arith.constant 24 : index
    %c0_82 = arith.constant 0 : index
    %128 = vector.load %arg12[%c24, %c0_82] : memref<32x256xf32, #tpu.memory_space<vmem>>, vector<1x256xf32>
    tpu.vector_store %arg12[%c24, %c0_82], %127 {strides = array<i32>} : memref<32x256xf32, #tpu.memory_space<vmem>>, vector<1x256xf32>,
    %129 = vector.extract_strided_slice %78 {offsets = [12, 0], sizes = [1, 256], strides = [1, 1]} : vector<16x256xf32> to vector<1x256xf32>
    %c25 = arith.constant 25 : index
    %c0_83 = arith.constant 0 : index
    %130 = vector.load %arg12[%c25, %c0_83] : memref<32x256xf32, #tpu.memory_space<vmem>>, vector<1x256xf32>
    tpu.vector_store %arg12[%c25, %c0_83], %129 {strides = array<i32>} : memref<32x256xf32, #tpu.memory_space<vmem>>, vector<1x256xf32>,
    %131 = vector.extract_strided_slice %73 {offsets = [13, 0], sizes = [1, 256], strides = [1, 1]} : vector<16x256xf32> to vector<1x256xf32>
    %c26 = arith.constant 26 : index
    %c0_84 = arith.constant 0 : index
    %132 = vector.load %arg12[%c26, %c0_84] : memref<32x256xf32, #tpu.memory_space<vmem>>, vector<1x256xf32>
    tpu.vector_store %arg12[%c26, %c0_84], %131 {strides = array<i32>} : memref<32x256xf32, #tpu.memory_space<vmem>>, vector<1x256xf32>,
    %133 = vector.extract_strided_slice %78 {offsets = [13, 0], sizes = [1, 256], strides = [1, 1]} : vector<16x256xf32> to vector<1x256xf32>
    %c27 = arith.constant 27 : index
    %c0_85 = arith.constant 0 : index
    %134 = vector.load %arg12[%c27, %c0_85] : memref<32x256xf32, #tpu.memory_space<vmem>>, vector<1x256xf32>
    tpu.vector_store %arg12[%c27, %c0_85], %133 {strides = array<i32>} : memref<32x256xf32, #tpu.memory_space<vmem>>, vector<1x256xf32>,
    %135 = vector.extract_strided_slice %73 {offsets = [14, 0], sizes = [1, 256], strides = [1, 1]} : vector<16x256xf32> to vector<1x256xf32>
    %c28 = arith.constant 28 : index
    %c0_86 = arith.constant 0 : index
    %136 = vector.load %arg12[%c28, %c0_86] : memref<32x256xf32, #tpu.memory_space<vmem>>, vector<1x256xf32>
    tpu.vector_store %arg12[%c28, %c0_86], %135 {strides = array<i32>} : memref<32x256xf32, #tpu.memory_space<vmem>>, vector<1x256xf32>,
    %137 = vector.extract_strided_slice %78 {offsets = [14, 0], sizes = [1, 256], strides = [1, 1]} : vector<16x256xf32> to vector<1x256xf32>
    %c29 = arith.constant 29 : index
    %c0_87 = arith.constant 0 : index
    %138 = vector.load %arg12[%c29, %c0_87] : memref<32x256xf32, #tpu.memory_space<vmem>>, vector<1x256xf32>
    tpu.vector_store %arg12[%c29, %c0_87], %137 {strides = array<i32>} : memref<32x256xf32, #tpu.memory_space<vmem>>, vector<1x256xf32>,
    %139 = vector.extract_strided_slice %73 {offsets = [15, 0], sizes = [1, 256], strides = [1, 1]} : vector<16x256xf32> to vector<1x256xf32>
    %c30 = arith.constant 30 : index
    %c0_88 = arith.constant 0 : index
    %140 = vector.load %arg12[%c30, %c0_88] : memref<32x256xf32, #tpu.memory_space<vmem>>, vector<1x256xf32>
    tpu.vector_store %arg12[%c30, %c0_88], %139 {strides = array<i32>} : memref<32x256xf32, #tpu.memory_space<vmem>>, vector<1x256xf32>,
    %141 = vector.extract_strided_slice %78 {offsets = [15, 0], sizes = [1, 256], strides = [1, 1]} : vector<16x256xf32> to vector<1x256xf32>
    %c31 = arith.constant 31 : index
    %c0_89 = arith.constant 0 : index
    %142 = vector.load %arg12[%c31, %c0_89] : memref<32x256xf32, #tpu.memory_space<vmem>>, vector<1x256xf32>
    tpu.vector_store %arg12[%c31, %c0_89], %141 {strides = array<i32>} : memref<32x256xf32, #tpu.memory_space<vmem>>, vector<1x256xf32>,
    %c0_90 = arith.constant 0 : index
    %c0_91 = arith.constant 0 : index
    %143 = vector.load %arg12[%c0_90, %c0_91] : memref<32x256xf32, #tpu.memory_space<vmem>>, vector<32x256xf32>
    %144 = vector.extract_strided_slice %143 {offsets = [0, 0], sizes = [31, 256], strides = [1, 1]} : vector<32x256xf32> to vector<31x256xf32>
    %145 = vector.extract_strided_slice %143 {offsets = [1, 0], sizes = [31, 256], strides = [1, 1]} : vector<32x256xf32> to vector<31x256xf32>
    %146 = tpu.concatenate %144, %145 in 1 : vector<31x256xf32>, vector<31x256xf32> -> vector<31x512xf32>
    %147 = arith.truncf %146 : vector<31x512xf32> to vector<31x512xbf16>
    %c0_92 = arith.constant 0 : index
    %c0_93 = arith.constant 0 : index
    %148 = vector.load %arg8[%c0_92, %c0_93] : memref<512x12xbf16, #tpu.memory_space<vmem>>, vector<512x12xbf16>
    %cst_94 = arith.constant dense<0.000000e+00> : vector<31x12xf32>
    %149 = tpu.matmul %147, %148, %cst_94 {dimension_numbers = #tpu.dot_dimension_numbers<[1], [0], [0], [1], [0, 0, 1, 1], [], []>} : vector<31x512xbf16>, vector<512x12xbf16>, vector<31x12xf32> -> vector<31x12xf32>
    %c0_95 = arith.constant 0 : index
    %c0_96 = arith.constant 0 : index
    %150 = vector.load %arg9[%c0_95, %c0_96] : memref<1x12xf32, #tpu.memory_space<vmem>>, vector<1x12xf32>
    %151 = vector.broadcast %150 : vector<1x12xf32> to vector<31x12xf32>
    %152 = arith.addf %149, %151 : vector<31x12xf32>
    %cst_97 = arith.constant 0.000000e+00 : f32
    %153 = vector.broadcast %cst_97 : f32 to vector<3x4xf32>
    %c93 = arith.constant 93 : index
    %c0_98 = arith.constant 0 : index
    %154 = vector.load %arg13[%c93, %c0_98] : memref<96x4xf32, #tpu.memory_space<vmem>>, vector<3x4xf32>
    tpu.vector_store %arg13[%c93, %c0_98], %153 {strides = array<i32>} : memref<96x4xf32, #tpu.memory_space<vmem>>, vector<3x4xf32>,
    %155 = vector.extract_strided_slice %152 {offsets = [0, 0], sizes = [31, 4], strides = [1, 1]} : vector<31x12xf32> to vector<31x4xf32>
    %156 = vector.extract_strided_slice %155 {offsets = [0, 0], sizes = [1, 4], strides = [1, 1]} : vector<31x4xf32> to vector<1x4xf32>
    %c0_99 = arith.constant 0 : index
    %c0_100 = arith.constant 0 : index
    %157 = vector.load %arg13[%c0_99, %c0_100] : memref<96x4xf32, #tpu.memory_space<vmem>>, vector<1x4xf32>
    tpu.vector_store %arg13[%c0_99, %c0_100], %156 {strides = array<i32>} : memref<96x4xf32, #tpu.memory_space<vmem>>, vector<1x4xf32>,
    %158 = vector.extract_strided_slice %155 {offsets = [1, 0], sizes = [1, 4], strides = [1, 1]} : vector<31x4xf32> to vector<1x4xf32>
    %c3_101 = arith.constant 3 : index
    %c0_102 = arith.constant 0 : index
    %159 = vector.load %arg13[%c3_101, %c0_102] : memref<96x4xf32, #tpu.memory_space<vmem>>, vector<1x4xf32>
    tpu.vector_store %arg13[%c3_101, %c0_102], %158 {strides = array<i32>} : memref<96x4xf32, #tpu.memory_space<vmem>>, vector<1x4xf32>,
    %160 = vector.extract_strided_slice %155 {offsets = [2, 0], sizes = [1, 4], strides = [1, 1]} : vector<31x4xf32> to vector<1x4xf32>
    %c6_103 = arith.constant 6 : index
    %c0_104 = arith.constant 0 : index
    %161 = vector.load %arg13[%c6_103, %c0_104] : memref<96x4xf32, #tpu.memory_space<vmem>>, vector<1x4xf32>
    tpu.vector_store %arg13[%c6_103, %c0_104], %160 {strides = array<i32>} : memref<96x4xf32, #tpu.memory_space<vmem>>, vector<1x4xf32>,
    %162 = vector.extract_strided_slice %155 {offsets = [3, 0], sizes = [1, 4], strides = [1, 1]} : vector<31x4xf32> to vector<1x4xf32>
    %c9_105 = arith.constant 9 : index
    %c0_106 = arith.constant 0 : index
    %163 = vector.load %arg13[%c9_105, %c0_106] : memref<96x4xf32, #tpu.memory_space<vmem>>, vector<1x4xf32>
    tpu.vector_store %arg13[%c9_105, %c0_106], %162 {strides = array<i32>} : memref<96x4xf32, #tpu.memory_space<vmem>>, vector<1x4xf32>,
    %164 = vector.extract_strided_slice %155 {offsets = [4, 0], sizes = [1, 4], strides = [1, 1]} : vector<31x4xf32> to vector<1x4xf32>
    %c12_107 = arith.constant 12 : index
    %c0_108 = arith.constant 0 : index
    %165 = vector.load %arg13[%c12_107, %c0_108] : memref<96x4xf32, #tpu.memory_space<vmem>>, vector<1x4xf32>
    tpu.vector_store %arg13[%c12_107, %c0_108], %164 {strides = array<i32>} : memref<96x4xf32, #tpu.memory_space<vmem>>, vector<1x4xf32>,
    %166 = vector.extract_strided_slice %155 {offsets = [5, 0], sizes = [1, 4], strides = [1, 1]} : vector<31x4xf32> to vector<1x4xf32>
    %c15_109 = arith.constant 15 : index
    %c0_110 = arith.constant 0 : index
    %167 = vector.load %arg13[%c15_109, %c0_110] : memref<96x4xf32, #tpu.memory_space<vmem>>, vector<1x4xf32>
    tpu.vector_store %arg13[%c15_109, %c0_110], %166 {strides = array<i32>} : memref<96x4xf32, #tpu.memory_space<vmem>>, vector<1x4xf32>,
    %168 = vector.extract_strided_slice %155 {offsets = [6, 0], sizes = [1, 4], strides = [1, 1]} : vector<31x4xf32> to vector<1x4xf32>
    %c18_111 = arith.constant 18 : index
    %c0_112 = arith.constant 0 : index
    %169 = vector.load %arg13[%c18_111, %c0_112] : memref<96x4xf32, #tpu.memory_space<vmem>>, vector<1x4xf32>
    tpu.vector_store %arg13[%c18_111, %c0_112], %168 {strides = array<i32>} : memref<96x4xf32, #tpu.memory_space<vmem>>, vector<1x4xf32>,
    %170 = vector.extract_strided_slice %155 {offsets = [7, 0], sizes = [1, 4], strides = [1, 1]} : vector<31x4xf32> to vector<1x4xf32>
    %c21_113 = arith.constant 21 : index
    %c0_114 = arith.constant 0 : index
    %171 = vector.load %arg13[%c21_113, %c0_114] : memref<96x4xf32, #tpu.memory_space<vmem>>, vector<1x4xf32>
    tpu.vector_store %arg13[%c21_113, %c0_114], %170 {strides = array<i32>} : memref<96x4xf32, #tpu.memory_space<vmem>>, vector<1x4xf32>,
    %172 = vector.extract_strided_slice %155 {offsets = [8, 0], sizes = [1, 4], strides = [1, 1]} : vector<31x4xf32> to vector<1x4xf32>
    %c24_115 = arith.constant 24 : index
    %c0_116 = arith.constant 0 : index
    %173 = vector.load %arg13[%c24_115, %c0_116] : memref<96x4xf32, #tpu.memory_space<vmem>>, vector<1x4xf32>
    tpu.vector_store %arg13[%c24_115, %c0_116], %172 {strides = array<i32>} : memref<96x4xf32, #tpu.memory_space<vmem>>, vector<1x4xf32>,
    %174 = vector.extract_strided_slice %155 {offsets = [9, 0], sizes = [1, 4], strides = [1, 1]} : vector<31x4xf32> to vector<1x4xf32>
    %c27_117 = arith.constant 27 : index
    %c0_118 = arith.constant 0 : index
    %175 = vector.load %arg13[%c27_117, %c0_118] : memref<96x4xf32, #tpu.memory_space<vmem>>, vector<1x4xf32>
    tpu.vector_store %arg13[%c27_117, %c0_118], %174 {strides = array<i32>} : memref<96x4xf32, #tpu.memory_space<vmem>>, vector<1x4xf32>,
    %176 = vector.extract_strided_slice %155 {offsets = [10, 0], sizes = [1, 4], strides = [1, 1]} : vector<31x4xf32> to vector<1x4xf32>
    %c30_119 = arith.constant 30 : index
    %c0_120 = arith.constant 0 : index
    %177 = vector.load %arg13[%c30_119, %c0_120] : memref<96x4xf32, #tpu.memory_space<vmem>>, vector<1x4xf32>
    tpu.vector_store %arg13[%c30_119, %c0_120], %176 {strides = array<i32>} : memref<96x4xf32, #tpu.memory_space<vmem>>, vector<1x4xf32>,
    %178 = vector.extract_strided_slice %155 {offsets = [11, 0], sizes = [1, 4], strides = [1, 1]} : vector<31x4xf32> to vector<1x4xf32>
    %c33 = arith.constant 33 : index
    %c0_121 = arith.constant 0 : index
    %179 = vector.load %arg13[%c33, %c0_121] : memref<96x4xf32, #tpu.memory_space<vmem>>, vector<1x4xf32>
    tpu.vector_store %arg13[%c33, %c0_121], %178 {strides = array<i32>} : memref<96x4xf32, #tpu.memory_space<vmem>>, vector<1x4xf32>,
    %180 = vector.extract_strided_slice %155 {offsets = [12, 0], sizes = [1, 4], strides = [1, 1]} : vector<31x4xf32> to vector<1x4xf32>
    %c36 = arith.constant 36 : index
    %c0_122 = arith.constant 0 : index
    %181 = vector.load %arg13[%c36, %c0_122] : memref<96x4xf32, #tpu.memory_space<vmem>>, vector<1x4xf32>
    tpu.vector_store %arg13[%c36, %c0_122], %180 {strides = array<i32>} : memref<96x4xf32, #tpu.memory_space<vmem>>, vector<1x4xf32>,
    %182 = vector.extract_strided_slice %155 {offsets = [13, 0], sizes = [1, 4], strides = [1, 1]} : vector<31x4xf32> to vector<1x4xf32>
    %c39 = arith.constant 39 : index
    %c0_123 = arith.constant 0 : index
    %183 = vector.load %arg13[%c39, %c0_123] : memref<96x4xf32, #tpu.memory_space<vmem>>, vector<1x4xf32>
    tpu.vector_store %arg13[%c39, %c0_123], %182 {strides = array<i32>} : memref<96x4xf32, #tpu.memory_space<vmem>>, vector<1x4xf32>,
    %184 = vector.extract_strided_slice %155 {offsets = [14, 0], sizes = [1, 4], strides = [1, 1]} : vector<31x4xf32> to vector<1x4xf32>
    %c42 = arith.constant 42 : index
    %c0_124 = arith.constant 0 : index
    %185 = vector.load %arg13[%c42, %c0_124] : memref<96x4xf32, #tpu.memory_space<vmem>>, vector<1x4xf32>
    tpu.vector_store %arg13[%c42, %c0_124], %184 {strides = array<i32>} : memref<96x4xf32, #tpu.memory_space<vmem>>, vector<1x4xf32>,
    %186 = vector.extract_strided_slice %155 {offsets = [15, 0], sizes = [1, 4], strides = [1, 1]} : vector<31x4xf32> to vector<1x4xf32>
    %c45 = arith.constant 45 : index
    %c0_125 = arith.constant 0 : index
    %187 = vector.load %arg13[%c45, %c0_125] : memref<96x4xf32, #tpu.memory_space<vmem>>, vector<1x4xf32>
    tpu.vector_store %arg13[%c45, %c0_125], %186 {strides = array<i32>} : memref<96x4xf32, #tpu.memory_space<vmem>>, vector<1x4xf32>,
    %188 = vector.extract_strided_slice %155 {offsets = [16, 0], sizes = [1, 4], strides = [1, 1]} : vector<31x4xf32> to vector<1x4xf32>
    %c48 = arith.constant 48 : index
    %c0_126 = arith.constant 0 : index
    %189 = vector.load %arg13[%c48, %c0_126] : memref<96x4xf32, #tpu.memory_space<vmem>>, vector<1x4xf32>
    tpu.vector_store %arg13[%c48, %c0_126], %188 {strides = array<i32>} : memref<96x4xf32, #tpu.memory_space<vmem>>, vector<1x4xf32>,
    %190 = vector.extract_strided_slice %155 {offsets = [17, 0], sizes = [1, 4], strides = [1, 1]} : vector<31x4xf32> to vector<1x4xf32>
    %c51 = arith.constant 51 : index
    %c0_127 = arith.constant 0 : index
    %191 = vector.load %arg13[%c51, %c0_127] : memref<96x4xf32, #tpu.memory_space<vmem>>, vector<1x4xf32>
    tpu.vector_store %arg13[%c51, %c0_127], %190 {strides = array<i32>} : memref<96x4xf32, #tpu.memory_space<vmem>>, vector<1x4xf32>,
    %192 = vector.extract_strided_slice %155 {offsets = [18, 0], sizes = [1, 4], strides = [1, 1]} : vector<31x4xf32> to vector<1x4xf32>
    %c54 = arith.constant 54 : index
    %c0_128 = arith.constant 0 : index
    %193 = vector.load %arg13[%c54, %c0_128] : memref<96x4xf32, #tpu.memory_space<vmem>>, vector<1x4xf32>
    tpu.vector_store %arg13[%c54, %c0_128], %192 {strides = array<i32>} : memref<96x4xf32, #tpu.memory_space<vmem>>, vector<1x4xf32>,
    %194 = vector.extract_strided_slice %155 {offsets = [19, 0], sizes = [1, 4], strides = [1, 1]} : vector<31x4xf32> to vector<1x4xf32>
    %c57 = arith.constant 57 : index
    %c0_129 = arith.constant 0 : index
    %195 = vector.load %arg13[%c57, %c0_129] : memref<96x4xf32, #tpu.memory_space<vmem>>, vector<1x4xf32>
    tpu.vector_store %arg13[%c57, %c0_129], %194 {strides = array<i32>} : memref<96x4xf32, #tpu.memory_space<vmem>>, vector<1x4xf32>,
    %196 = vector.extract_strided_slice %155 {offsets = [20, 0], sizes = [1, 4], strides = [1, 1]} : vector<31x4xf32> to vector<1x4xf32>
    %c60 = arith.constant 60 : index
    %c0_130 = arith.constant 0 : index
    %197 = vector.load %arg13[%c60, %c0_130] : memref<96x4xf32, #tpu.memory_space<vmem>>, vector<1x4xf32>
    tpu.vector_store %arg13[%c60, %c0_130], %196 {strides = array<i32>} : memref<96x4xf32, #tpu.memory_space<vmem>>, vector<1x4xf32>,
    %198 = vector.extract_strided_slice %155 {offsets = [21, 0], sizes = [1, 4], strides = [1, 1]} : vector<31x4xf32> to vector<1x4xf32>
    %c63 = arith.constant 63 : index
    %c0_131 = arith.constant 0 : index
    %199 = vector.load %arg13[%c63, %c0_131] : memref<96x4xf32, #tpu.memory_space<vmem>>, vector<1x4xf32>
    tpu.vector_store %arg13[%c63, %c0_131], %198 {strides = array<i32>} : memref<96x4xf32, #tpu.memory_space<vmem>>, vector<1x4xf32>,
    %200 = vector.extract_strided_slice %155 {offsets = [22, 0], sizes = [1, 4], strides = [1, 1]} : vector<31x4xf32> to vector<1x4xf32>
    %c66 = arith.constant 66 : index
    %c0_132 = arith.constant 0 : index
    %201 = vector.load %arg13[%c66, %c0_132] : memref<96x4xf32, #tpu.memory_space<vmem>>, vector<1x4xf32>
    tpu.vector_store %arg13[%c66, %c0_132], %200 {strides = array<i32>} : memref<96x4xf32, #tpu.memory_space<vmem>>, vector<1x4xf32>,
    %202 = vector.extract_strided_slice %155 {offsets = [23, 0], sizes = [1, 4], strides = [1, 1]} : vector<31x4xf32> to vector<1x4xf32>
    %c69 = arith.constant 69 : index
    %c0_133 = arith.constant 0 : index
    %203 = vector.load %arg13[%c69, %c0_133] : memref<96x4xf32, #tpu.memory_space<vmem>>, vector<1x4xf32>
    tpu.vector_store %arg13[%c69, %c0_133], %202 {strides = array<i32>} : memref<96x4xf32, #tpu.memory_space<vmem>>, vector<1x4xf32>,
    %204 = vector.extract_strided_slice %155 {offsets = [24, 0], sizes = [1, 4], strides = [1, 1]} : vector<31x4xf32> to vector<1x4xf32>
    %c72 = arith.constant 72 : index
    %c0_134 = arith.constant 0 : index
    %205 = vector.load %arg13[%c72, %c0_134] : memref<96x4xf32, #tpu.memory_space<vmem>>, vector<1x4xf32>
    tpu.vector_store %arg13[%c72, %c0_134], %204 {strides = array<i32>} : memref<96x4xf32, #tpu.memory_space<vmem>>, vector<1x4xf32>,
    %206 = vector.extract_strided_slice %155 {offsets = [25, 0], sizes = [1, 4], strides = [1, 1]} : vector<31x4xf32> to vector<1x4xf32>
    %c75 = arith.constant 75 : index
    %c0_135 = arith.constant 0 : index
    %207 = vector.load %arg13[%c75, %c0_135] : memref<96x4xf32, #tpu.memory_space<vmem>>, vector<1x4xf32>
    tpu.vector_store %arg13[%c75, %c0_135], %206 {strides = array<i32>} : memref<96x4xf32, #tpu.memory_space<vmem>>, vector<1x4xf32>,
    %208 = vector.extract_strided_slice %155 {offsets = [26, 0], sizes = [1, 4], strides = [1, 1]} : vector<31x4xf32> to vector<1x4xf32>
    %c78 = arith.constant 78 : index
    %c0_136 = arith.constant 0 : index
    %209 = vector.load %arg13[%c78, %c0_136] : memref<96x4xf32, #tpu.memory_space<vmem>>, vector<1x4xf32>
    tpu.vector_store %arg13[%c78, %c0_136], %208 {strides = array<i32>} : memref<96x4xf32, #tpu.memory_space<vmem>>, vector<1x4xf32>,
    %210 = vector.extract_strided_slice %155 {offsets = [27, 0], sizes = [1, 4], strides = [1, 1]} : vector<31x4xf32> to vector<1x4xf32>
    %c81 = arith.constant 81 : index
    %c0_137 = arith.constant 0 : index
    %211 = vector.load %arg13[%c81, %c0_137] : memref<96x4xf32, #tpu.memory_space<vmem>>, vector<1x4xf32>
    tpu.vector_store %arg13[%c81, %c0_137], %210 {strides = array<i32>} : memref<96x4xf32, #tpu.memory_space<vmem>>, vector<1x4xf32>,
    %212 = vector.extract_strided_slice %155 {offsets = [28, 0], sizes = [1, 4], strides = [1, 1]} : vector<31x4xf32> to vector<1x4xf32>
    %c84 = arith.constant 84 : index
    %c0_138 = arith.constant 0 : index
    %213 = vector.load %arg13[%c84, %c0_138] : memref<96x4xf32, #tpu.memory_space<vmem>>, vector<1x4xf32>
    tpu.vector_store %arg13[%c84, %c0_138], %212 {strides = array<i32>} : memref<96x4xf32, #tpu.memory_space<vmem>>, vector<1x4xf32>,
    %214 = vector.extract_strided_slice %155 {offsets = [29, 0], sizes = [1, 4], strides = [1, 1]} : vector<31x4xf32> to vector<1x4xf32>
    %c87 = arith.constant 87 : index
    %c0_139 = arith.constant 0 : index
    %215 = vector.load %arg13[%c87, %c0_139] : memref<96x4xf32, #tpu.memory_space<vmem>>, vector<1x4xf32>
    tpu.vector_store %arg13[%c87, %c0_139], %214 {strides = array<i32>} : memref<96x4xf32, #tpu.memory_space<vmem>>, vector<1x4xf32>,
    %216 = vector.extract_strided_slice %155 {offsets = [30, 0], sizes = [1, 4], strides = [1, 1]} : vector<31x4xf32> to vector<1x4xf32>
    %c90 = arith.constant 90 : index
    %c0_140 = arith.constant 0 : index
    %217 = vector.load %arg13[%c90, %c0_140] : memref<96x4xf32, #tpu.memory_space<vmem>>, vector<1x4xf32>
    tpu.vector_store %arg13[%c90, %c0_140], %216 {strides = array<i32>} : memref<96x4xf32, #tpu.memory_space<vmem>>, vector<1x4xf32>,
    %218 = vector.extract_strided_slice %152 {offsets = [0, 4], sizes = [31, 4], strides = [1, 1]} : vector<31x12xf32> to vector<31x4xf32>
    %219 = vector.extract_strided_slice %218 {offsets = [0, 0], sizes = [1, 4], strides = [1, 1]} : vector<31x4xf32> to vector<1x4xf32>
    %c1_141 = arith.constant 1 : index
    %c0_142 = arith.constant 0 : index
    %220 = vector.load %arg13[%c1_141, %c0_142] : memref<96x4xf32, #tpu.memory_space<vmem>>, vector<1x4xf32>
    tpu.vector_store %arg13[%c1_141, %c0_142], %219 {strides = array<i32>} : memref<96x4xf32, #tpu.memory_space<vmem>>, vector<1x4xf32>,
    %221 = vector.extract_strided_slice %218 {offsets = [1, 0], sizes = [1, 4], strides = [1, 1]} : vector<31x4xf32> to vector<1x4xf32>
    %c4_143 = arith.constant 4 : index
    %c0_144 = arith.constant 0 : index
    %222 = vector.load %arg13[%c4_143, %c0_144] : memref<96x4xf32, #tpu.memory_space<vmem>>, vector<1x4xf32>
    tpu.vector_store %arg13[%c4_143, %c0_144], %221 {strides = array<i32>} : memref<96x4xf32, #tpu.memory_space<vmem>>, vector<1x4xf32>,
    %223 = vector.extract_strided_slice %218 {offsets = [2, 0], sizes = [1, 4], strides = [1, 1]} : vector<31x4xf32> to vector<1x4xf32>
    %c7_145 = arith.constant 7 : index
    %c0_146 = arith.constant 0 : index
    %224 = vector.load %arg13[%c7_145, %c0_146] : memref<96x4xf32, #tpu.memory_space<vmem>>, vector<1x4xf32>
    tpu.vector_store %arg13[%c7_145, %c0_146], %223 {strides = array<i32>} : memref<96x4xf32, #tpu.memory_space<vmem>>, vector<1x4xf32>,
    %225 = vector.extract_strided_slice %218 {offsets = [3, 0], sizes = [1, 4], strides = [1, 1]} : vector<31x4xf32> to vector<1x4xf32>
    %c10_147 = arith.constant 10 : index
    %c0_148 = arith.constant 0 : index
    %226 = vector.load %arg13[%c10_147, %c0_148] : memref<96x4xf32, #tpu.memory_space<vmem>>, vector<1x4xf32>
    tpu.vector_store %arg13[%c10_147, %c0_148], %225 {strides = array<i32>} : memref<96x4xf32, #tpu.memory_space<vmem>>, vector<1x4xf32>,
    %227 = vector.extract_strided_slice %218 {offsets = [4, 0], sizes = [1, 4], strides = [1, 1]} : vector<31x4xf32> to vector<1x4xf32>
    %c13_149 = arith.constant 13 : index
    %c0_150 = arith.constant 0 : index
    %228 = vector.load %arg13[%c13_149, %c0_150] : memref<96x4xf32, #tpu.memory_space<vmem>>, vector<1x4xf32>
    tpu.vector_store %arg13[%c13_149, %c0_150], %227 {strides = array<i32>} : memref<96x4xf32, #tpu.memory_space<vmem>>, vector<1x4xf32>,
    %229 = vector.extract_strided_slice %218 {offsets = [5, 0], sizes = [1, 4], strides = [1, 1]} : vector<31x4xf32> to vector<1x4xf32>
    %c16_151 = arith.constant 16 : index
    %c0_152 = arith.constant 0 : index
    %230 = vector.load %arg13[%c16_151, %c0_152] : memref<96x4xf32, #tpu.memory_space<vmem>>, vector<1x4xf32>
    tpu.vector_store %arg13[%c16_151, %c0_152], %229 {strides = array<i32>} : memref<96x4xf32, #tpu.memory_space<vmem>>, vector<1x4xf32>,
    %231 = vector.extract_strided_slice %218 {offsets = [6, 0], sizes = [1, 4], strides = [1, 1]} : vector<31x4xf32> to vector<1x4xf32>
    %c19_153 = arith.constant 19 : index
    %c0_154 = arith.constant 0 : index
    %232 = vector.load %arg13[%c19_153, %c0_154] : memref<96x4xf32, #tpu.memory_space<vmem>>, vector<1x4xf32>
    tpu.vector_store %arg13[%c19_153, %c0_154], %231 {strides = array<i32>} : memref<96x4xf32, #tpu.memory_space<vmem>>, vector<1x4xf32>,
    %233 = vector.extract_strided_slice %218 {offsets = [7, 0], sizes = [1, 4], strides = [1, 1]} : vector<31x4xf32> to vector<1x4xf32>
    %c22_155 = arith.constant 22 : index
    %c0_156 = arith.constant 0 : index
    %234 = vector.load %arg13[%c22_155, %c0_156] : memref<96x4xf32, #tpu.memory_space<vmem>>, vector<1x4xf32>
    tpu.vector_store %arg13[%c22_155, %c0_156], %233 {strides = array<i32>} : memref<96x4xf32, #tpu.memory_space<vmem>>, vector<1x4xf32>,
    %235 = vector.extract_strided_slice %218 {offsets = [8, 0], sizes = [1, 4], strides = [1, 1]} : vector<31x4xf32> to vector<1x4xf32>
    %c25_157 = arith.constant 25 : index
    %c0_158 = arith.constant 0 : index
    %236 = vector.load %arg13[%c25_157, %c0_158] : memref<96x4xf32, #tpu.memory_space<vmem>>, vector<1x4xf32>
    tpu.vector_store %arg13[%c25_157, %c0_158], %235 {strides = array<i32>} : memref<96x4xf32, #tpu.memory_space<vmem>>, vector<1x4xf32>,
    %237 = vector.extract_strided_slice %218 {offsets = [9, 0], sizes = [1, 4], strides = [1, 1]} : vector<31x4xf32> to vector<1x4xf32>
    %c28_159 = arith.constant 28 : index
    %c0_160 = arith.constant 0 : index
    %238 = vector.load %arg13[%c28_159, %c0_160] : memref<96x4xf32, #tpu.memory_space<vmem>>, vector<1x4xf32>
    tpu.vector_store %arg13[%c28_159, %c0_160], %237 {strides = array<i32>} : memref<96x4xf32, #tpu.memory_space<vmem>>, vector<1x4xf32>,
    %239 = vector.extract_strided_slice %218 {offsets = [10, 0], sizes = [1, 4], strides = [1, 1]} : vector<31x4xf32> to vector<1x4xf32>
    %c31_161 = arith.constant 31 : index
    %c0_162 = arith.constant 0 : index
    %240 = vector.load %arg13[%c31_161, %c0_162] : memref<96x4xf32, #tpu.memory_space<vmem>>, vector<1x4xf32>
    tpu.vector_store %arg13[%c31_161, %c0_162], %239 {strides = array<i32>} : memref<96x4xf32, #tpu.memory_space<vmem>>, vector<1x4xf32>,
    %241 = vector.extract_strided_slice %218 {offsets = [11, 0], sizes = [1, 4], strides = [1, 1]} : vector<31x4xf32> to vector<1x4xf32>
    %c34 = arith.constant 34 : index
    %c0_163 = arith.constant 0 : index
    %242 = vector.load %arg13[%c34, %c0_163] : memref<96x4xf32, #tpu.memory_space<vmem>>, vector<1x4xf32>
    tpu.vector_store %arg13[%c34, %c0_163], %241 {strides = array<i32>} : memref<96x4xf32, #tpu.memory_space<vmem>>, vector<1x4xf32>,
    %243 = vector.extract_strided_slice %218 {offsets = [12, 0], sizes = [1, 4], strides = [1, 1]} : vector<31x4xf32> to vector<1x4xf32>
    %c37 = arith.constant 37 : index
    %c0_164 = arith.constant 0 : index
    %244 = vector.load %arg13[%c37, %c0_164] : memref<96x4xf32, #tpu.memory_space<vmem>>, vector<1x4xf32>
    tpu.vector_store %arg13[%c37, %c0_164], %243 {strides = array<i32>} : memref<96x4xf32, #tpu.memory_space<vmem>>, vector<1x4xf32>,
    %245 = vector.extract_strided_slice %218 {offsets = [13, 0], sizes = [1, 4], strides = [1, 1]} : vector<31x4xf32> to vector<1x4xf32>
    %c40 = arith.constant 40 : index
    %c0_165 = arith.constant 0 : index
    %246 = vector.load %arg13[%c40, %c0_165] : memref<96x4xf32, #tpu.memory_space<vmem>>, vector<1x4xf32>
    tpu.vector_store %arg13[%c40, %c0_165], %245 {strides = array<i32>} : memref<96x4xf32, #tpu.memory_space<vmem>>, vector<1x4xf32>,
    %247 = vector.extract_strided_slice %218 {offsets = [14, 0], sizes = [1, 4], strides = [1, 1]} : vector<31x4xf32> to vector<1x4xf32>
    %c43 = arith.constant 43 : index
    %c0_166 = arith.constant 0 : index
    %248 = vector.load %arg13[%c43, %c0_166] : memref<96x4xf32, #tpu.memory_space<vmem>>, vector<1x4xf32>
    tpu.vector_store %arg13[%c43, %c0_166], %247 {strides = array<i32>} : memref<96x4xf32, #tpu.memory_space<vmem>>, vector<1x4xf32>,
    %249 = vector.extract_strided_slice %218 {offsets = [15, 0], sizes = [1, 4], strides = [1, 1]} : vector<31x4xf32> to vector<1x4xf32>
    %c46 = arith.constant 46 : index
    %c0_167 = arith.constant 0 : index
    %250 = vector.load %arg13[%c46, %c0_167] : memref<96x4xf32, #tpu.memory_space<vmem>>, vector<1x4xf32>
    tpu.vector_store %arg13[%c46, %c0_167], %249 {strides = array<i32>} : memref<96x4xf32, #tpu.memory_space<vmem>>, vector<1x4xf32>,
    %251 = vector.extract_strided_slice %218 {offsets = [16, 0], sizes = [1, 4], strides = [1, 1]} : vector<31x4xf32> to vector<1x4xf32>
    %c49 = arith.constant 49 : index
    %c0_168 = arith.constant 0 : index
    %252 = vector.load %arg13[%c49, %c0_168] : memref<96x4xf32, #tpu.memory_space<vmem>>, vector<1x4xf32>
    tpu.vector_store %arg13[%c49, %c0_168], %251 {strides = array<i32>} : memref<96x4xf32, #tpu.memory_space<vmem>>, vector<1x4xf32>,
    %253 = vector.extract_strided_slice %218 {offsets = [17, 0], sizes = [1, 4], strides = [1, 1]} : vector<31x4xf32> to vector<1x4xf32>
    %c52 = arith.constant 52 : index
    %c0_169 = arith.constant 0 : index
    %254 = vector.load %arg13[%c52, %c0_169] : memref<96x4xf32, #tpu.memory_space<vmem>>, vector<1x4xf32>
    tpu.vector_store %arg13[%c52, %c0_169], %253 {strides = array<i32>} : memref<96x4xf32, #tpu.memory_space<vmem>>, vector<1x4xf32>,
    %255 = vector.extract_strided_slice %218 {offsets = [18, 0], sizes = [1, 4], strides = [1, 1]} : vector<31x4xf32> to vector<1x4xf32>
    %c55 = arith.constant 55 : index
    %c0_170 = arith.constant 0 : index
    %256 = vector.load %arg13[%c55, %c0_170] : memref<96x4xf32, #tpu.memory_space<vmem>>, vector<1x4xf32>
    tpu.vector_store %arg13[%c55, %c0_170], %255 {strides = array<i32>} : memref<96x4xf32, #tpu.memory_space<vmem>>, vector<1x4xf32>,
    %257 = vector.extract_strided_slice %218 {offsets = [19, 0], sizes = [1, 4], strides = [1, 1]} : vector<31x4xf32> to vector<1x4xf32>
    %c58 = arith.constant 58 : index
    %c0_171 = arith.constant 0 : index
    %258 = vector.load %arg13[%c58, %c0_171] : memref<96x4xf32, #tpu.memory_space<vmem>>, vector<1x4xf32>
    tpu.vector_store %arg13[%c58, %c0_171], %257 {strides = array<i32>} : memref<96x4xf32, #tpu.memory_space<vmem>>, vector<1x4xf32>,
    %259 = vector.extract_strided_slice %218 {offsets = [20, 0], sizes = [1, 4], strides = [1, 1]} : vector<31x4xf32> to vector<1x4xf32>
    %c61 = arith.constant 61 : index
    %c0_172 = arith.constant 0 : index
    %260 = vector.load %arg13[%c61, %c0_172] : memref<96x4xf32, #tpu.memory_space<vmem>>, vector<1x4xf32>
    tpu.vector_store %arg13[%c61, %c0_172], %259 {strides = array<i32>} : memref<96x4xf32, #tpu.memory_space<vmem>>, vector<1x4xf32>,
    %261 = vector.extract_strided_slice %218 {offsets = [21, 0], sizes = [1, 4], strides = [1, 1]} : vector<31x4xf32> to vector<1x4xf32>
    %c64 = arith.constant 64 : index
    %c0_173 = arith.constant 0 : index
    %262 = vector.load %arg13[%c64, %c0_173] : memref<96x4xf32, #tpu.memory_space<vmem>>, vector<1x4xf32>
    tpu.vector_store %arg13[%c64, %c0_173], %261 {strides = array<i32>} : memref<96x4xf32, #tpu.memory_space<vmem>>, vector<1x4xf32>,
    %263 = vector.extract_strided_slice %218 {offsets = [22, 0], sizes = [1, 4], strides = [1, 1]} : vector<31x4xf32> to vector<1x4xf32>
    %c67 = arith.constant 67 : index
    %c0_174 = arith.constant 0 : index
    %264 = vector.load %arg13[%c67, %c0_174] : memref<96x4xf32, #tpu.memory_space<vmem>>, vector<1x4xf32>
    tpu.vector_store %arg13[%c67, %c0_174], %263 {strides = array<i32>} : memref<96x4xf32, #tpu.memory_space<vmem>>, vector<1x4xf32>,
    %265 = vector.extract_strided_slice %218 {offsets = [23, 0], sizes = [1, 4], strides = [1, 1]} : vector<31x4xf32> to vector<1x4xf32>
    %c70 = arith.constant 70 : index
    %c0_175 = arith.constant 0 : index
    %266 = vector.load %arg13[%c70, %c0_175] : memref<96x4xf32, #tpu.memory_space<vmem>>, vector<1x4xf32>
    tpu.vector_store %arg13[%c70, %c0_175], %265 {strides = array<i32>} : memref<96x4xf32, #tpu.memory_space<vmem>>, vector<1x4xf32>,
    %267 = vector.extract_strided_slice %218 {offsets = [24, 0], sizes = [1, 4], strides = [1, 1]} : vector<31x4xf32> to vector<1x4xf32>
    %c73 = arith.constant 73 : index
    %c0_176 = arith.constant 0 : index
    %268 = vector.load %arg13[%c73, %c0_176] : memref<96x4xf32, #tpu.memory_space<vmem>>, vector<1x4xf32>
    tpu.vector_store %arg13[%c73, %c0_176], %267 {strides = array<i32>} : memref<96x4xf32, #tpu.memory_space<vmem>>, vector<1x4xf32>,
    %269 = vector.extract_strided_slice %218 {offsets = [25, 0], sizes = [1, 4], strides = [1, 1]} : vector<31x4xf32> to vector<1x4xf32>
    %c76 = arith.constant 76 : index
    %c0_177 = arith.constant 0 : index
    %270 = vector.load %arg13[%c76, %c0_177] : memref<96x4xf32, #tpu.memory_space<vmem>>, vector<1x4xf32>
    tpu.vector_store %arg13[%c76, %c0_177], %269 {strides = array<i32>} : memref<96x4xf32, #tpu.memory_space<vmem>>, vector<1x4xf32>,
    %271 = vector.extract_strided_slice %218 {offsets = [26, 0], sizes = [1, 4], strides = [1, 1]} : vector<31x4xf32> to vector<1x4xf32>
    %c79 = arith.constant 79 : index
    %c0_178 = arith.constant 0 : index
    %272 = vector.load %arg13[%c79, %c0_178] : memref<96x4xf32, #tpu.memory_space<vmem>>, vector<1x4xf32>
    tpu.vector_store %arg13[%c79, %c0_178], %271 {strides = array<i32>} : memref<96x4xf32, #tpu.memory_space<vmem>>, vector<1x4xf32>,
    %273 = vector.extract_strided_slice %218 {offsets = [27, 0], sizes = [1, 4], strides = [1, 1]} : vector<31x4xf32> to vector<1x4xf32>
    %c82 = arith.constant 82 : index
    %c0_179 = arith.constant 0 : index
    %274 = vector.load %arg13[%c82, %c0_179] : memref<96x4xf32, #tpu.memory_space<vmem>>, vector<1x4xf32>
    tpu.vector_store %arg13[%c82, %c0_179], %273 {strides = array<i32>} : memref<96x4xf32, #tpu.memory_space<vmem>>, vector<1x4xf32>,
    %275 = vector.extract_strided_slice %218 {offsets = [28, 0], sizes = [1, 4], strides = [1, 1]} : vector<31x4xf32> to vector<1x4xf32>
    %c85 = arith.constant 85 : index
    %c0_180 = arith.constant 0 : index
    %276 = vector.load %arg13[%c85, %c0_180] : memref<96x4xf32, #tpu.memory_space<vmem>>, vector<1x4xf32>
    tpu.vector_store %arg13[%c85, %c0_180], %275 {strides = array<i32>} : memref<96x4xf32, #tpu.memory_space<vmem>>, vector<1x4xf32>,
    %277 = vector.extract_strided_slice %218 {offsets = [29, 0], sizes = [1, 4], strides = [1, 1]} : vector<31x4xf32> to vector<1x4xf32>
    %c88 = arith.constant 88 : index
    %c0_181 = arith.constant 0 : index
    %278 = vector.load %arg13[%c88, %c0_181] : memref<96x4xf32, #tpu.memory_space<vmem>>, vector<1x4xf32>
    tpu.vector_store %arg13[%c88, %c0_181], %277 {strides = array<i32>} : memref<96x4xf32, #tpu.memory_space<vmem>>, vector<1x4xf32>,
    %279 = vector.extract_strided_slice %218 {offsets = [30, 0], sizes = [1, 4], strides = [1, 1]} : vector<31x4xf32> to vector<1x4xf32>
    %c91 = arith.constant 91 : index
    %c0_182 = arith.constant 0 : index
    %280 = vector.load %arg13[%c91, %c0_182] : memref<96x4xf32, #tpu.memory_space<vmem>>, vector<1x4xf32>
    tpu.vector_store %arg13[%c91, %c0_182], %279 {strides = array<i32>} : memref<96x4xf32, #tpu.memory_space<vmem>>, vector<1x4xf32>,
    %281 = vector.extract_strided_slice %152 {offsets = [0, 8], sizes = [31, 4], strides = [1, 1]} : vector<31x12xf32> to vector<31x4xf32>
    %282 = vector.extract_strided_slice %281 {offsets = [0, 0], sizes = [1, 4], strides = [1, 1]} : vector<31x4xf32> to vector<1x4xf32>
    %c2_183 = arith.constant 2 : index
    %c0_184 = arith.constant 0 : index
    %283 = vector.load %arg13[%c2_183, %c0_184] : memref<96x4xf32, #tpu.memory_space<vmem>>, vector<1x4xf32>
    tpu.vector_store %arg13[%c2_183, %c0_184], %282 {strides = array<i32>} : memref<96x4xf32, #tpu.memory_space<vmem>>, vector<1x4xf32>,
    %284 = vector.extract_strided_slice %281 {offsets = [1, 0], sizes = [1, 4], strides = [1, 1]} : vector<31x4xf32> to vector<1x4xf32>
    %c5_185 = arith.constant 5 : index
    %c0_186 = arith.constant 0 : index
    %285 = vector.load %arg13[%c5_185, %c0_186] : memref<96x4xf32, #tpu.memory_space<vmem>>, vector<1x4xf32>
    tpu.vector_store %arg13[%c5_185, %c0_186], %284 {strides = array<i32>} : memref<96x4xf32, #tpu.memory_space<vmem>>, vector<1x4xf32>,
    %286 = vector.extract_strided_slice %281 {offsets = [2, 0], sizes = [1, 4], strides = [1, 1]} : vector<31x4xf32> to vector<1x4xf32>
    %c8_187 = arith.constant 8 : index
    %c0_188 = arith.constant 0 : index
    %287 = vector.load %arg13[%c8_187, %c0_188] : memref<96x4xf32, #tpu.memory_space<vmem>>, vector<1x4xf32>
    tpu.vector_store %arg13[%c8_187, %c0_188], %286 {strides = array<i32>} : memref<96x4xf32, #tpu.memory_space<vmem>>, vector<1x4xf32>,
    %288 = vector.extract_strided_slice %281 {offsets = [3, 0], sizes = [1, 4], strides = [1, 1]} : vector<31x4xf32> to vector<1x4xf32>
    %c11_189 = arith.constant 11 : index
    %c0_190 = arith.constant 0 : index
    %289 = vector.load %arg13[%c11_189, %c0_190] : memref<96x4xf32, #tpu.memory_space<vmem>>, vector<1x4xf32>
    tpu.vector_store %arg13[%c11_189, %c0_190], %288 {strides = array<i32>} : memref<96x4xf32, #tpu.memory_space<vmem>>, vector<1x4xf32>,
    %290 = vector.extract_strided_slice %281 {offsets = [4, 0], sizes = [1, 4], strides = [1, 1]} : vector<31x4xf32> to vector<1x4xf32>
    %c14_191 = arith.constant 14 : index
    %c0_192 = arith.constant 0 : index
    %291 = vector.load %arg13[%c14_191, %c0_192] : memref<96x4xf32, #tpu.memory_space<vmem>>, vector<1x4xf32>
    tpu.vector_store %arg13[%c14_191, %c0_192], %290 {strides = array<i32>} : memref<96x4xf32, #tpu.memory_space<vmem>>, vector<1x4xf32>,
    %292 = vector.extract_strided_slice %281 {offsets = [5, 0], sizes = [1, 4], strides = [1, 1]} : vector<31x4xf32> to vector<1x4xf32>
    %c17_193 = arith.constant 17 : index
    %c0_194 = arith.constant 0 : index
    %293 = vector.load %arg13[%c17_193, %c0_194] : memref<96x4xf32, #tpu.memory_space<vmem>>, vector<1x4xf32>
    tpu.vector_store %arg13[%c17_193, %c0_194], %292 {strides = array<i32>} : memref<96x4xf32, #tpu.memory_space<vmem>>, vector<1x4xf32>,
    %294 = vector.extract_strided_slice %281 {offsets = [6, 0], sizes = [1, 4], strides = [1, 1]} : vector<31x4xf32> to vector<1x4xf32>
    %c20_195 = arith.constant 20 : index
    %c0_196 = arith.constant 0 : index
    %295 = vector.load %arg13[%c20_195, %c0_196] : memref<96x4xf32, #tpu.memory_space<vmem>>, vector<1x4xf32>
    tpu.vector_store %arg13[%c20_195, %c0_196], %294 {strides = array<i32>} : memref<96x4xf32, #tpu.memory_space<vmem>>, vector<1x4xf32>,
    %296 = vector.extract_strided_slice %281 {offsets = [7, 0], sizes = [1, 4], strides = [1, 1]} : vector<31x4xf32> to vector<1x4xf32>
    %c23_197 = arith.constant 23 : index
    %c0_198 = arith.constant 0 : index
    %297 = vector.load %arg13[%c23_197, %c0_198] : memref<96x4xf32, #tpu.memory_space<vmem>>, vector<1x4xf32>
    tpu.vector_store %arg13[%c23_197, %c0_198], %296 {strides = array<i32>} : memref<96x4xf32, #tpu.memory_space<vmem>>, vector<1x4xf32>,
    %298 = vector.extract_strided_slice %281 {offsets = [8, 0], sizes = [1, 4], strides = [1, 1]} : vector<31x4xf32> to vector<1x4xf32>
    %c26_199 = arith.constant 26 : index
    %c0_200 = arith.constant 0 : index
    %299 = vector.load %arg13[%c26_199, %c0_200] : memref<96x4xf32, #tpu.memory_space<vmem>>, vector<1x4xf32>
    tpu.vector_store %arg13[%c26_199, %c0_200], %298 {strides = array<i32>} : memref<96x4xf32, #tpu.memory_space<vmem>>, vector<1x4xf32>,
    %300 = vector.extract_strided_slice %281 {offsets = [9, 0], sizes = [1, 4], strides = [1, 1]} : vector<31x4xf32> to vector<1x4xf32>
    %c29_201 = arith.constant 29 : index
    %c0_202 = arith.constant 0 : index
    %301 = vector.load %arg13[%c29_201, %c0_202] : memref<96x4xf32, #tpu.memory_space<vmem>>, vector<1x4xf32>
    tpu.vector_store %arg13[%c29_201, %c0_202], %300 {strides = array<i32>} : memref<96x4xf32, #tpu.memory_space<vmem>>, vector<1x4xf32>,
    %302 = vector.extract_strided_slice %281 {offsets = [10, 0], sizes = [1, 4], strides = [1, 1]} : vector<31x4xf32> to vector<1x4xf32>
    %c32 = arith.constant 32 : index
    %c0_203 = arith.constant 0 : index
    %303 = vector.load %arg13[%c32, %c0_203] : memref<96x4xf32, #tpu.memory_space<vmem>>, vector<1x4xf32>
    tpu.vector_store %arg13[%c32, %c0_203], %302 {strides = array<i32>} : memref<96x4xf32, #tpu.memory_space<vmem>>, vector<1x4xf32>,
    %304 = vector.extract_strided_slice %281 {offsets = [11, 0], sizes = [1, 4], strides = [1, 1]} : vector<31x4xf32> to vector<1x4xf32>
    %c35 = arith.constant 35 : index
    %c0_204 = arith.constant 0 : index
    %305 = vector.load %arg13[%c35, %c0_204] : memref<96x4xf32, #tpu.memory_space<vmem>>, vector<1x4xf32>
    tpu.vector_store %arg13[%c35, %c0_204], %304 {strides = array<i32>} : memref<96x4xf32, #tpu.memory_space<vmem>>, vector<1x4xf32>,
    %306 = vector.extract_strided_slice %281 {offsets = [12, 0], sizes = [1, 4], strides = [1, 1]} : vector<31x4xf32> to vector<1x4xf32>
    %c38 = arith.constant 38 : index
    %c0_205 = arith.constant 0 : index
    %307 = vector.load %arg13[%c38, %c0_205] : memref<96x4xf32, #tpu.memory_space<vmem>>, vector<1x4xf32>
    tpu.vector_store %arg13[%c38, %c0_205], %306 {strides = array<i32>} : memref<96x4xf32, #tpu.memory_space<vmem>>, vector<1x4xf32>,
    %308 = vector.extract_strided_slice %281 {offsets = [13, 0], sizes = [1, 4], strides = [1, 1]} : vector<31x4xf32> to vector<1x4xf32>
    %c41 = arith.constant 41 : index
    %c0_206 = arith.constant 0 : index
    %309 = vector.load %arg13[%c41, %c0_206] : memref<96x4xf32, #tpu.memory_space<vmem>>, vector<1x4xf32>
    tpu.vector_store %arg13[%c41, %c0_206], %308 {strides = array<i32>} : memref<96x4xf32, #tpu.memory_space<vmem>>, vector<1x4xf32>,
    %310 = vector.extract_strided_slice %281 {offsets = [14, 0], sizes = [1, 4], strides = [1, 1]} : vector<31x4xf32> to vector<1x4xf32>
    %c44 = arith.constant 44 : index
    %c0_207 = arith.constant 0 : index
    %311 = vector.load %arg13[%c44, %c0_207] : memref<96x4xf32, #tpu.memory_space<vmem>>, vector<1x4xf32>
    tpu.vector_store %arg13[%c44, %c0_207], %310 {strides = array<i32>} : memref<96x4xf32, #tpu.memory_space<vmem>>, vector<1x4xf32>,
    %312 = vector.extract_strided_slice %281 {offsets = [15, 0], sizes = [1, 4], strides = [1, 1]} : vector<31x4xf32> to vector<1x4xf32>
    %c47 = arith.constant 47 : index
    %c0_208 = arith.constant 0 : index
    %313 = vector.load %arg13[%c47, %c0_208] : memref<96x4xf32, #tpu.memory_space<vmem>>, vector<1x4xf32>
    tpu.vector_store %arg13[%c47, %c0_208], %312 {strides = array<i32>} : memref<96x4xf32, #tpu.memory_space<vmem>>, vector<1x4xf32>,
    %314 = vector.extract_strided_slice %281 {offsets = [16, 0], sizes = [1, 4], strides = [1, 1]} : vector<31x4xf32> to vector<1x4xf32>
    %c50 = arith.constant 50 : index
    %c0_209 = arith.constant 0 : index
    %315 = vector.load %arg13[%c50, %c0_209] : memref<96x4xf32, #tpu.memory_space<vmem>>, vector<1x4xf32>
    tpu.vector_store %arg13[%c50, %c0_209], %314 {strides = array<i32>} : memref<96x4xf32, #tpu.memory_space<vmem>>, vector<1x4xf32>,
    %316 = vector.extract_strided_slice %281 {offsets = [17, 0], sizes = [1, 4], strides = [1, 1]} : vector<31x4xf32> to vector<1x4xf32>
    %c53 = arith.constant 53 : index
    %c0_210 = arith.constant 0 : index
    %317 = vector.load %arg13[%c53, %c0_210] : memref<96x4xf32, #tpu.memory_space<vmem>>, vector<1x4xf32>
    tpu.vector_store %arg13[%c53, %c0_210], %316 {strides = array<i32>} : memref<96x4xf32, #tpu.memory_space<vmem>>, vector<1x4xf32>,
    %318 = vector.extract_strided_slice %281 {offsets = [18, 0], sizes = [1, 4], strides = [1, 1]} : vector<31x4xf32> to vector<1x4xf32>
    %c56 = arith.constant 56 : index
    %c0_211 = arith.constant 0 : index
    %319 = vector.load %arg13[%c56, %c0_211] : memref<96x4xf32, #tpu.memory_space<vmem>>, vector<1x4xf32>
    tpu.vector_store %arg13[%c56, %c0_211], %318 {strides = array<i32>} : memref<96x4xf32, #tpu.memory_space<vmem>>, vector<1x4xf32>,
    %320 = vector.extract_strided_slice %281 {offsets = [19, 0], sizes = [1, 4], strides = [1, 1]} : vector<31x4xf32> to vector<1x4xf32>
    %c59 = arith.constant 59 : index
    %c0_212 = arith.constant 0 : index
    %321 = vector.load %arg13[%c59, %c0_212] : memref<96x4xf32, #tpu.memory_space<vmem>>, vector<1x4xf32>
    tpu.vector_store %arg13[%c59, %c0_212], %320 {strides = array<i32>} : memref<96x4xf32, #tpu.memory_space<vmem>>, vector<1x4xf32>,
    %322 = vector.extract_strided_slice %281 {offsets = [20, 0], sizes = [1, 4], strides = [1, 1]} : vector<31x4xf32> to vector<1x4xf32>
    %c62 = arith.constant 62 : index
    %c0_213 = arith.constant 0 : index
    %323 = vector.load %arg13[%c62, %c0_213] : memref<96x4xf32, #tpu.memory_space<vmem>>, vector<1x4xf32>
    tpu.vector_store %arg13[%c62, %c0_213], %322 {strides = array<i32>} : memref<96x4xf32, #tpu.memory_space<vmem>>, vector<1x4xf32>,
    %324 = vector.extract_strided_slice %281 {offsets = [21, 0], sizes = [1, 4], strides = [1, 1]} : vector<31x4xf32> to vector<1x4xf32>
    %c65 = arith.constant 65 : index
    %c0_214 = arith.constant 0 : index
    %325 = vector.load %arg13[%c65, %c0_214] : memref<96x4xf32, #tpu.memory_space<vmem>>, vector<1x4xf32>
    tpu.vector_store %arg13[%c65, %c0_214], %324 {strides = array<i32>} : memref<96x4xf32, #tpu.memory_space<vmem>>, vector<1x4xf32>,
    %326 = vector.extract_strided_slice %281 {offsets = [22, 0], sizes = [1, 4], strides = [1, 1]} : vector<31x4xf32> to vector<1x4xf32>
    %c68 = arith.constant 68 : index
    %c0_215 = arith.constant 0 : index
    %327 = vector.load %arg13[%c68, %c0_215] : memref<96x4xf32, #tpu.memory_space<vmem>>, vector<1x4xf32>
    tpu.vector_store %arg13[%c68, %c0_215], %326 {strides = array<i32>} : memref<96x4xf32, #tpu.memory_space<vmem>>, vector<1x4xf32>,
    %328 = vector.extract_strided_slice %281 {offsets = [23, 0], sizes = [1, 4], strides = [1, 1]} : vector<31x4xf32> to vector<1x4xf32>
    %c71 = arith.constant 71 : index
    %c0_216 = arith.constant 0 : index
    %329 = vector.load %arg13[%c71, %c0_216] : memref<96x4xf32, #tpu.memory_space<vmem>>, vector<1x4xf32>
    tpu.vector_store %arg13[%c71, %c0_216], %328 {strides = array<i32>} : memref<96x4xf32, #tpu.memory_space<vmem>>, vector<1x4xf32>,
    %330 = vector.extract_strided_slice %281 {offsets = [24, 0], sizes = [1, 4], strides = [1, 1]} : vector<31x4xf32> to vector<1x4xf32>
    %c74 = arith.constant 74 : index
    %c0_217 = arith.constant 0 : index
    %331 = vector.load %arg13[%c74, %c0_217] : memref<96x4xf32, #tpu.memory_space<vmem>>, vector<1x4xf32>
    tpu.vector_store %arg13[%c74, %c0_217], %330 {strides = array<i32>} : memref<96x4xf32, #tpu.memory_space<vmem>>, vector<1x4xf32>,
    %332 = vector.extract_strided_slice %281 {offsets = [25, 0], sizes = [1, 4], strides = [1, 1]} : vector<31x4xf32> to vector<1x4xf32>
    %c77 = arith.constant 77 : index
    %c0_218 = arith.constant 0 : index
    %333 = vector.load %arg13[%c77, %c0_218] : memref<96x4xf32, #tpu.memory_space<vmem>>, vector<1x4xf32>
    tpu.vector_store %arg13[%c77, %c0_218], %332 {strides = array<i32>} : memref<96x4xf32, #tpu.memory_space<vmem>>, vector<1x4xf32>,
    %334 = vector.extract_strided_slice %281 {offsets = [26, 0], sizes = [1, 4], strides = [1, 1]} : vector<31x4xf32> to vector<1x4xf32>
    %c80 = arith.constant 80 : index
    %c0_219 = arith.constant 0 : index
    %335 = vector.load %arg13[%c80, %c0_219] : memref<96x4xf32, #tpu.memory_space<vmem>>, vector<1x4xf32>
    tpu.vector_store %arg13[%c80, %c0_219], %334 {strides = array<i32>} : memref<96x4xf32, #tpu.memory_space<vmem>>, vector<1x4xf32>,
    %336 = vector.extract_strided_slice %281 {offsets = [27, 0], sizes = [1, 4], strides = [1, 1]} : vector<31x4xf32> to vector<1x4xf32>
    %c83 = arith.constant 83 : index
    %c0_220 = arith.constant 0 : index
    %337 = vector.load %arg13[%c83, %c0_220] : memref<96x4xf32, #tpu.memory_space<vmem>>, vector<1x4xf32>
    tpu.vector_store %arg13[%c83, %c0_220], %336 {strides = array<i32>} : memref<96x4xf32, #tpu.memory_space<vmem>>, vector<1x4xf32>,
    %338 = vector.extract_strided_slice %281 {offsets = [28, 0], sizes = [1, 4], strides = [1, 1]} : vector<31x4xf32> to vector<1x4xf32>
    %c86 = arith.constant 86 : index
    %c0_221 = arith.constant 0 : index
    %339 = vector.load %arg13[%c86, %c0_221] : memref<96x4xf32, #tpu.memory_space<vmem>>, vector<1x4xf32>
    tpu.vector_store %arg13[%c86, %c0_221], %338 {strides = array<i32>} : memref<96x4xf32, #tpu.memory_space<vmem>>, vector<1x4xf32>,
    %340 = vector.extract_strided_slice %281 {offsets = [29, 0], sizes = [1, 4], strides = [1, 1]} : vector<31x4xf32> to vector<1x4xf32>
    %c89 = arith.constant 89 : index
    %c0_222 = arith.constant 0 : index
    %341 = vector.load %arg13[%c89, %c0_222] : memref<96x4xf32, #tpu.memory_space<vmem>>, vector<1x4xf32>
    tpu.vector_store %arg13[%c89, %c0_222], %340 {strides = array<i32>} : memref<96x4xf32, #tpu.memory_space<vmem>>, vector<1x4xf32>,
    %342 = vector.extract_strided_slice %281 {offsets = [30, 0], sizes = [1, 4], strides = [1, 1]} : vector<31x4xf32> to vector<1x4xf32>
    %c92 = arith.constant 92 : index
    %c0_223 = arith.constant 0 : index
    %343 = vector.load %arg13[%c92, %c0_223] : memref<96x4xf32, #tpu.memory_space<vmem>>, vector<1x4xf32>
    tpu.vector_store %arg13[%c92, %c0_223], %342 {strides = array<i32>} : memref<96x4xf32, #tpu.memory_space<vmem>>, vector<1x4xf32>,
    %c0_224 = arith.constant 0 : index
    %c0_225 = arith.constant 0 : index
    %344 = vector.load %arg13[%c0_224, %c0_225] : memref<96x4xf32, #tpu.memory_space<vmem>>, vector<96x4xf32>
    %345 = tpu.transpose %344, [1, 0] : vector<96x4xf32> -> vector<4x96xf32>
    %c0_226 = arith.constant 0 : index
    %c0_227 = arith.constant 0 : index
    %c0_228 = arith.constant 0 : index
    %346 = vector.load %arg10[%c0_226, %c0_227, %c0_228] : memref<1x4x96xf32, #tpu.memory_space<vmem>>, vector<1x4x96xf32>
    %347 = vector.shape_cast %346 : vector<1x4x96xf32> to vector<4x96xf32>
    %348 = vector.shape_cast %345 : vector<4x96xf32> to vector<1x4x96xf32>
    tpu.vector_store %arg10[%c0_226, %c0_227, %c0_228], %348 {strides = array<i32>} : memref<1x4x96xf32, #tpu.memory_space<vmem>>, vector<1x4x96xf32>,
    return
  }
  func.func @transform_0(%arg0: i32) -> (i32, i32, i32) {
    %c0_i32 = arith.constant 0 : i32
    %c0_i32_0 = arith.constant 0 : i32
    %c0_i32_1 = arith.constant 0 : i32
    return %arg0, %c0_i32, %c0_i32_0 : i32, i32, i32
  }
  func.func @transform_1(%arg0: i32) -> (i32, i32) {
    %c0_i32 = arith.constant 0 : i32
    %c0_i32_0 = arith.constant 0 : i32
    %c0_i32_1 = arith.constant 0 : i32
    return %c0_i32, %c0_i32_0 : i32, i32
  }
  func.func @transform_2(%arg0: i32) -> (i32, i32) {
    %c0_i32 = arith.constant 0 : i32
    %c0_i32_0 = arith.constant 0 : i32
    %c0_i32_1 = arith.constant 0 : i32
    return %c0_i32, %c0_i32_0 : i32, i32
  }
  func.func @transform_3(%arg0: i32) -> (i32, i32) {
    %c0_i32 = arith.constant 0 : i32
    %c0_i32_0 = arith.constant 0 : i32
    %c0_i32_1 = arith.constant 0 : i32
    return %c0_i32, %c0_i32_0 : i32, i32
  }
  func.func @transform_4(%arg0: i32) -> (i32, i32) {
    %c0_i32 = arith.constant 0 : i32
    %c0_i32_0 = arith.constant 0 : i32
    %c0_i32_1 = arith.constant 0 : i32
    return %c0_i32, %c0_i32_0 : i32, i32
  }
  func.func @transform_5(%arg0: i32) -> (i32, i32) {
    %c0_i32 = arith.constant 0 : i32
    %c0_i32_0 = arith.constant 0 : i32
    %c0_i32_1 = arith.constant 0 : i32
    return %c0_i32, %c0_i32_0 : i32, i32
  }
  func.func @transform_6(%arg0: i32) -> (i32, i32) {
    %c0_i32 = arith.constant 0 : i32
    %c0_i32_0 = arith.constant 0 : i32
    %c0_i32_1 = arith.constant 0 : i32
    return %c0_i32, %c0_i32_0 : i32, i32
  }
  func.func @transform_7(%arg0: i32) -> (i32, i32) {
    %c0_i32 = arith.constant 0 : i32
    %c0_i32_0 = arith.constant 0 : i32
    %c0_i32_1 = arith.constant 0 : i32
    return %c0_i32, %c0_i32_0 : i32, i32
  }
  func.func @transform_8(%arg0: i32) -> (i32, i32) {
    %c0_i32 = arith.constant 0 : i32
    %c0_i32_0 = arith.constant 0 : i32
    %c0_i32_1 = arith.constant 0 : i32
    return %c0_i32, %c0_i32_0 : i32, i32
  }
  func.func @transform_9(%arg0: i32) -> (i32, i32, i32) {
    %c0_i32 = arith.constant 0 : i32
    %c0_i32_0 = arith.constant 0 : i32
    %c0_i32_1 = arith.constant 0 : i32
    return %arg0, %c0_i32, %c0_i32_0 : i32, i32, i32
  }
}

</mosaic_0001>

<llo_original>
// kernel: decoder_forward.1
$region0: #{decoder_forward.1}
  #allocation0 [shape = 'u32[]', space=smem, size = 0x4, offset = 0x4, fixed_abs, tag = 'smem constant byte address 0x4 - core index']
  #allocation1 [shape = 'u32[144,128]{1,0:T(1,128)}', space=vmem, size = 0x12000, scoped, tag = 'internal scratch']
  #allocation2 [shape = 'f32[16,512]{1,0:T(8,128)}', space=vmem, size = 0x8000, scoped, tag = 'scratch operand']
  #allocation3 [shape = 'f32[32,256]{1,0:T(8,128)}', space=vmem, size = 0x8000, scoped, tag = 'scratch operand']
  #allocation4 [shape = 'f32[96,4]{1,0:T(8,128)}', space=vmem, size = 0xc000, scoped, tag = 'scratch operand']
  %s0 = inlined_call_operand.vmem [shape: f32[2,8,64], index: 0, kind: input, shape index: {}]
  %s1 = inlined_call_operand.vmem [shape: bf16[128,512], index: 1, kind: input, shape index: {}]
  %s2 = inlined_call_operand.vmem [shape: bf16[128,512], index: 2, kind: input, shape index: {}]
  %s3 = inlined_call_operand.vmem [shape: f32[1,512], index: 3, kind: input, shape index: {}]
  %s4 = inlined_call_operand.vmem [shape: bf16[1024,256], index: 4, kind: input, shape index: {}]
  %s5 = inlined_call_operand.vmem [shape: bf16[1024,256], index: 5, kind: input, shape index: {}]
  %s6 = inlined_call_operand.vmem [shape: f32[1,256], index: 6, kind: input, shape index: {}]
  %s7 = inlined_call_operand.vmem [shape: bf16[512,12], index: 7, kind: input, shape index: {}]
  %s8 = inlined_call_operand.vmem [shape: f32[1,12], index: 8, kind: input, shape index: {}]
  %s9 = inlined_call_operand.hbm [shape: f32[2,4,96], index: 9, kind: output, shape index: {}]
  %s10 = sld [smem:[#allocation0]]
  $region69: #{decoder_forward.1} parent=0
    _
  %s12 = ssub.s32 1, %s10
  %s13 = scalar_select 0, %s12, %s10
  $region1: #{decoder_forward.1} parent=0
    #allocation5 [shape = 'u8[4096]{0}', space=vmem, size = 0x1000, scoped, tag = 'output window, operand 0']
    #allocation6 [shape = 's32[2]{0}', space=sflag, size = 0x8, scoped, tag = 'scoped memory for decoder_forward.1']
    %14 = vsyncpa [#allocation6], 0
    %s15 = scalar_lea.sflag [#allocation6], 1
    %16 = vsyncpa %s15, 0
    loop: start=0, step=1, limit=4
    $region2: #{decoder_forward.1} parent=1 // loop_pre_header
      _
    $region3: #{decoder_forward.1} parent=1 // loop_header
      %s18 = sphi 0, %s22
      %p19 = scmp.ge.s32.totalorder %s18, 4
      %s28 = sphi 0, %s30
      %s31 = sphi 0, %s28
      %s32 = sphi 0, %s31
      %s48 = sphi 0, %s32
      %s52 = sphi 0, %s52
      %s54 = sphi 0, %s52
      %s55 = sphi 0, %s54
      %s69 = sphi 0, %s55
      %s73 = sphi 0, %s73
      %s75 = sphi 0, %s73
      %s76 = sphi 0, %s75
      %s90 = sphi 0, %s76
      %s94 = sphi 0, %s94
      %s96 = sphi 0, %s94
      %s97 = sphi 0, %s96
      %s111 = sphi 0, %s97
      %s115 = sphi 0, %s115
      %s117 = sphi 0, %s115
      %s118 = sphi 0, %s117
      %s132 = sphi 0, %s118
      %s136 = sphi 0, %s136
      %s138 = sphi 0, %s136
      %s139 = sphi 0, %s138
      %s153 = sphi 0, %s139
      %s157 = sphi 0, %s157
      %s159 = sphi 0, %s157
      %s160 = sphi 0, %s159
      %s174 = sphi 0, %s160
      %s178 = sphi 0, %s178
      %s180 = sphi 0, %s178
      %s181 = sphi 0, %s180
      %s195 = sphi 0, %s181
      %s199 = sphi 0, %s199
      %s201 = sphi 0, %s199
      %s202 = sphi 0, %s201
      %s216 = sphi 0, %s202
      %s222 = sphi 0, %s224
      %s225 = sphi 0, %s222
      %s226 = sphi 0, %s225
      %s242 = sphi 0, %s226
    $region4: #{decoder_forward.1} parent=1 // loop_header_branch
      %21 = sbr.rel (%p19) target = $region8
    $region5: #{decoder_forward.1} parent=1 // loop_body
      %s23 = ssub.s32 %s18, 1
      %s24 = ssub.s32 %s18, 2
      %s25 = sadd.s32 %s18, 1
      %s26 = ssub.s32 %s18, %s25
      %p27 = scmp.eq.s32.totalorder %s26, 0
      %s29 = sadd.s32 %s28, 1
      %s30 = scalar_select %p27, %s28, %s29
      %p33 = pneg %p27
      %p34 = scmp.eq.s32.totalorder %s18, 1
      %p35 = por %p33, %p34
      %p36 = scmp.ne.s32.totalorder %s28, %s31
      %p37 = scmp.eq.s32.totalorder %s18, 0
      %p38 = por %p36, %p37
      %p39 = scmp.ne.s32.totalorder %s28, %s31
      %p40 = scmp.eq.s32.totalorder %s23, 1
      %p41 = por %p39, %p40
      %p42 = scmp.ne.s32.totalorder %s31, %s32
      %p43 = scmp.eq.s32.totalorder %s23, 0
      %p44 = por %p42, %p43
      %p45 = scmp.ne.s32.totalorder %s31, %s32
      %p46 = scmp.eq.s32.totalorder %s24, 1
      %p47 = por %p45, %p46
      %p49 = scmp.ne.s32.totalorder %s32, %s48
      %p50 = scmp.eq.s32.totalorder %s24, 0
      %p51 = por %p49, %p50
      %s53 = sadd.s32 %s52, 1
      %p56 = scmp.eq.s32.totalorder %s18, 1
      %p57 = scmp.ne.s32.totalorder %s52, %s54
      %p58 = scmp.eq.s32.totalorder %s18, 0
      %p59 = por %p57, %p58
      %p60 = scmp.ne.s32.totalorder %s52, %s54
      %p61 = scmp.eq.s32.totalorder %s23, 1
      %p62 = por %p60, %p61
      %p63 = scmp.ne.s32.totalorder %s54, %s55
      %p64 = scmp.eq.s32.totalorder %s23, 0
      %p65 = por %p63, %p64
      %p66 = scmp.ne.s32.totalorder %s54, %s55
      %p67 = scmp.eq.s32.totalorder %s24, 1
      %p68 = por %p66, %p67
      %p70 = scmp.ne.s32.totalorder %s55, %s69
      %p71 = scmp.eq.s32.totalorder %s24, 0
      %p72 = por %p70, %p71
      %s74 = sadd.s32 %s73, 1
      %p77 = scmp.eq.s32.totalorder %s18, 1
      %p78 = scmp.ne.s32.totalorder %s73, %s75
      %p79 = scmp.eq.s32.totalorder %s18, 0
      %p80 = por %p78, %p79
      %p81 = scmp.ne.s32.totalorder %s73, %s75
      %p82 = scmp.eq.s32.totalorder %s23, 1
      %p83 = por %p81, %p82
      %p84 = scmp.ne.s32.totalorder %s75, %s76
      %p85 = scmp.eq.s32.totalorder %s23, 0
      %p86 = por %p84, %p85
      %p87 = scmp.ne.s32.totalorder %s75, %s76
      %p88 = scmp.eq.s32.totalorder %s24, 1
      %p89 = por %p87, %p88
      %p91 = scmp.ne.s32.totalorder %s76, %s90
      %p92 = scmp.eq.s32.totalorder %s24, 0
      %p93 = por %p91, %p92
      %s95 = sadd.s32 %s94, 1
      %p98 = scmp.eq.s32.totalorder %s18, 1
      %p99 = scmp.ne.s32.totalorder %s94, %s96
      %p100 = scmp.eq.s32.totalorder %s18, 0
      %p101 = por %p99, %p100
      %p102 = scmp.ne.s32.totalorder %s94, %s96
      %p103 = scmp.eq.s32.totalorder %s23, 1
      %p104 = por %p102, %p103
      %p105 = scmp.ne.s32.totalorder %s96, %s97
      %p106 = scmp.eq.s32.totalorder %s23, 0
      %p107 = por %p105, %p106
      %p108 = scmp.ne.s32.totalorder %s96, %s97
      %p109 = scmp.eq.s32.totalorder %s24, 1
      %p110 = por %p108, %p109
      %p112 = scmp.ne.s32.totalorder %s97, %s111
      %p113 = scmp.eq.s32.totalorder %s24, 0
      %p114 = por %p112, %p113
      %s116 = sadd.s32 %s115, 1
      %p119 = scmp.eq.s32.totalorder %s18, 1
      %p120 = scmp.ne.s32.totalorder %s115, %s117
      %p121 = scmp.eq.s32.totalorder %s18, 0
      %p122 = por %p120, %p121
      %p123 = scmp.ne.s32.totalorder %s115, %s117
      %p124 = scmp.eq.s32.totalorder %s23, 1
      %p125 = por %p123, %p124
      %p126 = scmp.ne.s32.totalorder %s117, %s118
      %p127 = scmp.eq.s32.totalorder %s23, 0
      %p128 = por %p126, %p127
      %p129 = scmp.ne.s32.totalorder %s117, %s118
      %p130 = scmp.eq.s32.totalorder %s24, 1
      %p131 = por %p129, %p130
      %p133 = scmp.ne.s32.totalorder %s118, %s132
      %p134 = scmp.eq.s32.totalorder %s24, 0
      %p135 = por %p133, %p134
      %s137 = sadd.s32 %s136, 1
      %p140 = scmp.eq.s32.totalorder %s18, 1
      %p141 = scmp.ne.s32.totalorder %s136, %s138
      %p142 = scmp.eq.s32.totalorder %s18, 0
      %p143 = por %p141, %p142
      %p144 = scmp.ne.s32.totalorder %s136, %s138
      %p145 = scmp.eq.s32.totalorder %s23, 1
      %p146 = por %p144, %p145
      %p147 = scmp.ne.s32.totalorder %s138, %s139
      %p148 = scmp.eq.s32.totalorder %s23, 0
      %p149 = por %p147, %p148
      %p150 = scmp.ne.s32.totalorder %s138, %s139
      %p151 = scmp.eq.s32.totalorder %s24, 1
      %p152 = por %p150, %p151
      %p154 = scmp.ne.s32.totalorder %s139, %s153
      %p155 = scmp.eq.s32.totalorder %s24, 0
      %p156 = por %p154, %p155
      %s158 = sadd.s32 %s157, 1
      %p161 = scmp.eq.s32.totalorder %s18, 1
      %p162 = scmp.ne.s32.totalorder %s157, %s159
      %p163 = scmp.eq.s32.totalorder %s18, 0
      %p164 = por %p162, %p163
      %p165 = scmp.ne.s32.totalorder %s157, %s159
      %p166 = scmp.eq.s32.totalorder %s23, 1
      %p167 = por %p165, %p166
      %p168 = scmp.ne.s32.totalorder %s159, %s160
      %p169 = scmp.eq.s32.totalorder %s23, 0
      %p170 = por %p168, %p169
      %p171 = scmp.ne.s32.totalorder %s159, %s160
      %p172 = scmp.eq.s32.totalorder %s24, 1
      %p173 = por %p171, %p172
      %p175 = scmp.ne.s32.totalorder %s160, %s174
      %p176 = scmp.eq.s32.totalorder %s24, 0
      %p177 = por %p175, %p176
      %s179 = sadd.s32 %s178, 1
      %p182 = scmp.eq.s32.totalorder %s18, 1
      %p183 = scmp.ne.s32.totalorder %s178, %s180
      %p184 = scmp.eq.s32.totalorder %s18, 0
      %p185 = por %p183, %p184
      %p186 = scmp.ne.s32.totalorder %s178, %s180
      %p187 = scmp.eq.s32.totalorder %s23, 1
      %p188 = por %p186, %p187
      %p189 = scmp.ne.s32.totalorder %s180, %s181
      %p190 = scmp.eq.s32.totalorder %s23, 0
      %p191 = por %p189, %p190
      %p192 = scmp.ne.s32.totalorder %s180, %s181
      %p193 = scmp.eq.s32.totalorder %s24, 1
      %p194 = por %p192, %p193
      %p196 = scmp.ne.s32.totalorder %s181, %s195
      %p197 = scmp.eq.s32.totalorder %s24, 0
      %p198 = por %p196, %p197
      %s200 = sadd.s32 %s199, 1
      %p203 = scmp.eq.s32.totalorder %s18, 1
      %p204 = scmp.ne.s32.totalorder %s199, %s201
      %p205 = scmp.eq.s32.totalorder %s18, 0
      %p206 = por %p204, %p205
      %p207 = scmp.ne.s32.totalorder %s199, %s201
      %p208 = scmp.eq.s32.totalorder %s23, 1
      %p209 = por %p207, %p208
      %p210 = scmp.ne.s32.totalorder %s201, %s202
      %p211 = scmp.eq.s32.totalorder %s23, 0
      %p212 = por %p210, %p211
      %p213 = scmp.ne.s32.totalorder %s201, %s202
      %p214 = scmp.eq.s32.totalorder %s24, 1
      %p215 = por %p213, %p214
      %p217 = scmp.ne.s32.totalorder %s202, %s216
      %p218 = scmp.eq.s32.totalorder %s24, 0
      %p219 = por %p217, %p218
      %s220 = ssub.s32 %s18, %s25
      %p221 = scmp.eq.s32.totalorder %s220, 0
      %s223 = sadd.s32 %s222, 1
      %s224 = scalar_select %p221, %s222, %s223
      %p227 = pneg %p221
      %p228 = scmp.eq.s32.totalorder %s18, 1
      %p229 = por %p227, %p228
      %p230 = scmp.ne.s32.totalorder %s222, %s225
      %p231 = scmp.eq.s32.totalorder %s18, 0
      %p232 = por %p230, %p231
      %p233 = scmp.ne.s32.totalorder %s222, %s225
      %p234 = scmp.eq.s32.totalorder %s23, 1
      %p235 = por %p233, %p234
      %p236 = scmp.ne.s32.totalorder %s225, %s226
      %p237 = scmp.eq.s32.totalorder %s23, 0
      %p238 = por %p236, %p237
      %p239 = scmp.ne.s32.totalorder %s225, %s226
      %p240 = scmp.eq.s32.totalorder %s24, 1
      %p241 = por %p239, %p240
      %p243 = scmp.ne.s32.totalorder %s226, %s242
      %p244 = scmp.eq.s32.totalorder %s24, 0
      %p245 = por %p243, %p244
      %p246 = scmp.le.s32.totalorder 1, %s18
      %p247 = scmp.lt.s32.totalorder %s18, 3
      %p248 = pnand %p246, %p247
      %p249 = pneg %p248
      // Predicated region
      $region9: #{decoder_forward.1} parent=5 // pred_check
        _
      $region10: #{decoder_forward.1} parent=5 // pred_check_branch
        %251 = sbr.rel (%p248) target = $region12
      $region11: #{decoder_forward.1} parent=5 // pred_region
        %s252 = ssub.s32 %s18, 1
        // Predicated region
        $region13: #{decoder_forward.1} parent=11 // pred_check
          %p253 = pneg %p65
        $region14: #{decoder_forward.1} parent=11 // pred_check_branch
          %255 = sbr.rel (%p253) target = $region16
        $region15: #{decoder_forward.1} parent=11 // pred_region
          _
        $region16: #{decoder_forward.1} parent=11 // pred_fallthru
          _
        // Predicated region
        $region17: #{decoder_forward.1} parent=11 // pred_check
          %p256 = pneg %p86
        $region18: #{decoder_forward.1} parent=11 // pred_check_branch
          %258 = sbr.rel (%p256) target = $region20
        $region19: #{decoder_forward.1} parent=11 // pred_region
          _
        $region20: #{decoder_forward.1} parent=11 // pred_fallthru
          _
        // Predicated region
        $region21: #{decoder_forward.1} parent=11 // pred_check
          %p259 = pneg %p107
        $region22: #{decoder_forward.1} parent=11 // pred_check_branch
          %261 = sbr.rel (%p259) target = $region24
        $region23: #{decoder_forward.1} parent=11 // pred_region
          _
        $region24: #{decoder_forward.1} parent=11 // pred_fallthru
          _
        // Predicated region
        $region25: #{decoder_forward.1} parent=11 // pred_check
          %p262 = pneg %p128
        $region26: #{decoder_forward.1} parent=11 // pred_check_branch
          %264 = sbr.rel (%p262) target = $region28
        $region27: #{decoder_forward.1} parent=11 // pred_region
          _
        $region28: #{decoder_forward.1} parent=11 // pred_fallthru
          _
        // Predicated region
        $region29: #{decoder_forward.1} parent=11 // pred_check
          %p265 = pneg %p149
        $region30: #{decoder_forward.1} parent=11 // pred_check_branch
          %267 = sbr.rel (%p265) target = $region32
        $region31: #{decoder_forward.1} parent=11 // pred_region
          _
        $region32: #{decoder_forward.1} parent=11 // pred_fallthru
          _
        // Predicated region
        $region33: #{decoder_forward.1} parent=11 // pred_check
          %p268 = pneg %p170
        $region34: #{decoder_forward.1} parent=11 // pred_check_branch
          %270 = sbr.rel (%p268) target = $region36
        $region35: #{decoder_forward.1} parent=11 // pred_region
          _
        $region36: #{decoder_forward.1} parent=11 // pred_fallthru
          _
        // Predicated region
        $region37: #{decoder_forward.1} parent=11 // pred_check
          %p271 = pneg %p191
        $region38: #{decoder_forward.1} parent=11 // pred_check_branch
          %273 = sbr.rel (%p271) target = $region40
        $region39: #{decoder_forward.1} parent=11 // pred_region
          _
        $region40: #{decoder_forward.1} parent=11 // pred_fallthru
          _
        // Predicated region
        $region41: #{decoder_forward.1} parent=11 // pred_check
          %p274 = pneg %p212
        $region42: #{decoder_forward.1} parent=11 // pred_check_branch
          %276 = sbr.rel (%p274) target = $region44
        $region43: #{decoder_forward.1} parent=11 // pred_region
          _
        $region44: #{decoder_forward.1} parent=11 // pred_fallthru
          _
      $region12: #{decoder_forward.1} parent=5 // pred_fallthru
        _
      %p277 = scmp.lt.s32.totalorder %s18, 2
      // Predicated region
      $region45: #{decoder_forward.1} parent=5 // pred_check
        %p278 = pneg %p277
      $region46: #{decoder_forward.1} parent=5 // pred_check_branch
        %280 = sbr.rel (%p278) target = $region48
      $region47: #{decoder_forward.1} parent=5 // pred_region
        // Predicated region
        $region49: #{decoder_forward.1} parent=47 // pred_check
          %p281 = pneg %p38
        $region50: #{decoder_forward.1} parent=47 // pred_check_branch
          %283 = sbr.rel (%p281) target = $region52
        $region51: #{decoder_forward.1} parent=47 // pred_region
          %p284 = scmp.lt.s32.totalorder %s18, 1
          %s285 = scalar_select %p284, %s18, 1
          %s286 = smul.addr %s285, 8
          %s287 = scalar_lea.vmem %s0, %s286
        $region52: #{decoder_forward.1} parent=47 // pred_fallthru
          _
      $region48: #{decoder_forward.1} parent=5 // pred_fallthru
        _
      %p288 = scmp.le.s32.totalorder 1, %s18
      %p289 = scmp.lt.s32.totalorder %s18, 3
      %p290 = pnand %p288, %p289
      %p291 = pneg %p290
      // Predicated region
      $region53: #{decoder_forward.1} parent=5 // pred_check
        _
      $region54: #{decoder_forward.1} parent=5 // pred_check_branch
        %293 = sbr.rel (%p290) target = $region56
      $region55: #{decoder_forward.1} parent=5 // pred_region
        %s294 = ssub.s32 %s18, 1
        %p295 = scmp.lt.s32.totalorder %s23, 1
        %s296 = scalar_select %p295, %s23, 1
        %s297 = smul.addr %s296, 8
        %s298 = scalar_lea.vmem %s0, %s297
        %p299 = pneg %p44
        %p300 = pneg %p41
        %p301 = pneg %p65
        %p302 = pneg %p62
        %p303 = pneg %p86
        %p304 = pneg %p83
        %p305 = pneg %p107
        %p306 = pneg %p104
        %p307 = pneg %p128
        %p308 = pneg %p125
        %p309 = pneg %p149
        %p310 = pneg %p146
        %p311 = pneg %p170
        %p312 = pneg %p167
        %p313 = pneg %p191
        %p314 = pneg %p188
        %p315 = pneg %p212
        %p316 = pneg %p209
        %p317 = pneg %p238
        %p318 = pneg %p235
        %s319 = sand.u32 %s225, 1
        %s320 = scalar_lea.sflag [#allocation6], %s319
        %s321 = sand.u32 %s225, 1
        %s322 = smul.addr %s321, 4
        %s323 = scalar_lea.vmem [#allocation5], %s322
        %p324 = scmp.lt.s32.totalorder %s23, 1
        %s325 = scalar_select %p324, %s23, 1
        %s326 = smul.addr %s325, 8
        %s327 = scalar_lea.vmem %s0, %s326
        %v329 = vld [vmem:[%s327] sm:$0xff]
        %v330 = vld [vmem:[%s1] sm:$0xff]
        %v331 = vld [vmem:[%s1 + $0x8] sm:$0xff]
        %v332 = vld [vmem:[%s1 + $0x10] sm:$0xff]
        %v333 = vld [vmem:[%s1 + $0x18] sm:$0xff]
        %v334 = vld [vmem:[%s1 + $0x20] sm:$0xff]
        %v335 = vld [vmem:[%s1 + $0x28] sm:$0xff]
        %v336 = vld [vmem:[%s1 + $0x30] sm:$0xff]
        %v337 = vld [vmem:[%s1 + $0x38] sm:$0xff]
        %v338 = vld [vmem:[%s1 + $0x40] sm:$0xff]
        %v339 = vld [vmem:[%s1 + $0x48] sm:$0xff]
        %v340 = vld [vmem:[%s1 + $0x50] sm:$0xff]
        %v341 = vld [vmem:[%s1 + $0x58] sm:$0xff]
        %v342 = vld [vmem:[%s1 + $0x60] sm:$0xff]
        %v343 = vld [vmem:[%s1 + $0x68] sm:$0xff]
        %v344 = vld [vmem:[%s1 + $0x70] sm:$0xff]
        %v345 = vld [vmem:[%s1 + $0x78] sm:$0xff]
        %v346 = vld [vmem:[%s1 + $0x80] sm:$0xff]
        %v347 = vld [vmem:[%s1 + $0x88] sm:$0xff]
        %v348 = vld [vmem:[%s1 + $0x90] sm:$0xff]
        %v349 = vld [vmem:[%s1 + $0x98] sm:$0xff]
        %v350 = vld [vmem:[%s1 + $0xa0] sm:$0xff]
        %v351 = vld [vmem:[%s1 + $0xa8] sm:$0xff]
        %v352 = vld [vmem:[%s1 + $0xb0] sm:$0xff]
        %v353 = vld [vmem:[%s1 + $0xb8] sm:$0xff]
        %v354 = vld [vmem:[%s1 + $0xc0] sm:$0xff]
        %v355 = vld [vmem:[%s1 + $0xc8] sm:$0xff]
        %v356 = vld [vmem:[%s1 + $0xd0] sm:$0xff]
        %v357 = vld [vmem:[%s1 + $0xd8] sm:$0xff]
        %v358 = vld [vmem:[%s1 + $0xe0] sm:$0xff]
        %v359 = vld [vmem:[%s1 + $0xe8] sm:$0xff]
        %v360 = vld [vmem:[%s1 + $0xf0] sm:$0xff]
        %v361 = vld [vmem:[%s1 + $0xf8] sm:$0xff]
        %v362 = vld [vmem:[%s2] sm:$0xff]
        %v363 = vld [vmem:[%s2 + $0x8] sm:$0xff]
        %v364 = vld [vmem:[%s2 + $0x10] sm:$0xff]
        %v365 = vld [vmem:[%s2 + $0x18] sm:$0xff]
        %v366 = vld [vmem:[%s2 + $0x20] sm:$0xff]
        %v367 = vld [vmem:[%s2 + $0x28] sm:$0xff]
        %v368 = vld [vmem:[%s2 + $0x30] sm:$0xff]
        %v369 = vld [vmem:[%s2 + $0x38] sm:$0xff]
        %v370 = vld [vmem:[%s2 + $0x40] sm:$0xff]
        %v371 = vld [vmem:[%s2 + $0x48] sm:$0xff]
        %v372 = vld [vmem:[%s2 + $0x50] sm:$0xff]
        %v373 = vld [vmem:[%s2 + $0x58] sm:$0xff]
        %v374 = vld [vmem:[%s2 + $0x60] sm:$0xff]
        %v375 = vld [vmem:[%s2 + $0x68] sm:$0xff]
        %v376 = vld [vmem:[%s2 + $0x70] sm:$0xff]
        %v377 = vld [vmem:[%s2 + $0x78] sm:$0xff]
        %v378 = vld [vmem:[%s2 + $0x80] sm:$0xff]
        %v379 = vld [vmem:[%s2 + $0x88] sm:$0xff]
        %v380 = vld [vmem:[%s2 + $0x90] sm:$0xff]
        %v381 = vld [vmem:[%s2 + $0x98] sm:$0xff]
        %v382 = vld [vmem:[%s2 + $0xa0] sm:$0xff]
        %v383 = vld [vmem:[%s2 + $0xa8] sm:$0xff]
        %v384 = vld [vmem:[%s2 + $0xb0] sm:$0xff]
        %v385 = vld [vmem:[%s2 + $0xb8] sm:$0xff]
        %v386 = vld [vmem:[%s2 + $0xc0] sm:$0xff]
        %v387 = vld [vmem:[%s2 + $0xc8] sm:$0xff]
        %v388 = vld [vmem:[%s2 + $0xd0] sm:$0xff]
        %v389 = vld [vmem:[%s2 + $0xd8] sm:$0xff]
        %v390 = vld [vmem:[%s2 + $0xe0] sm:$0xff]
        %v391 = vld [vmem:[%s2 + $0xe8] sm:$0xff]
        %v392 = vld [vmem:[%s2 + $0xf0] sm:$0xff]
        %v393 = vld [vmem:[%s2 + $0xf8] sm:$0xff]
        %v394 = vld [vmem:[%s3] sm:$0xf]
        %v396 = vrot.slane %v329, 7
        %vm398 = vcmask 1040384
        %v399 = vsel %vm398, 0.0, %v396
        %v400 = vsel %vm398, %v396, 0.0
        %v402 = vrot.slane %v399, 7
        %403 = vrot.lane.b32.xlu0 %v402, 64
        %v404 = vpop.permute.xlu0 %403
        %vm406 = vcmask 523264
        %v407 = vsel %vm406, %v399, %v404
        %v408 = vsel %vm406, %v400, %v404
        %v410 = vrot.slane %v400, 7
        %v411 = vsel %vm398, %v402, %v410
        %412 = vrot.lane.b32.xlu0 %v411, 64
        %v413 = vpop.permute.xlu0 %412
        %v415 = vsel %vm406, %v400, %v413
        %v416 = vpack.c.bf16 %v408, %v407
        %v417 = vpack.c.bf16 %v415, %v407
        %v419 = vlaneseq
        %v420 = vshrl.u32 %v419, 7
        %v421 = vsub.s32 0, %v420
        %v422 = vrot.slane %v394, %v421
        %v423 = vlaneseq
        %v424 = vshrl.u32 %v423, 7
        %v425 = vsub.s32 1, %v424
        %v426 = vrot.slane %v394, %v425
        %v427 = vlaneseq
        %v428 = vshrl.u32 %v427, 7
        %v429 = vsub.s32 2, %v428
        %v430 = vrot.slane %v394, %v429
        %v431 = vlaneseq
        %v432 = vshrl.u32 %v431, 7
        %v433 = vsub.s32 3, %v432
        %v434 = vrot.slane %v394, %v433
        %v440 = vshrl.u32 %v416, 16
        %v442 = vshll.u32 %v416, 16
        %v444 = vrot.slane %v442, 1
        %v445 = vor.u32 %v440, %v444
        %v479 = vunpack.c.l.b16 %v330
        %v480 = vunpack.c.h.b16 %v330
        %v481 = vunpack.c.l.b16 %v331
        %v482 = vunpack.c.h.b16 %v331
        %v483 = vunpack.c.l.b16 %v332
        %v484 = vunpack.c.h.b16 %v332
        %v485 = vunpack.c.l.b16 %v333
        %v486 = vunpack.c.h.b16 %v333
        %v487 = vunpack.c.l.b16 %v334
        %v488 = vunpack.c.h.b16 %v334
        %v489 = vunpack.c.l.b16 %v335
        %v490 = vunpack.c.h.b16 %v335
        %v491 = vunpack.c.l.b16 %v336
        %v492 = vunpack.c.h.b16 %v336
        %v493 = vunpack.c.l.b16 %v337
        %v494 = vunpack.c.h.b16 %v337
        %v495 = vunpack.c.l.b16 %v338
        %v496 = vunpack.c.h.b16 %v338
        %v497 = vunpack.c.l.b16 %v339
        %v498 = vunpack.c.h.b16 %v339
        %v499 = vunpack.c.l.b16 %v340
        %v500 = vunpack.c.h.b16 %v340
        %v501 = vunpack.c.l.b16 %v341
        %v502 = vunpack.c.h.b16 %v341
        %v503 = vunpack.c.l.b16 %v342
        %v504 = vunpack.c.h.b16 %v342
        %v505 = vunpack.c.l.b16 %v343
        %v506 = vunpack.c.h.b16 %v343
        %v507 = vunpack.c.l.b16 %v344
        %v508 = vunpack.c.h.b16 %v344
        %v509 = vunpack.c.l.b16 %v345
        %v510 = vunpack.c.h.b16 %v345
        %v511 = vunpack.c.l.b16 %v346
        %v512 = vunpack.c.h.b16 %v346
        %v513 = vunpack.c.l.b16 %v347
        %v514 = vunpack.c.h.b16 %v347
        %v515 = vunpack.c.l.b16 %v348
        %v516 = vunpack.c.h.b16 %v348
        %v517 = vunpack.c.l.b16 %v349
        %v518 = vunpack.c.h.b16 %v349
        %v519 = vunpack.c.l.b16 %v350
        %v520 = vunpack.c.h.b16 %v350
        %v521 = vunpack.c.l.b16 %v351
        %v522 = vunpack.c.h.b16 %v351
        %v523 = vunpack.c.l.b16 %v352
        %v524 = vunpack.c.h.b16 %v352
        %v525 = vunpack.c.l.b16 %v353
        %v526 = vunpack.c.h.b16 %v353
        %v527 = vunpack.c.l.b16 %v354
        %v528 = vunpack.c.h.b16 %v354
        %v529 = vunpack.c.l.b16 %v355
        %v530 = vunpack.c.h.b16 %v355
        %v531 = vunpack.c.l.b16 %v356
        %v532 = vunpack.c.h.b16 %v356
        %v533 = vunpack.c.l.b16 %v357
        %v534 = vunpack.c.h.b16 %v357
        %v535 = vunpack.c.l.b16 %v358
        %v536 = vunpack.c.h.b16 %v358
        %v537 = vunpack.c.l.b16 %v359
        %v538 = vunpack.c.h.b16 %v359
        %v539 = vunpack.c.l.b16 %v360
        %v540 = vunpack.c.h.b16 %v360
        %v541 = vunpack.c.l.b16 %v361
        %v542 = vunpack.c.h.b16 %v361
        %v543 = vpack.c.b16 %v483, %v479
        %v544 = vpack.c.b16 %v484, %v480
        %v545 = vpack.c.b16 %v485, %v481
        %v546 = vpack.c.b16 %v486, %v482
        %v547 = vpack.c.b16 %v491, %v487
        %v548 = vpack.c.b16 %v492, %v488
        %v549 = vpack.c.b16 %v493, %v489
        %v550 = vpack.c.b16 %v494, %v490
        %v551 = vpack.c.b16 %v499, %v495
        %v552 = vpack.c.b16 %v500, %v496
        %v553 = vpack.c.b16 %v501, %v497
        %v554 = vpack.c.b16 %v502, %v498
        %v555 = vpack.c.b16 %v507, %v503
        %v556 = vpack.c.b16 %v508, %v504
        %v557 = vpack.c.b16 %v509, %v505
        %v558 = vpack.c.b16 %v510, %v506
        %v559 = vpack.c.b16 %v515, %v511
        %v560 = vpack.c.b16 %v516, %v512
        %v561 = vpack.c.b16 %v517, %v513
        %v562 = vpack.c.b16 %v518, %v514
        %v563 = vpack.c.b16 %v523, %v519
        %v564 = vpack.c.b16 %v524, %v520
        %v565 = vpack.c.b16 %v525, %v521
        %v566 = vpack.c.b16 %v526, %v522
        %v567 = vpack.c.b16 %v531, %v527
        %v568 = vpack.c.b16 %v532, %v528
        %v569 = vpack.c.b16 %v533, %v529
        %v570 = vpack.c.b16 %v534, %v530
        %v571 = vpack.c.b16 %v539, %v535
        %v572 = vpack.c.b16 %v540, %v536
        %v573 = vpack.c.b16 %v541, %v537
        %v574 = vpack.c.b16 %v542, %v538
        %607 = vmatprep.subr.bf16.mxu0 %v544
        %608 = vmatpush1.bf16.msra.mxu0 %v543
        %609 = vmatprep.subr.bf16.mxu0 %v548
        %610 = vmatpush1.bf16.msra.mxu0 %v547
        %611 = vmatprep.subr.bf16.mxu0 %v552
        %612 = vmatpush1.bf16.msra.mxu0 %v551
        %613 = vmatprep.subr.bf16.mxu0 %v556
        %614 = vmatpush1.bf16.msra.mxu0 %v555
        %615 = vmatprep.subr.bf16.mxu0 %v560
        %616 = vmatpush1.bf16.msra.mxu0 %v559
        %617 = vmatprep.subr.bf16.mxu0 %v564
        %618 = vmatpush1.bf16.msra.mxu0 %v563
        %619 = vmatprep.subr.bf16.mxu0 %v568
        %620 = vmatpush1.bf16.msra.mxu0 %v567
        %621 = vmatprep.subr.bf16.mxu0 %v572
        %622 = vmatpush1.bf16.msra.mxu0 %v571
        %623 = vmatprep.subr.bf16.mxu0 0
        %624 = vmatpush1.bf16.msra.mxu0 0
        %625 = vmatprep.subr.bf16.mxu0 0
        %626 = vmatpush1.bf16.msra.mxu0 0
        %627 = vmatprep.subr.bf16.mxu0 0
        %628 = vmatpush1.bf16.msra.mxu0 0
        %629 = vmatprep.subr.bf16.mxu0 0
        %630 = vmatpush1.bf16.msra.mxu0 0
        %631 = vmatprep.subr.bf16.mxu0 0
        %632 = vmatpush1.bf16.msra.mxu0 0
        %633 = vmatprep.subr.bf16.mxu0 0
        %634 = vmatpush1.bf16.msra.mxu0 0
        %635 = vmatprep.subr.bf16.mxu0 0
        %636 = vmatpush1.bf16.msra.mxu0 0
        %637 = vmatprep.subr.bf16.mxu0 0
        %638 = vmatpush1.bf16.msra.mxu0 0
        %639 = vmatprep.mubr.bf16.mxu0 0
        %640 = vmatmul.mubr.bf16.gmra.mrb[0].mxu0 %v445
        %v641 = vpop.f32.mrb[0].mxu0
        %v642 = vadd.f32 %v422, %v641
        %v643 = vpop.f32.mrb[0].mxu0
        %v644 = vadd.f32 %v426, %v643
        %v645 = vpop.f32.mrb[0].mxu0
        %v646 = vpop.f32.mrb[0].mxu0
        %647 = vdwg.mxu0
        %648 = vmatprep.subr.bf16.mxu0 %v546
        %649 = vmatpush1.bf16.msra.mxu0 %v545
        %650 = vmatprep.subr.bf16.mxu0 %v550
        %651 = vmatpush1.bf16.msra.mxu0 %v549
        %652 = vmatprep.subr.bf16.mxu0 %v554
        %653 = vmatpush1.bf16.msra.mxu0 %v553
        %654 = vmatprep.subr.bf16.mxu0 %v558
        %655 = vmatpush1.bf16.msra.mxu0 %v557
        %656 = vmatprep.subr.bf16.mxu0 %v562
        %657 = vmatpush1.bf16.msra.mxu0 %v561
        %658 = vmatprep.subr.bf16.mxu0 %v566
        %659 = vmatpush1.bf16.msra.mxu0 %v565
        %660 = vmatprep.subr.bf16.mxu0 %v570
        %661 = vmatpush1.bf16.msra.mxu0 %v569
        %662 = vmatprep.subr.bf16.mxu0 %v574
        %663 = vmatpush1.bf16.msra.mxu0 %v573
        %664 = vmatprep.subr.bf16.mxu0 0
        %665 = vmatpush1.bf16.msra.mxu0 0
        %666 = vmatprep.subr.bf16.mxu0 0
        %667 = vmatpush1.bf16.msra.mxu0 0
        %668 = vmatprep.subr.bf16.mxu0 0
        %669 = vmatpush1.bf16.msra.mxu0 0
        %670 = vmatprep.subr.bf16.mxu0 0
        %671 = vmatpush1.bf16.msra.mxu0 0
        %672 = vmatprep.subr.bf16.mxu0 0
        %673 = vmatpush1.bf16.msra.mxu0 0
        %674 = vmatprep.subr.bf16.mxu0 0
        %675 = vmatpush1.bf16.msra.mxu0 0
        %676 = vmatprep.subr.bf16.mxu0 0
        %677 = vmatpush1.bf16.msra.mxu0 0
        %678 = vmatprep.subr.bf16.mxu0 0
        %679 = vmatpush1.bf16.msra.mxu0 0
        %680 = vmatprep.mubr.bf16.mxu0 0
        %681 = vmatmul.mubr.bf16.gmra.mrb[0].mxu0 %v445
        %v682 = vpop.f32.mrb[0].mxu0
        %v683 = vadd.f32 %v430, %v682
        %v684 = vpop.f32.mrb[0].mxu0
        %v685 = vadd.f32 %v434, %v684
        %v686 = vpop.f32.mrb[0].mxu0
        %v687 = vpop.f32.mrb[0].mxu0
        %688 = vdwg.mxu0
        %v689 = vmax.f32 %v642, 0.0
        %v690 = vmax.f32 %v644, 0.0
        %v691 = vmax.f32 %v683, 0.0
        %v692 = vmax.f32 %v685, 0.0
        %v694 = vrot.slane %v417, 1
        %v728 = vunpack.c.l.b16 %v362
        %v729 = vunpack.c.h.b16 %v362
        %v730 = vunpack.c.l.b16 %v363
        %v731 = vunpack.c.h.b16 %v363
        %v732 = vunpack.c.l.b16 %v364
        %v733 = vunpack.c.h.b16 %v364
        %v734 = vunpack.c.l.b16 %v365
        %v735 = vunpack.c.h.b16 %v365
        %v736 = vunpack.c.l.b16 %v366
        %v737 = vunpack.c.h.b16 %v366
        %v738 = vunpack.c.l.b16 %v367
        %v739 = vunpack.c.h.b16 %v367
        %v740 = vunpack.c.l.b16 %v368
        %v741 = vunpack.c.h.b16 %v368
        %v742 = vunpack.c.l.b16 %v369
        %v743 = vunpack.c.h.b16 %v369
        %v744 = vunpack.c.l.b16 %v370
        %v745 = vunpack.c.h.b16 %v370
        %v746 = vunpack.c.l.b16 %v371
        %v747 = vunpack.c.h.b16 %v371
        %v748 = vunpack.c.l.b16 %v372
        %v749 = vunpack.c.h.b16 %v372
        %v750 = vunpack.c.l.b16 %v373
        %v751 = vunpack.c.h.b16 %v373
        %v752 = vunpack.c.l.b16 %v374
        %v753 = vunpack.c.h.b16 %v374
        %v754 = vunpack.c.l.b16 %v375
        %v755 = vunpack.c.h.b16 %v375
        %v756 = vunpack.c.l.b16 %v376
        %v757 = vunpack.c.h.b16 %v376
        %v758 = vunpack.c.l.b16 %v377
        %v759 = vunpack.c.h.b16 %v377
        %v760 = vunpack.c.l.b16 %v378
        %v761 = vunpack.c.h.b16 %v378
        %v762 = vunpack.c.l.b16 %v379
        %v763 = vunpack.c.h.b16 %v379
        %v764 = vunpack.c.l.b16 %v380
        %v765 = vunpack.c.h.b16 %v380
        %v766 = vunpack.c.l.b16 %v381
        %v767 = vunpack.c.h.b16 %v381
        %v768 = vunpack.c.l.b16 %v382
        %v769 = vunpack.c.h.b16 %v382
        %v770 = vunpack.c.l.b16 %v383
        %v771 = vunpack.c.h.b16 %v383
        %v772 = vunpack.c.l.b16 %v384
        %v773 = vunpack.c.h.b16 %v384
        %v774 = vunpack.c.l.b16 %v385
        %v775 = vunpack.c.h.b16 %v385
        %v776 = vunpack.c.l.b16 %v386
        %v777 = vunpack.c.h.b16 %v386
        %v778 = vunpack.c.l.b16 %v387
        %v779 = vunpack.c.h.b16 %v387
        %v780 = vunpack.c.l.b16 %v388
        %v781 = vunpack.c.h.b16 %v388
        %v782 = vunpack.c.l.b16 %v389
        %v783 = vunpack.c.h.b16 %v389
        %v784 = vunpack.c.l.b16 %v390
        %v785 = vunpack.c.h.b16 %v390
        %v786 = vunpack.c.l.b16 %v391
        %v787 = vunpack.c.h.b16 %v391
        %v788 = vunpack.c.l.b16 %v392
        %v789 = vunpack.c.h.b16 %v392
        %v790 = vunpack.c.l.b16 %v393
        %v791 = vunpack.c.h.b16 %v393
        %v792 = vpack.c.b16 %v732, %v728
        %v793 = vpack.c.b16 %v733, %v729
        %v794 = vpack.c.b16 %v734, %v730
        %v795 = vpack.c.b16 %v735, %v731
        %v796 = vpack.c.b16 %v740, %v736
        %v797 = vpack.c.b16 %v741, %v737
        %v798 = vpack.c.b16 %v742, %v738
        %v799 = vpack.c.b16 %v743, %v739
        %v800 = vpack.c.b16 %v748, %v744
        %v801 = vpack.c.b16 %v749, %v745
        %v802 = vpack.c.b16 %v750, %v746
        %v803 = vpack.c.b16 %v751, %v747
        %v804 = vpack.c.b16 %v756, %v752
        %v805 = vpack.c.b16 %v757, %v753
        %v806 = vpack.c.b16 %v758, %v754
        %v807 = vpack.c.b16 %v759, %v755
        %v808 = vpack.c.b16 %v764, %v760
        %v809 = vpack.c.b16 %v765, %v761
        %v810 = vpack.c.b16 %v766, %v762
        %v811 = vpack.c.b16 %v767, %v763
        %v812 = vpack.c.b16 %v772, %v768
        %v813 = vpack.c.b16 %v773, %v769
        %v814 = vpack.c.b16 %v774, %v770
        %v815 = vpack.c.b16 %v775, %v771
        %v816 = vpack.c.b16 %v780, %v776
        %v817 = vpack.c.b16 %v781, %v777
        %v818 = vpack.c.b16 %v782, %v778
        %v819 = vpack.c.b16 %v783, %v779
        %v820 = vpack.c.b16 %v788, %v784
        %v821 = vpack.c.b16 %v789, %v785
        %v822 = vpack.c.b16 %v790, %v786
        %v823 = vpack.c.b16 %v791, %v787
        %856 = vmatprep.subr.bf16.mxu0 %v793
        %857 = vmatpush1.bf16.msra.mxu0 %v792
        %858 = vmatprep.subr.bf16.mxu0 %v797
        %859 = vmatpush1.bf16.msra.mxu0 %v796
        %860 = vmatprep.subr.bf16.mxu0 %v801
        %861 = vmatpush1.bf16.msra.mxu0 %v800
        %862 = vmatprep.subr.bf16.mxu0 %v805
        %863 = vmatpush1.bf16.msra.mxu0 %v804
        %864 = vmatprep.subr.bf16.mxu0 %v809
        %865 = vmatpush1.bf16.msra.mxu0 %v808
        %866 = vmatprep.subr.bf16.mxu0 %v813
        %867 = vmatpush1.bf16.msra.mxu0 %v812
        %868 = vmatprep.subr.bf16.mxu0 %v817
        %869 = vmatpush1.bf16.msra.mxu0 %v816
        %870 = vmatprep.subr.bf16.mxu0 %v821
        %871 = vmatpush1.bf16.msra.mxu0 %v820
        %872 = vmatprep.subr.bf16.mxu0 0
        %873 = vmatpush1.bf16.msra.mxu0 0
        %874 = vmatprep.subr.bf16.mxu0 0
        %875 = vmatpush1.bf16.msra.mxu0 0
        %876 = vmatprep.subr.bf16.mxu0 0
        %877 = vmatpush1.bf16.msra.mxu0 0
        %878 = vmatprep.subr.bf16.mxu0 0
        %879 = vmatpush1.bf16.msra.mxu0 0
        %880 = vmatprep.subr.bf16.mxu0 0
        %881 = vmatpush1.bf16.msra.mxu0 0
        %882 = vmatprep.subr.bf16.mxu0 0
        %883 = vmatpush1.bf16.msra.mxu0 0
        %884 = vmatprep.subr.bf16.mxu0 0
        %885 = vmatpush1.bf16.msra.mxu0 0
        %886 = vmatprep.subr.bf16.mxu0 0
        %887 = vmatpush1.bf16.msra.mxu0 0
        %888 = vmatprep.mubr.bf16.mxu0 0
        %889 = vmatmul.mubr.bf16.gmra.mrb[0].mxu0 %v694
        %v890 = vpop.f32.mrb[0].mxu0
        %v891 = vadd.f32 %v422, %v890
        %v892 = vpop.f32.mrb[0].mxu0
        %v893 = vadd.f32 %v426, %v892
        %v894 = vpop.f32.mrb[0].mxu0
        %v895 = vpop.f32.mrb[0].mxu0
        %896 = vdwg.mxu0
        %897 = vmatprep.subr.bf16.mxu0 %v795
        %898 = vmatpush1.bf16.msra.mxu0 %v794
        %899 = vmatprep.subr.bf16.mxu0 %v799
        %900 = vmatpush1.bf16.msra.mxu0 %v798
        %901 = vmatprep.subr.bf16.mxu0 %v803
        %902 = vmatpush1.bf16.msra.mxu0 %v802
        %903 = vmatprep.subr.bf16.mxu0 %v807
        %904 = vmatpush1.bf16.msra.mxu0 %v806
        %905 = vmatprep.subr.bf16.mxu0 %v811
        %906 = vmatpush1.bf16.msra.mxu0 %v810
        %907 = vmatprep.subr.bf16.mxu0 %v815
        %908 = vmatpush1.bf16.msra.mxu0 %v814
        %909 = vmatprep.subr.bf16.mxu0 %v819
        %910 = vmatpush1.bf16.msra.mxu0 %v818
        %911 = vmatprep.subr.bf16.mxu0 %v823
        %912 = vmatpush1.bf16.msra.mxu0 %v822
        %913 = vmatprep.subr.bf16.mxu0 0
        %914 = vmatpush1.bf16.msra.mxu0 0
        %915 = vmatprep.subr.bf16.mxu0 0
        %916 = vmatpush1.bf16.msra.mxu0 0
        %917 = vmatprep.subr.bf16.mxu0 0
        %918 = vmatpush1.bf16.msra.mxu0 0
        %919 = vmatprep.subr.bf16.mxu0 0
        %920 = vmatpush1.bf16.msra.mxu0 0
        %921 = vmatprep.subr.bf16.mxu0 0
        %922 = vmatpush1.bf16.msra.mxu0 0
        %923 = vmatprep.subr.bf16.mxu0 0
        %924 = vmatpush1.bf16.msra.mxu0 0
        %925 = vmatprep.subr.bf16.mxu0 0
        %926 = vmatpush1.bf16.msra.mxu0 0
        %927 = vmatprep.subr.bf16.mxu0 0
        %928 = vmatpush1.bf16.msra.mxu0 0
        %929 = vmatprep.mubr.bf16.mxu0 0
        %930 = vmatmul.mubr.bf16.gmra.mrb[0].mxu0 %v694
        %v931 = vpop.f32.mrb[0].mxu0
        %v932 = vadd.f32 %v430, %v931
        %v933 = vpop.f32.mrb[0].mxu0
        %v934 = vadd.f32 %v434, %v933
        %v935 = vpop.f32.mrb[0].mxu0
        %v936 = vpop.f32.mrb[0].mxu0
        %937 = vdwg.mxu0
        %v938 = vmax.f32 %v891, 0.0
        %v939 = vmax.f32 %v893, 0.0
        %v940 = vmax.f32 %v932, 0.0
        %v941 = vmax.f32 %v934, 0.0
        %v946 = vcombine.low %v689, %v690
        %v947 = vcombine.low %v691, %v692
        %v949 = vunpack.c.l.s4 1966171168
        %v950 = vunpack.c.0.s8 %v949
        %v951 = vlaneseq
        %v952 = vshrl.u32 %v951, 7
        %v953 = vsub.s32 %v950, %v952
        %v954 = vrot.slane %v946, %v953
        %v956 = vunpack.c.l.s4 1966171168
        %v957 = vunpack.c.0.s8 %v956
        %v958 = vlaneseq
        %v959 = vshrl.u32 %v958, 7
        %v960 = vsub.s32 %v957, %v959
        %v961 = vrot.slane %v947, %v960
        %v962 = vcombine.low %v954, %v961
        %v964 = vunpack.c.l.s4 1966171168
        %v965 = vunpack.c.0.s8 %v964
        %v966 = vlaneseq
        %v967 = vshrl.u32 %v966, 7
        %v968 = vsub.s32 %v965, %v967
        %v969 = vrot.slane %v962, %v968
        %v971 = vlaneseq
        %vm972 = vcmp.ge.s32.totalorder %v971, 0
        %vm973 = vcmp.lt.s32.totalorder %v971, 512
        %vm974 = vmand %vm972, %vm973
        %975 = vst.msk [vmem:[#allocation2] ss:$8 sm:$0xf] %vm974, %v969
        %976 = vst.msk [vmem:[#allocation2] ss:$8 sm:$0x0] %vm974, %v969
        %v981 = vcombine.low %v938, %v939
        %v982 = vcombine.low %v940, %v941
        %v984 = vunpack.c.l.s4 1966171168
        %v985 = vunpack.c.0.s8 %v984
        %v986 = vlaneseq
        %v987 = vshrl.u32 %v986, 7
        %v988 = vsub.s32 %v985, %v987
        %v989 = vrot.slane %v981, %v988
        %v991 = vunpack.c.l.s4 1966171168
        %v992 = vunpack.c.0.s8 %v991
        %v993 = vlaneseq
        %v994 = vshrl.u32 %v993, 7
        %v995 = vsub.s32 %v992, %v994
        %v996 = vrot.slane %v982, %v995
        %v997 = vcombine.low %v989, %v996
        %v999 = vunpack.c.l.s4 1966171168
        %v1000 = vunpack.c.0.s8 %v999
        %v1001 = vlaneseq
        %v1002 = vshrl.u32 %v1001, 7
        %v1003 = vsub.s32 %v1000, %v1002
        %v1004 = vrot.slane %v997, %v1003
        %s1006 = scalar_lea.vmem [#allocation2], 1
        %1007 = vst.msk [vmem:[%s1006] ss:$8 sm:$0xf] %vm974, %v1004
        %1008 = vst.msk [vmem:[%s1006] ss:$8 sm:$0x0] %vm974, %v1004
        %v1009 = vcombine.high %v954, %v961
        %v1011 = vunpack.c.l.s4 1966171168
        %v1012 = vunpack.c.0.s8 %v1011
        %v1013 = vlaneseq
        %v1014 = vshrl.u32 %v1013, 7
        %v1015 = vsub.s32 %v1012, %v1014
        %v1016 = vrot.slane %v1009, %v1015
        %s1018 = scalar_lea.vmem [#allocation2], 2
        %1019 = vst.msk [vmem:[%s1018] ss:$8 sm:$0xf] %vm974, %v1016
        %1020 = vst.msk [vmem:[%s1018] ss:$8 sm:$0x0] %vm974, %v1016
        %v1021 = vcombine.high %v989, %v996
        %v1023 = vunpack.c.l.s4 1966171168
        %v1024 = vunpack.c.0.s8 %v1023
        %v1025 = vlaneseq
        %v1026 = vshrl.u32 %v1025, 7
        %v1027 = vsub.s32 %v1024, %v1026
        %v1028 = vrot.slane %v1021, %v1027
        %s1030 = scalar_lea.vmem [#allocation2], 3
        %1031 = vst.msk [vmem:[%s1030] ss:$8 sm:$0xf] %vm974, %v1028
        %1032 = vst.msk [vmem:[%s1030] ss:$8 sm:$0x0] %vm974, %v1028
        %v1033 = vcombine.high %v969, %v969
        %s1035 = scalar_lea.vmem [#allocation2], 4
        %1036 = vst.msk [vmem:[%s1035] ss:$8 sm:$0xf] %vm974, %v1033
        %1037 = vst.msk [vmem:[%s1035] ss:$8 sm:$0x0] %vm974, %v1033
        %v1038 = vcombine.high %v1004, %v1004
        %s1040 = scalar_lea.vmem [#allocation2], 5
        %1041 = vst.msk [vmem:[%s1040] ss:$8 sm:$0xf] %vm974, %v1038
        %1042 = vst.msk [vmem:[%s1040] ss:$8 sm:$0x0] %vm974, %v1038
        %v1043 = vcombine.high %v1016, %v1016
        %s1045 = scalar_lea.vmem [#allocation2], 6
        %1046 = vst.msk [vmem:[%s1045] ss:$8 sm:$0xf] %vm974, %v1043
        %1047 = vst.msk [vmem:[%s1045] ss:$8 sm:$0x0] %vm974, %v1043
        %v1048 = vcombine.high %v1028, %v1028
        %s1050 = scalar_lea.vmem [#allocation2], 7
        %1051 = vst.msk [vmem:[%s1050] ss:$8 sm:$0xf] %vm974, %v1048
        %1052 = vst.msk [vmem:[%s1050] ss:$8 sm:$0x0] %vm974, %v1048
        %v1053 = vcombine.high %v689, %v690
        %v1054 = vcombine.high %v691, %v692
        %v1056 = vunpack.c.l.s4 1966171168
        %v1057 = vunpack.c.0.s8 %v1056
        %v1058 = vlaneseq
        %v1059 = vshrl.u32 %v1058, 7
        %v1060 = vsub.s32 %v1057, %v1059
        %v1061 = vrot.slane %v1053, %v1060
        %v1063 = vunpack.c.l.s4 1966171168
        %v1064 = vunpack.c.0.s8 %v1063
        %v1065 = vlaneseq
        %v1066 = vshrl.u32 %v1065, 7
        %v1067 = vsub.s32 %v1064, %v1066
        %v1068 = vrot.slane %v1054, %v1067
        %v1069 = vcombine.low %v1061, %v1068
        %v1071 = vunpack.c.l.s4 1966171168
        %v1072 = vunpack.c.0.s8 %v1071
        %v1073 = vlaneseq
        %v1074 = vshrl.u32 %v1073, 7
        %v1075 = vsub.s32 %v1072, %v1074
        %v1076 = vrot.slane %v1069, %v1075
        %s1078 = scalar_lea.vmem [#allocation2], 32
        %1079 = vst.msk [vmem:[%s1078] ss:$8 sm:$0xf] %vm974, %v1076
        %1080 = vst.msk [vmem:[%s1078] ss:$8 sm:$0x0] %vm974, %v1076
        %v1081 = vcombine.high %v938, %v939
        %v1082 = vcombine.high %v940, %v941
        %v1084 = vunpack.c.l.s4 1966171168
        %v1085 = vunpack.c.0.s8 %v1084
        %v1086 = vlaneseq
        %v1087 = vshrl.u32 %v1086, 7
        %v1088 = vsub.s32 %v1085, %v1087
        %v1089 = vrot.slane %v1081, %v1088
        %v1091 = vunpack.c.l.s4 1966171168
        %v1092 = vunpack.c.0.s8 %v1091
        %v1093 = vlaneseq
        %v1094 = vshrl.u32 %v1093, 7
        %v1095 = vsub.s32 %v1092, %v1094
        %v1096 = vrot.slane %v1082, %v1095
        %v1097 = vcombine.low %v1089, %v1096
        %v1099 = vunpack.c.l.s4 1966171168
        %v1100 = vunpack.c.0.s8 %v1099
        %v1101 = vlaneseq
        %v1102 = vshrl.u32 %v1101, 7
        %v1103 = vsub.s32 %v1100, %v1102
        %v1104 = vrot.slane %v1097, %v1103
        %s1106 = scalar_lea.vmem [#allocation2], 33
        %1107 = vst.msk [vmem:[%s1106] ss:$8 sm:$0xf] %vm974, %v1104
        %1108 = vst.msk [vmem:[%s1106] ss:$8 sm:$0x0] %vm974, %v1104
        %v1109 = vcombine.high %v1061, %v1068
        %v1111 = vunpack.c.l.s4 1966171168
        %v1112 = vunpack.c.0.s8 %v1111
        %v1113 = vlaneseq
        %v1114 = vshrl.u32 %v1113, 7
        %v1115 = vsub.s32 %v1112, %v1114
        %v1116 = vrot.slane %v1109, %v1115
        %s1118 = scalar_lea.vmem [#allocation2], 34
        %1119 = vst.msk [vmem:[%s1118] ss:$8 sm:$0xf] %vm974, %v1116
        %1120 = vst.msk [vmem:[%s1118] ss:$8 sm:$0x0] %vm974, %v1116
        %v1121 = vcombine.high %v1089, %v1096
        %v1123 = vunpack.c.l.s4 1966171168
        %v1124 = vunpack.c.0.s8 %v1123
        %v1125 = vlaneseq
        %v1126 = vshrl.u32 %v1125, 7
        %v1127 = vsub.s32 %v1124, %v1126
        %v1128 = vrot.slane %v1121, %v1127
        %s1130 = scalar_lea.vmem [#allocation2], 35
        %1131 = vst.msk [vmem:[%s1130] ss:$8 sm:$0xf] %vm974, %v1128
        %1132 = vst.msk [vmem:[%s1130] ss:$8 sm:$0x0] %vm974, %v1128
        %v1133 = vcombine.high %v1076, %v1076
        %s1135 = scalar_lea.vmem [#allocation2], 36
        %1136 = vst.msk [vmem:[%s1135] ss:$8 sm:$0xf] %vm974, %v1133
        %1137 = vst.msk [vmem:[%s1135] ss:$8 sm:$0x0] %vm974, %v1133
        %v1138 = vcombine.high %v1104, %v1104
        %s1140 = scalar_lea.vmem [#allocation2], 37
        %1141 = vst.msk [vmem:[%s1140] ss:$8 sm:$0xf] %vm974, %v1138
        %1142 = vst.msk [vmem:[%s1140] ss:$8 sm:$0x0] %vm974, %v1138
        %v1143 = vcombine.high %v1116, %v1116
        %s1145 = scalar_lea.vmem [#allocation2], 38
        %1146 = vst.msk [vmem:[%s1145] ss:$8 sm:$0xf] %vm974, %v1143
        %1147 = vst.msk [vmem:[%s1145] ss:$8 sm:$0x0] %vm974, %v1143
        %v1148 = vcombine.high %v1128, %v1128
        %s1150 = scalar_lea.vmem [#allocation2], 39
        %1151 = vst.msk [vmem:[%s1150] ss:$8 sm:$0xf] %vm974, %v1148
        %1152 = vst.msk [vmem:[%s1150] ss:$8 sm:$0x0] %vm974, %v1148
        %v1153 = vld [vmem:[#allocation2] sm:$0xff]
        %v1154 = vld [vmem:[#allocation2 + $0x8] sm:$0xff]
        %v1155 = vld [vmem:[#allocation2 + $0x10] sm:$0xff]
        %v1156 = vld [vmem:[#allocation2 + $0x18] sm:$0xff]
        %v1157 = vld [vmem:[#allocation2 + $0x20] sm:$0xff]
        %v1158 = vld [vmem:[#allocation2 + $0x28] sm:$0xff]
        %v1159 = vld [vmem:[#allocation2 + $0x30] sm:$0xff]
        %v1160 = vld [vmem:[#allocation2 + $0x38] sm:$0xff]
        %v1161 = vld [vmem:[%s4] sm:$0xff]
        %v1162 = vld [vmem:[%s4 + $0x8] sm:$0xff]
        %v1163 = vld [vmem:[%s4 + $0x10] sm:$0xff]
        %v1164 = vld [vmem:[%s4 + $0x18] sm:$0xff]
        %v1165 = vld [vmem:[%s4 + $0x20] sm:$0xff]
        %v1166 = vld [vmem:[%s4 + $0x28] sm:$0xff]
        %v1167 = vld [vmem:[%s4 + $0x30] sm:$0xff]
        %v1168 = vld [vmem:[%s4 + $0x38] sm:$0xff]
        %v1169 = vld [vmem:[%s4 + $0x40] sm:$0xff]
        %v1170 = vld [vmem:[%s4 + $0x48] sm:$0xff]
        %v1171 = vld [vmem:[%s4 + $0x50] sm:$0xff]
        %v1172 = vld [vmem:[%s4 + $0x58] sm:$0xff]
        %v1173 = vld [vmem:[%s4 + $0x60] sm:$0xff]
        %v1174 = vld [vmem:[%s4 + $0x68] sm:$0xff]
        %v1175 = vld [vmem:[%s4 + $0x70] sm:$0xff]
        %v1176 = vld [vmem:[%s4 + $0x78] sm:$0xff]
        %v1177 = vld [vmem:[%s4 + $0x80] sm:$0xff]
        %v1178 = vld [vmem:[%s4 + $0x88] sm:$0xff]
        %v1179 = vld [vmem:[%s4 + $0x90] sm:$0xff]
        %v1180 = vld [vmem:[%s4 + $0x98] sm:$0xff]
        %v1181 = vld [vmem:[%s4 + $0xa0] sm:$0xff]
        %v1182 = vld [vmem:[%s4 + $0xa8] sm:$0xff]
        %v1183 = vld [vmem:[%s4 + $0xb0] sm:$0xff]
        %v1184 = vld [vmem:[%s4 + $0xb8] sm:$0xff]
        %v1185 = vld [vmem:[%s4 + $0xc0] sm:$0xff]
        %v1186 = vld [vmem:[%s4 + $0xc8] sm:$0xff]
        %v1187 = vld [vmem:[%s4 + $0xd0] sm:$0xff]
        %v1188 = vld [vmem:[%s4 + $0xd8] sm:$0xff]
        %v1189 = vld [vmem:[%s4 + $0xe0] sm:$0xff]
        %v1190 = vld [vmem:[%s4 + $0xe8] sm:$0xff]
        %v1191 = vld [vmem:[%s4 + $0xf0] sm:$0xff]
        %v1192 = vld [vmem:[%s4 + $0xf8] sm:$0xff]
        %v1193 = vld [vmem:[%s4 + $0x100] sm:$0xff]
        %v1194 = vld [vmem:[%s4 + $0x108] sm:$0xff]
        %v1195 = vld [vmem:[%s4 + $0x110] sm:$0xff]
        %v1196 = vld [vmem:[%s4 + $0x118] sm:$0xff]
        %v1197 = vld [vmem:[%s4 + $0x120] sm:$0xff]
        %v1198 = vld [vmem:[%s4 + $0x128] sm:$0xff]
        %v1199 = vld [vmem:[%s4 + $0x130] sm:$0xff]
        %v1200 = vld [vmem:[%s4 + $0x138] sm:$0xff]
        %v1201 = vld [vmem:[%s4 + $0x140] sm:$0xff]
        %v1202 = vld [vmem:[%s4 + $0x148] sm:$0xff]
        %v1203 = vld [vmem:[%s4 + $0x150] sm:$0xff]
        %v1204 = vld [vmem:[%s4 + $0x158] sm:$0xff]
        %v1205 = vld [vmem:[%s4 + $0x160] sm:$0xff]
        %v1206 = vld [vmem:[%s4 + $0x168] sm:$0xff]
        %v1207 = vld [vmem:[%s4 + $0x170] sm:$0xff]
        %v1208 = vld [vmem:[%s4 + $0x178] sm:$0xff]
        %v1209 = vld [vmem:[%s4 + $0x180] sm:$0xff]
        %v1210 = vld [vmem:[%s4 + $0x188] sm:$0xff]
        %v1211 = vld [vmem:[%s4 + $0x190] sm:$0xff]
        %v1212 = vld [vmem:[%s4 + $0x198] sm:$0xff]
        %v1213 = vld [vmem:[%s4 + $0x1a0] sm:$0xff]
        %v1214 = vld [vmem:[%s4 + $0x1a8] sm:$0xff]
        %v1215 = vld [vmem:[%s4 + $0x1b0] sm:$0xff]
        %v1216 = vld [vmem:[%s4 + $0x1b8] sm:$0xff]
        %v1217 = vld [vmem:[%s4 + $0x1c0] sm:$0xff]
        %v1218 = vld [vmem:[%s4 + $0x1c8] sm:$0xff]
        %v1219 = vld [vmem:[%s4 + $0x1d0] sm:$0xff]
        %v1220 = vld [vmem:[%s4 + $0x1d8] sm:$0xff]
        %v1221 = vld [vmem:[%s4 + $0x1e0] sm:$0xff]
        %v1222 = vld [vmem:[%s4 + $0x1e8] sm:$0xff]
        %v1223 = vld [vmem:[%s4 + $0x1f0] sm:$0xff]
        %v1224 = vld [vmem:[%s4 + $0x1f8] sm:$0xff]
        %v1225 = vld [vmem:[%s4 + $0x200] sm:$0xff]
        %v1226 = vld [vmem:[%s4 + $0x208] sm:$0xff]
        %v1227 = vld [vmem:[%s4 + $0x210] sm:$0xff]
        %v1228 = vld [vmem:[%s4 + $0x218] sm:$0xff]
        %v1229 = vld [vmem:[%s4 + $0x220] sm:$0xff]
        %v1230 = vld [vmem:[%s4 + $0x228] sm:$0xff]
        %v1231 = vld [vmem:[%s4 + $0x230] sm:$0xff]
        %v1232 = vld [vmem:[%s4 + $0x238] sm:$0xff]
        %v1233 = vld [vmem:[%s4 + $0x240] sm:$0xff]
        %v1234 = vld [vmem:[%s4 + $0x248] sm:$0xff]
        %v1235 = vld [vmem:[%s4 + $0x250] sm:$0xff]
        %v1236 = vld [vmem:[%s4 + $0x258] sm:$0xff]
        %v1237 = vld [vmem:[%s4 + $0x260] sm:$0xff]
        %v1238 = vld [vmem:[%s4 + $0x268] sm:$0xff]
        %v1239 = vld [vmem:[%s4 + $0x270] sm:$0xff]
        %v1240 = vld [vmem:[%s4 + $0x278] sm:$0xff]
        %v1241 = vld [vmem:[%s4 + $0x280] sm:$0xff]
        %v1242 = vld [vmem:[%s4 + $0x288] sm:$0xff]
        %v1243 = vld [vmem:[%s4 + $0x290] sm:$0xff]
        %v1244 = vld [vmem:[%s4 + $0x298] sm:$0xff]
        %v1245 = vld [vmem:[%s4 + $0x2a0] sm:$0xff]
        %v1246 = vld [vmem:[%s4 + $0x2a8] sm:$0xff]
        %v1247 = vld [vmem:[%s4 + $0x2b0] sm:$0xff]
        %v1248 = vld [vmem:[%s4 + $0x2b8] sm:$0xff]
        %v1249 = vld [vmem:[%s4 + $0x2c0] sm:$0xff]
        %v1250 = vld [vmem:[%s4 + $0x2c8] sm:$0xff]
        %v1251 = vld [vmem:[%s4 + $0x2d0] sm:$0xff]
        %v1252 = vld [vmem:[%s4 + $0x2d8] sm:$0xff]
        %v1253 = vld [vmem:[%s4 + $0x2e0] sm:$0xff]
        %v1254 = vld [vmem:[%s4 + $0x2e8] sm:$0xff]
        %v1255 = vld [vmem:[%s4 + $0x2f0] sm:$0xff]
        %v1256 = vld [vmem:[%s4 + $0x2f8] sm:$0xff]
        %v1257 = vld [vmem:[%s4 + $0x300] sm:$0xff]
        %v1258 = vld [vmem:[%s4 + $0x308] sm:$0xff]
        %v1259 = vld [vmem:[%s4 + $0x310] sm:$0xff]
        %v1260 = vld [vmem:[%s4 + $0x318] sm:$0xff]
        %v1261 = vld [vmem:[%s4 + $0x320] sm:$0xff]
        %v1262 = vld [vmem:[%s4 + $0x328] sm:$0xff]
        %v1263 = vld [vmem:[%s4 + $0x330] sm:$0xff]
        %v1264 = vld [vmem:[%s4 + $0x338] sm:$0xff]
        %v1265 = vld [vmem:[%s4 + $0x340] sm:$0xff]
        %v1266 = vld [vmem:[%s4 + $0x348] sm:$0xff]
        %v1267 = vld [vmem:[%s4 + $0x350] sm:$0xff]
        %v1268 = vld [vmem:[%s4 + $0x358] sm:$0xff]
        %v1269 = vld [vmem:[%s4 + $0x360] sm:$0xff]
        %v1270 = vld [vmem:[%s4 + $0x368] sm:$0xff]
        %v1271 = vld [vmem:[%s4 + $0x370] sm:$0xff]
        %v1272 = vld [vmem:[%s4 + $0x378] sm:$0xff]
        %v1273 = vld [vmem:[%s4 + $0x380] sm:$0xff]
        %v1274 = vld [vmem:[%s4 + $0x388] sm:$0xff]
        %v1275 = vld [vmem:[%s4 + $0x390] sm:$0xff]
        %v1276 = vld [vmem:[%s4 + $0x398] sm:$0xff]
        %v1277 = vld [vmem:[%s4 + $0x3a0] sm:$0xff]
        %v1278 = vld [vmem:[%s4 + $0x3a8] sm:$0xff]
        %v1279 = vld [vmem:[%s4 + $0x3b0] sm:$0xff]
        %v1280 = vld [vmem:[%s4 + $0x3b8] sm:$0xff]
        %v1281 = vld [vmem:[%s4 + $0x3c0] sm:$0xff]
        %v1282 = vld [vmem:[%s4 + $0x3c8] sm:$0xff]
        %v1283 = vld [vmem:[%s4 + $0x3d0] sm:$0xff]
        %v1284 = vld [vmem:[%s4 + $0x3d8] sm:$0xff]
        %v1285 = vld [vmem:[%s4 + $0x3e0] sm:$0xff]
        %v1286 = vld [vmem:[%s4 + $0x3e8] sm:$0xff]
        %v1287 = vld [vmem:[%s4 + $0x3f0] sm:$0xff]
        %v1288 = vld [vmem:[%s4 + $0x3f8] sm:$0xff]
        %v1289 = vld [vmem:[%s5] sm:$0xff]
        %v1290 = vld [vmem:[%s5 + $0x8] sm:$0xff]
        %v1291 = vld [vmem:[%s5 + $0x10] sm:$0xff]
        %v1292 = vld [vmem:[%s5 + $0x18] sm:$0xff]
        %v1293 = vld [vmem:[%s5 + $0x20] sm:$0xff]
        %v1294 = vld [vmem:[%s5 + $0x28] sm:$0xff]
        %v1295 = vld [vmem:[%s5 + $0x30] sm:$0xff]
        %v1296 = vld [vmem:[%s5 + $0x38] sm:$0xff]
        %v1297 = vld [vmem:[%s5 + $0x40] sm:$0xff]
        %v1298 = vld [vmem:[%s5 + $0x48] sm:$0xff]
        %v1299 = vld [vmem:[%s5 + $0x50] sm:$0xff]
        %v1300 = vld [vmem:[%s5 + $0x58] sm:$0xff]
        %v1301 = vld [vmem:[%s5 + $0x60] sm:$0xff]
        %v1302 = vld [vmem:[%s5 + $0x68] sm:$0xff]
        %v1303 = vld [vmem:[%s5 + $0x70] sm:$0xff]
        %v1304 = vld [vmem:[%s5 + $0x78] sm:$0xff]
        %v1305 = vld [vmem:[%s5 + $0x80] sm:$0xff]
        %v1306 = vld [vmem:[%s5 + $0x88] sm:$0xff]
        %v1307 = vld [vmem:[%s5 + $0x90] sm:$0xff]
        %v1308 = vld [vmem:[%s5 + $0x98] sm:$0xff]
        %v1309 = vld [vmem:[%s5 + $0xa0] sm:$0xff]
        %v1310 = vld [vmem:[%s5 + $0xa8] sm:$0xff]
        %v1311 = vld [vmem:[%s5 + $0xb0] sm:$0xff]
        %v1312 = vld [vmem:[%s5 + $0xb8] sm:$0xff]
        %v1313 = vld [vmem:[%s5 + $0xc0] sm:$0xff]
        %v1314 = vld [vmem:[%s5 + $0xc8] sm:$0xff]
        %v1315 = vld [vmem:[%s5 + $0xd0] sm:$0xff]
        %v1316 = vld [vmem:[%s5 + $0xd8] sm:$0xff]
        %v1317 = vld [vmem:[%s5 + $0xe0] sm:$0xff]
        %v1318 = vld [vmem:[%s5 + $0xe8] sm:$0xff]
        %v1319 = vld [vmem:[%s5 + $0xf0] sm:$0xff]
        %v1320 = vld [vmem:[%s5 + $0xf8] sm:$0xff]
        %v1321 = vld [vmem:[%s5 + $0x100] sm:$0xff]
        %v1322 = vld [vmem:[%s5 + $0x108] sm:$0xff]
        %v1323 = vld [vmem:[%s5 + $0x110] sm:$0xff]
        %v1324 = vld [vmem:[%s5 + $0x118] sm:$0xff]
        %v1325 = vld [vmem:[%s5 + $0x120] sm:$0xff]
        %v1326 = vld [vmem:[%s5 + $0x128] sm:$0xff]
        %v1327 = vld [vmem:[%s5 + $0x130] sm:$0xff]
        %v1328 = vld [vmem:[%s5 + $0x138] sm:$0xff]
        %v1329 = vld [vmem:[%s5 + $0x140] sm:$0xff]
        %v1330 = vld [vmem:[%s5 + $0x148] sm:$0xff]
        %v1331 = vld [vmem:[%s5 + $0x150] sm:$0xff]
        %v1332 = vld [vmem:[%s5 + $0x158] sm:$0xff]
        %v1333 = vld [vmem:[%s5 + $0x160] sm:$0xff]
        %v1334 = vld [vmem:[%s5 + $0x168] sm:$0xff]
        %v1335 = vld [vmem:[%s5 + $0x170] sm:$0xff]
        %v1336 = vld [vmem:[%s5 + $0x178] sm:$0xff]
        %v1337 = vld [vmem:[%s5 + $0x180] sm:$0xff]
        %v1338 = vld [vmem:[%s5 + $0x188] sm:$0xff]
        %v1339 = vld [vmem:[%s5 + $0x190] sm:$0xff]
        %v1340 = vld [vmem:[%s5 + $0x198] sm:$0xff]
        %v1341 = vld [vmem:[%s5 + $0x1a0] sm:$0xff]
        %v1342 = vld [vmem:[%s5 + $0x1a8] sm:$0xff]
        %v1343 = vld [vmem:[%s5 + $0x1b0] sm:$0xff]
        %v1344 = vld [vmem:[%s5 + $0x1b8] sm:$0xff]
        %v1345 = vld [vmem:[%s5 + $0x1c0] sm:$0xff]
        %v1346 = vld [vmem:[%s5 + $0x1c8] sm:$0xff]
        %v1347 = vld [vmem:[%s5 + $0x1d0] sm:$0xff]
        %v1348 = vld [vmem:[%s5 + $0x1d8] sm:$0xff]
        %v1349 = vld [vmem:[%s5 + $0x1e0] sm:$0xff]
        %v1350 = vld [vmem:[%s5 + $0x1e8] sm:$0xff]
        %v1351 = vld [vmem:[%s5 + $0x1f0] sm:$0xff]
        %v1352 = vld [vmem:[%s5 + $0x1f8] sm:$0xff]
        %v1353 = vld [vmem:[%s5 + $0x200] sm:$0xff]
        %v1354 = vld [vmem:[%s5 + $0x208] sm:$0xff]
        %v1355 = vld [vmem:[%s5 + $0x210] sm:$0xff]
        %v1356 = vld [vmem:[%s5 + $0x218] sm:$0xff]
        %v1357 = vld [vmem:[%s5 + $0x220] sm:$0xff]
        %v1358 = vld [vmem:[%s5 + $0x228] sm:$0xff]
        %v1359 = vld [vmem:[%s5 + $0x230] sm:$0xff]
        %v1360 = vld [vmem:[%s5 + $0x238] sm:$0xff]
        %v1361 = vld [vmem:[%s5 + $0x240] sm:$0xff]
        %v1362 = vld [vmem:[%s5 + $0x248] sm:$0xff]
        %v1363 = vld [vmem:[%s5 + $0x250] sm:$0xff]
        %v1364 = vld [vmem:[%s5 + $0x258] sm:$0xff]
        %v1365 = vld [vmem:[%s5 + $0x260] sm:$0xff]
        %v1366 = vld [vmem:[%s5 + $0x268] sm:$0xff]
        %v1367 = vld [vmem:[%s5 + $0x270] sm:$0xff]
        %v1368 = vld [vmem:[%s5 + $0x278] sm:$0xff]
        %v1369 = vld [vmem:[%s5 + $0x280] sm:$0xff]
        %v1370 = vld [vmem:[%s5 + $0x288] sm:$0xff]
        %v1371 = vld [vmem:[%s5 + $0x290] sm:$0xff]
        %v1372 = vld [vmem:[%s5 + $0x298] sm:$0xff]
        %v1373 = vld [vmem:[%s5 + $0x2a0] sm:$0xff]
        %v1374 = vld [vmem:[%s5 + $0x2a8] sm:$0xff]
        %v1375 = vld [vmem:[%s5 + $0x2b0] sm:$0xff]
        %v1376 = vld [vmem:[%s5 + $0x2b8] sm:$0xff]
        %v1377 = vld [vmem:[%s5 + $0x2c0] sm:$0xff]
        %v1378 = vld [vmem:[%s5 + $0x2c8] sm:$0xff]
        %v1379 = vld [vmem:[%s5 + $0x2d0] sm:$0xff]
        %v1380 = vld [vmem:[%s5 + $0x2d8] sm:$0xff]
        %v1381 = vld [vmem:[%s5 + $0x2e0] sm:$0xff]
        %v1382 = vld [vmem:[%s5 + $0x2e8] sm:$0xff]
        %v1383 = vld [vmem:[%s5 + $0x2f0] sm:$0xff]
        %v1384 = vld [vmem:[%s5 + $0x2f8] sm:$0xff]
        %v1385 = vld [vmem:[%s5 + $0x300] sm:$0xff]
        %v1386 = vld [vmem:[%s5 + $0x308] sm:$0xff]
        %v1387 = vld [vmem:[%s5 + $0x310] sm:$0xff]
        %v1388 = vld [vmem:[%s5 + $0x318] sm:$0xff]
        %v1389 = vld [vmem:[%s5 + $0x320] sm:$0xff]
        %v1390 = vld [vmem:[%s5 + $0x328] sm:$0xff]
        %v1391 = vld [vmem:[%s5 + $0x330] sm:$0xff]
        %v1392 = vld [vmem:[%s5 + $0x338] sm:$0xff]
        %v1393 = vld [vmem:[%s5 + $0x340] sm:$0xff]
        %v1394 = vld [vmem:[%s5 + $0x348] sm:$0xff]
        %v1395 = vld [vmem:[%s5 + $0x350] sm:$0xff]
        %v1396 = vld [vmem:[%s5 + $0x358] sm:$0xff]
        %v1397 = vld [vmem:[%s5 + $0x360] sm:$0xff]
        %v1398 = vld [vmem:[%s5 + $0x368] sm:$0xff]
        %v1399 = vld [vmem:[%s5 + $0x370] sm:$0xff]
        %v1400 = vld [vmem:[%s5 + $0x378] sm:$0xff]
        %v1401 = vld [vmem:[%s5 + $0x380] sm:$0xff]
        %v1402 = vld [vmem:[%s5 + $0x388] sm:$0xff]
        %v1403 = vld [vmem:[%s5 + $0x390] sm:$0xff]
        %v1404 = vld [vmem:[%s5 + $0x398] sm:$0xff]
        %v1405 = vld [vmem:[%s5 + $0x3a0] sm:$0xff]
        %v1406 = vld [vmem:[%s5 + $0x3a8] sm:$0xff]
        %v1407 = vld [vmem:[%s5 + $0x3b0] sm:$0xff]
        %v1408 = vld [vmem:[%s5 + $0x3b8] sm:$0xff]
        %v1409 = vld [vmem:[%s5 + $0x3c0] sm:$0xff]
        %v1410 = vld [vmem:[%s5 + $0x3c8] sm:$0xff]
        %v1411 = vld [vmem:[%s5 + $0x3d0] sm:$0xff]
        %v1412 = vld [vmem:[%s5 + $0x3d8] sm:$0xff]
        %v1413 = vld [vmem:[%s5 + $0x3e0] sm:$0xff]
        %v1414 = vld [vmem:[%s5 + $0x3e8] sm:$0xff]
        %v1415 = vld [vmem:[%s5 + $0x3f0] sm:$0xff]
        %v1416 = vld [vmem:[%s5 + $0x3f8] sm:$0xff]
        %v1417 = vld [vmem:[%s6] sm:$0x3]
        %v1426 = vrot.slane %v1153, 7
        %v1427 = vrot.slane %v1154, 7
        %v1428 = vrot.slane %v1155, 7
        %v1429 = vrot.slane %v1156, 7
        %v1430 = vrot.slane %v1157, 7
        %v1431 = vsel %vm398, %v1426, %v1430
        %v1432 = vrot.slane %v1158, 7
        %v1433 = vsel %vm398, %v1427, %v1432
        %v1434 = vrot.slane %v1159, 7
        %v1435 = vsel %vm398, %v1428, %v1434
        %v1436 = vrot.slane %v1160, 7
        %v1437 = vsel %vm398, %v1429, %v1436
        %v1450 = vsel %vm398, 0.0, %v1426
        %v1451 = vsel %vm398, 0.0, %v1427
        %v1452 = vsel %vm398, 0.0, %v1428
        %v1453 = vsel %vm398, 0.0, %v1429
        %v1454 = vsel %vm398, %v1430, 0.0
        %v1455 = vsel %vm398, %v1432, 0.0
        %v1456 = vsel %vm398, %v1434, 0.0
        %v1457 = vsel %vm398, %v1436, 0.0
        %v1462 = vrot.slane %v1450, 7
        %v1463 = vrot.slane %v1451, 7
        %v1464 = vrot.slane %v1452, 7
        %v1465 = vrot.slane %v1453, 7
        %v1466 = vrot.slane %v1431, 7
        %v1467 = vsel %vm398, %v1462, %v1466
        %v1468 = vrot.slane %v1433, 7
        %v1469 = vsel %vm398, %v1463, %v1468
        %v1470 = vrot.slane %v1435, 7
        %v1471 = vsel %vm398, %v1464, %v1470
        %v1472 = vrot.slane %v1437, 7
        %v1473 = vsel %vm398, %v1465, %v1472
        %v1490 = vrot.slane %v1454, 7
        %v1491 = vsel %vm398, %v1466, %v1490
        %v1492 = vrot.slane %v1455, 7
        %v1493 = vsel %vm398, %v1468, %v1492
        %v1494 = vrot.slane %v1456, 7
        %v1495 = vsel %vm398, %v1470, %v1494
        %v1496 = vrot.slane %v1457, 7
        %v1497 = vsel %vm398, %v1472, %v1496
        %v1502 = vpack.c.bf16 %v1431, %v1450
        %v1503 = vpack.c.bf16 %v1433, %v1451
        %v1504 = vpack.c.bf16 %v1435, %v1452
        %v1505 = vpack.c.bf16 %v1437, %v1453
        %v1506 = vpack.c.bf16 %v1467, %v1462
        %v1507 = vpack.c.bf16 %v1469, %v1463
        %v1508 = vpack.c.bf16 %v1471, %v1464
        %v1509 = vpack.c.bf16 %v1473, %v1465
        %v1510 = vpack.c.bf16 %v1454, %v1454
        %v1511 = vpack.c.bf16 %v1455, %v1455
        %v1512 = vpack.c.bf16 %v1456, %v1456
        %v1513 = vpack.c.bf16 %v1457, %v1457
        %v1514 = vpack.c.bf16 %v1466, %v1466
        %v1515 = vpack.c.bf16 %v1468, %v1468
        %v1516 = vpack.c.bf16 %v1470, %v1470
        %v1517 = vpack.c.bf16 %v1472, %v1472
        %v1518 = vpack.c.bf16 %v1491, %v1491
        %v1519 = vpack.c.bf16 %v1493, %v1493
        %v1520 = vpack.c.bf16 %v1495, %v1495
        %v1521 = vpack.c.bf16 %v1497, %v1497
        %v1523 = vlaneseq
        %v1524 = vshrl.u32 %v1523, 7
        %v1525 = vsub.s32 0, %v1524
        %v1526 = vrot.slane %v1417, %v1525
        %v1527 = vlaneseq
        %v1528 = vshrl.u32 %v1527, 7
        %v1529 = vsub.s32 1, %v1528
        %v1530 = vrot.slane %v1417, %v1529
        %vm1533 = vsmask.f32 7424
        %v1535 = vshrl.u32 %v1502, 16
        %v1537 = vshll.u32 %v1502, 16
        %v1539 = vrot.slane %v1537, 1
        %v1540 = vor.u32 %v1535, %v1539
        %v1542 = vshll.u32 %v1510, 16
        %v1544 = vrot.slane %v1542, 1
        %v1545 = vsel %vm1533, %v1540, %v1544
        %v1547 = vshrl.u32 %v1503, 16
        %v1549 = vshll.u32 %v1503, 16
        %v1551 = vrot.slane %v1549, 1
        %v1552 = vor.u32 %v1547, %v1551
        %v1554 = vshll.u32 %v1511, 16
        %v1556 = vrot.slane %v1554, 1
        %v1557 = vsel %vm1533, %v1552, %v1556
        %v1559 = vshrl.u32 %v1504, 16
        %v1561 = vshll.u32 %v1504, 16
        %v1563 = vrot.slane %v1561, 1
        %v1564 = vor.u32 %v1559, %v1563
        %v1566 = vshll.u32 %v1512, 16
        %v1568 = vrot.slane %v1566, 1
        %v1569 = vsel %vm1533, %v1564, %v1568
        %v1571 = vshrl.u32 %v1505, 16
        %v1573 = vshll.u32 %v1505, 16
        %v1575 = vrot.slane %v1573, 1
        %v1576 = vor.u32 %v1571, %v1575
        %v1578 = vshll.u32 %v1513, 16
        %v1580 = vrot.slane %v1578, 1
        %v1581 = vsel %vm1533, %v1576, %v1580
        %v1583 = vshrl.u32 %v1506, 16
        %v1585 = vshll.u32 %v1506, 16
        %v1587 = vrot.slane %v1585, 1
        %v1588 = vor.u32 %v1583, %v1587
        %v1590 = vshll.u32 %v1514, 16
        %v1592 = vrot.slane %v1590, 1
        %v1593 = vsel %vm1533, %v1588, %v1592
        %v1595 = vshrl.u32 %v1507, 16
        %v1597 = vshll.u32 %v1507, 16
        %v1599 = vrot.slane %v1597, 1
        %v1600 = vor.u32 %v1595, %v1599
        %v1602 = vshll.u32 %v1515, 16
        %v1604 = vrot.slane %v1602, 1
        %v1605 = vsel %vm1533, %v1600, %v1604
        %v1607 = vshrl.u32 %v1508, 16
        %v1609 = vshll.u32 %v1508, 16
        %v1611 = vrot.slane %v1609, 1
        %v1612 = vor.u32 %v1607, %v1611
        %v1614 = vshll.u32 %v1516, 16
        %v1616 = vrot.slane %v1614, 1
        %v1617 = vsel %vm1533, %v1612, %v1616
        %v1619 = vshrl.u32 %v1509, 16
        %v1621 = vshll.u32 %v1509, 16
        %v1623 = vrot.slane %v1621, 1
        %v1624 = vor.u32 %v1619, %v1623
        %v1626 = vshll.u32 %v1517, 16
        %v1628 = vrot.slane %v1626, 1
        %v1629 = vsel %vm1533, %v1624, %v1628
        %v1766 = vunpack.c.l.b16 %v1161
        %v1767 = vunpack.c.h.b16 %v1161
        %v1768 = vunpack.c.l.b16 %v1162
        %v1769 = vunpack.c.h.b16 %v1162
        %v1770 = vunpack.c.l.b16 %v1163
        %v1771 = vunpack.c.h.b16 %v1163
        %v1772 = vunpack.c.l.b16 %v1164
        %v1773 = vunpack.c.h.b16 %v1164
        %v1774 = vunpack.c.l.b16 %v1165
        %v1775 = vunpack.c.h.b16 %v1165
        %v1776 = vunpack.c.l.b16 %v1166
        %v1777 = vunpack.c.h.b16 %v1166
        %v1778 = vunpack.c.l.b16 %v1167
        %v1779 = vunpack.c.h.b16 %v1167
        %v1780 = vunpack.c.l.b16 %v1168
        %v1781 = vunpack.c.h.b16 %v1168
        %v1782 = vunpack.c.l.b16 %v1169
        %v1783 = vunpack.c.h.b16 %v1169
        %v1784 = vunpack.c.l.b16 %v1170
        %v1785 = vunpack.c.h.b16 %v1170
        %v1786 = vunpack.c.l.b16 %v1171
        %v1787 = vunpack.c.h.b16 %v1171
        %v1788 = vunpack.c.l.b16 %v1172
        %v1789 = vunpack.c.h.b16 %v1172
        %v1790 = vunpack.c.l.b16 %v1173
        %v1791 = vunpack.c.h.b16 %v1173
        %v1792 = vunpack.c.l.b16 %v1174
        %v1793 = vunpack.c.h.b16 %v1174
        %v1794 = vunpack.c.l.b16 %v1175
        %v1795 = vunpack.c.h.b16 %v1175
        %v1796 = vunpack.c.l.b16 %v1176
        %v1797 = vunpack.c.h.b16 %v1176
        %v1798 = vunpack.c.l.b16 %v1177
        %v1799 = vunpack.c.h.b16 %v1177
        %v1800 = vunpack.c.l.b16 %v1178
        %v1801 = vunpack.c.h.b16 %v1178
        %v1802 = vunpack.c.l.b16 %v1179
        %v1803 = vunpack.c.h.b16 %v1179
        %v1804 = vunpack.c.l.b16 %v1180
        %v1805 = vunpack.c.h.b16 %v1180
        %v1806 = vunpack.c.l.b16 %v1181
        %v1807 = vunpack.c.h.b16 %v1181
        %v1808 = vunpack.c.l.b16 %v1182
        %v1809 = vunpack.c.h.b16 %v1182
        %v1810 = vunpack.c.l.b16 %v1183
        %v1811 = vunpack.c.h.b16 %v1183
        %v1812 = vunpack.c.l.b16 %v1184
        %v1813 = vunpack.c.h.b16 %v1184
        %v1814 = vunpack.c.l.b16 %v1185
        %v1815 = vunpack.c.h.b16 %v1185
        %v1816 = vunpack.c.l.b16 %v1186
        %v1817 = vunpack.c.h.b16 %v1186
        %v1818 = vunpack.c.l.b16 %v1187
        %v1819 = vunpack.c.h.b16 %v1187
        %v1820 = vunpack.c.l.b16 %v1188
        %v1821 = vunpack.c.h.b16 %v1188
        %v1822 = vunpack.c.l.b16 %v1189
        %v1823 = vunpack.c.h.b16 %v1189
        %v1824 = vunpack.c.l.b16 %v1190
        %v1825 = vunpack.c.h.b16 %v1190
        %v1826 = vunpack.c.l.b16 %v1191
        %v1827 = vunpack.c.h.b16 %v1191
        %v1828 = vunpack.c.l.b16 %v1192
        %v1829 = vunpack.c.h.b16 %v1192
        %v1830 = vunpack.c.l.b16 %v1193
        %v1831 = vunpack.c.h.b16 %v1193
        %v1832 = vunpack.c.l.b16 %v1194
        %v1833 = vunpack.c.h.b16 %v1194
        %v1834 = vunpack.c.l.b16 %v1195
        %v1835 = vunpack.c.h.b16 %v1195
        %v1836 = vunpack.c.l.b16 %v1196
        %v1837 = vunpack.c.h.b16 %v1196
        %v1838 = vunpack.c.l.b16 %v1197
        %v1839 = vunpack.c.h.b16 %v1197
        %v1840 = vunpack.c.l.b16 %v1198
        %v1841 = vunpack.c.h.b16 %v1198
        %v1842 = vunpack.c.l.b16 %v1199
        %v1843 = vunpack.c.h.b16 %v1199
        %v1844 = vunpack.c.l.b16 %v1200
        %v1845 = vunpack.c.h.b16 %v1200
        %v1846 = vunpack.c.l.b16 %v1201
        %v1847 = vunpack.c.h.b16 %v1201
        %v1848 = vunpack.c.l.b16 %v1202
        %v1849 = vunpack.c.h.b16 %v1202
        %v1850 = vunpack.c.l.b16 %v1203
        %v1851 = vunpack.c.h.b16 %v1203
        %v1852 = vunpack.c.l.b16 %v1204
        %v1853 = vunpack.c.h.b16 %v1204
        %v1854 = vunpack.c.l.b16 %v1205
        %v1855 = vunpack.c.h.b16 %v1205
        %v1856 = vunpack.c.l.b16 %v1206
        %v1857 = vunpack.c.h.b16 %v1206
        %v1858 = vunpack.c.l.b16 %v1207
        %v1859 = vunpack.c.h.b16 %v1207
        %v1860 = vunpack.c.l.b16 %v1208
        %v1861 = vunpack.c.h.b16 %v1208
        %v1862 = vunpack.c.l.b16 %v1209
        %v1863 = vunpack.c.h.b16 %v1209
        %v1864 = vunpack.c.l.b16 %v1210
        %v1865 = vunpack.c.h.b16 %v1210
        %v1866 = vunpack.c.l.b16 %v1211
        %v1867 = vunpack.c.h.b16 %v1211
        %v1868 = vunpack.c.l.b16 %v1212
        %v1869 = vunpack.c.h.b16 %v1212
        %v1870 = vunpack.c.l.b16 %v1213
        %v1871 = vunpack.c.h.b16 %v1213
        %v1872 = vunpack.c.l.b16 %v1214
        %v1873 = vunpack.c.h.b16 %v1214
        %v1874 = vunpack.c.l.b16 %v1215
        %v1875 = vunpack.c.h.b16 %v1215
        %v1876 = vunpack.c.l.b16 %v1216
        %v1877 = vunpack.c.h.b16 %v1216
        %v1878 = vunpack.c.l.b16 %v1217
        %v1879 = vunpack.c.h.b16 %v1217
        %v1880 = vunpack.c.l.b16 %v1218
        %v1881 = vunpack.c.h.b16 %v1218
        %v1882 = vunpack.c.l.b16 %v1219
        %v1883 = vunpack.c.h.b16 %v1219
        %v1884 = vunpack.c.l.b16 %v1220
        %v1885 = vunpack.c.h.b16 %v1220
        %v1886 = vunpack.c.l.b16 %v1221
        %v1887 = vunpack.c.h.b16 %v1221
        %v1888 = vunpack.c.l.b16 %v1222
        %v1889 = vunpack.c.h.b16 %v1222
        %v1890 = vunpack.c.l.b16 %v1223
        %v1891 = vunpack.c.h.b16 %v1223
        %v1892 = vunpack.c.l.b16 %v1224
        %v1893 = vunpack.c.h.b16 %v1224
        %v1894 = vunpack.c.l.b16 %v1225
        %v1895 = vunpack.c.h.b16 %v1225
        %v1896 = vunpack.c.l.b16 %v1226
        %v1897 = vunpack.c.h.b16 %v1226
        %v1898 = vunpack.c.l.b16 %v1227
        %v1899 = vunpack.c.h.b16 %v1227
        %v1900 = vunpack.c.l.b16 %v1228
        %v1901 = vunpack.c.h.b16 %v1228
        %v1902 = vunpack.c.l.b16 %v1229
        %v1903 = vunpack.c.h.b16 %v1229
        %v1904 = vunpack.c.l.b16 %v1230
        %v1905 = vunpack.c.h.b16 %v1230
        %v1906 = vunpack.c.l.b16 %v1231
        %v1907 = vunpack.c.h.b16 %v1231
        %v1908 = vunpack.c.l.b16 %v1232
        %v1909 = vunpack.c.h.b16 %v1232
        %v1910 = vunpack.c.l.b16 %v1233
        %v1911 = vunpack.c.h.b16 %v1233
        %v1912 = vunpack.c.l.b16 %v1234
        %v1913 = vunpack.c.h.b16 %v1234
        %v1914 = vunpack.c.l.b16 %v1235
        %v1915 = vunpack.c.h.b16 %v1235
        %v1916 = vunpack.c.l.b16 %v1236
        %v1917 = vunpack.c.h.b16 %v1236
        %v1918 = vunpack.c.l.b16 %v1237
        %v1919 = vunpack.c.h.b16 %v1237
        %v1920 = vunpack.c.l.b16 %v1238
        %v1921 = vunpack.c.h.b16 %v1238
        %v1922 = vunpack.c.l.b16 %v1239
        %v1923 = vunpack.c.h.b16 %v1239
        %v1924 = vunpack.c.l.b16 %v1240
        %v1925 = vunpack.c.h.b16 %v1240
        %v1926 = vunpack.c.l.b16 %v1241
        %v1927 = vunpack.c.h.b16 %v1241
        %v1928 = vunpack.c.l.b16 %v1242
        %v1929 = vunpack.c.h.b16 %v1242
        %v1930 = vunpack.c.l.b16 %v1243
        %v1931 = vunpack.c.h.b16 %v1243
        %v1932 = vunpack.c.l.b16 %v1244
        %v1933 = vunpack.c.h.b16 %v1244
        %v1934 = vunpack.c.l.b16 %v1245
        %v1935 = vunpack.c.h.b16 %v1245
        %v1936 = vunpack.c.l.b16 %v1246
        %v1937 = vunpack.c.h.b16 %v1246
        %v1938 = vunpack.c.l.b16 %v1247
        %v1939 = vunpack.c.h.b16 %v1247
        %v1940 = vunpack.c.l.b16 %v1248
        %v1941 = vunpack.c.h.b16 %v1248
        %v1942 = vunpack.c.l.b16 %v1249
        %v1943 = vunpack.c.h.b16 %v1249
        %v1944 = vunpack.c.l.b16 %v1250
        %v1945 = vunpack.c.h.b16 %v1250
        %v1946 = vunpack.c.l.b16 %v1251
        %v1947 = vunpack.c.h.b16 %v1251
        %v1948 = vunpack.c.l.b16 %v1252
        %v1949 = vunpack.c.h.b16 %v1252
        %v1950 = vunpack.c.l.b16 %v1253
        %v1951 = vunpack.c.h.b16 %v1253
        %v1952 = vunpack.c.l.b16 %v1254
        %v1953 = vunpack.c.h.b16 %v1254
        %v1954 = vunpack.c.l.b16 %v1255
        %v1955 = vunpack.c.h.b16 %v1255
        %v1956 = vunpack.c.l.b16 %v1256
        %v1957 = vunpack.c.h.b16 %v1256
        %v1958 = vunpack.c.l.b16 %v1257
        %v1959 = vunpack.c.h.b16 %v1257
        %v1960 = vunpack.c.l.b16 %v1258
        %v1961 = vunpack.c.h.b16 %v1258
        %v1962 = vunpack.c.l.b16 %v1259
        %v1963 = vunpack.c.h.b16 %v1259
        %v1964 = vunpack.c.l.b16 %v1260
        %v1965 = vunpack.c.h.b16 %v1260
        %v1966 = vunpack.c.l.b16 %v1261
        %v1967 = vunpack.c.h.b16 %v1261
        %v1968 = vunpack.c.l.b16 %v1262
        %v1969 = vunpack.c.h.b16 %v1262
        %v1970 = vunpack.c.l.b16 %v1263
        %v1971 = vunpack.c.h.b16 %v1263
        %v1972 = vunpack.c.l.b16 %v1264
        %v1973 = vunpack.c.h.b16 %v1264
        %v1974 = vunpack.c.l.b16 %v1265
        %v1975 = vunpack.c.h.b16 %v1265
        %v1976 = vunpack.c.l.b16 %v1266
        %v1977 = vunpack.c.h.b16 %v1266
        %v1978 = vunpack.c.l.b16 %v1267
        %v1979 = vunpack.c.h.b16 %v1267
        %v1980 = vunpack.c.l.b16 %v1268
        %v1981 = vunpack.c.h.b16 %v1268
        %v1982 = vunpack.c.l.b16 %v1269
        %v1983 = vunpack.c.h.b16 %v1269
        %v1984 = vunpack.c.l.b16 %v1270
        %v1985 = vunpack.c.h.b16 %v1270
        %v1986 = vunpack.c.l.b16 %v1271
        %v1987 = vunpack.c.h.b16 %v1271
        %v1988 = vunpack.c.l.b16 %v1272
        %v1989 = vunpack.c.h.b16 %v1272
        %v1990 = vunpack.c.l.b16 %v1273
        %v1991 = vunpack.c.h.b16 %v1273
        %v1992 = vunpack.c.l.b16 %v1274
        %v1993 = vunpack.c.h.b16 %v1274
        %v1994 = vunpack.c.l.b16 %v1275
        %v1995 = vunpack.c.h.b16 %v1275
        %v1996 = vunpack.c.l.b16 %v1276
        %v1997 = vunpack.c.h.b16 %v1276
        %v1998 = vunpack.c.l.b16 %v1277
        %v1999 = vunpack.c.h.b16 %v1277
        %v2000 = vunpack.c.l.b16 %v1278
        %v2001 = vunpack.c.h.b16 %v1278
        %v2002 = vunpack.c.l.b16 %v1279
        %v2003 = vunpack.c.h.b16 %v1279
        %v2004 = vunpack.c.l.b16 %v1280
        %v2005 = vunpack.c.h.b16 %v1280
        %v2006 = vunpack.c.l.b16 %v1281
        %v2007 = vunpack.c.h.b16 %v1281
        %v2008 = vunpack.c.l.b16 %v1282
        %v2009 = vunpack.c.h.b16 %v1282
        %v2010 = vunpack.c.l.b16 %v1283
        %v2011 = vunpack.c.h.b16 %v1283
        %v2012 = vunpack.c.l.b16 %v1284
        %v2013 = vunpack.c.h.b16 %v1284
        %v2014 = vunpack.c.l.b16 %v1285
        %v2015 = vunpack.c.h.b16 %v1285
        %v2016 = vunpack.c.l.b16 %v1286
        %v2017 = vunpack.c.h.b16 %v1286
        %v2018 = vunpack.c.l.b16 %v1287
        %v2019 = vunpack.c.h.b16 %v1287
        %v2020 = vunpack.c.l.b16 %v1288
        %v2021 = vunpack.c.h.b16 %v1288
        %v2022 = vpack.c.b16 %v1768, %v1766
        %v2023 = vpack.c.b16 %v1769, %v1767
        %v2024 = vpack.c.b16 %v1772, %v1770
        %v2025 = vpack.c.b16 %v1773, %v1771
        %v2026 = vpack.c.b16 %v1776, %v1774
        %v2027 = vpack.c.b16 %v1777, %v1775
        %v2028 = vpack.c.b16 %v1780, %v1778
        %v2029 = vpack.c.b16 %v1781, %v1779
        %v2030 = vpack.c.b16 %v1784, %v1782
        %v2031 = vpack.c.b16 %v1785, %v1783
        %v2032 = vpack.c.b16 %v1788, %v1786
        %v2033 = vpack.c.b16 %v1789, %v1787
        %v2034 = vpack.c.b16 %v1792, %v1790
        %v2035 = vpack.c.b16 %v1793, %v1791
        %v2036 = vpack.c.b16 %v1796, %v1794
        %v2037 = vpack.c.b16 %v1797, %v1795
        %v2038 = vpack.c.b16 %v1800, %v1798
        %v2039 = vpack.c.b16 %v1801, %v1799
        %v2040 = vpack.c.b16 %v1804, %v1802
        %v2041 = vpack.c.b16 %v1805, %v1803
        %v2042 = vpack.c.b16 %v1808, %v1806
        %v2043 = vpack.c.b16 %v1809, %v1807
        %v2044 = vpack.c.b16 %v1812, %v1810
        %v2045 = vpack.c.b16 %v1813, %v1811
        %v2046 = vpack.c.b16 %v1816, %v1814
        %v2047 = vpack.c.b16 %v1817, %v1815
        %v2048 = vpack.c.b16 %v1820, %v1818
        %v2049 = vpack.c.b16 %v1821, %v1819
        %v2050 = vpack.c.b16 %v1824, %v1822
        %v2051 = vpack.c.b16 %v1825, %v1823
        %v2052 = vpack.c.b16 %v1828, %v1826
        %v2053 = vpack.c.b16 %v1829, %v1827
        %v2054 = vpack.c.b16 %v1832, %v1830
        %v2055 = vpack.c.b16 %v1833, %v1831
        %v2056 = vpack.c.b16 %v1836, %v1834
        %v2057 = vpack.c.b16 %v1837, %v1835
        %v2058 = vpack.c.b16 %v1840, %v1838
        %v2059 = vpack.c.b16 %v1841, %v1839
        %v2060 = vpack.c.b16 %v1844, %v1842
        %v2061 = vpack.c.b16 %v1845, %v1843
        %v2062 = vpack.c.b16 %v1848, %v1846
        %v2063 = vpack.c.b16 %v1849, %v1847
        %v2064 = vpack.c.b16 %v1852, %v1850
        %v2065 = vpack.c.b16 %v1853, %v1851
        %v2066 = vpack.c.b16 %v1856, %v1854
        %v2067 = vpack.c.b16 %v1857, %v1855
        %v2068 = vpack.c.b16 %v1860, %v1858
        %v2069 = vpack.c.b16 %v1861, %v1859
        %v2070 = vpack.c.b16 %v1864, %v1862
        %v2071 = vpack.c.b16 %v1865, %v1863
        %v2072 = vpack.c.b16 %v1868, %v1866
        %v2073 = vpack.c.b16 %v1869, %v1867
        %v2074 = vpack.c.b16 %v1872, %v1870
        %v2075 = vpack.c.b16 %v1873, %v1871
        %v2076 = vpack.c.b16 %v1876, %v1874
        %v2077 = vpack.c.b16 %v1877, %v1875
        %v2078 = vpack.c.b16 %v1880, %v1878
        %v2079 = vpack.c.b16 %v1881, %v1879
        %v2080 = vpack.c.b16 %v1884, %v1882
        %v2081 = vpack.c.b16 %v1885, %v1883
        %v2082 = vpack.c.b16 %v1888, %v1886
        %v2083 = vpack.c.b16 %v1889, %v1887
        %v2084 = vpack.c.b16 %v1892, %v1890
        %v2085 = vpack.c.b16 %v1893, %v1891
        %v2086 = vpack.c.b16 %v1896, %v1894
        %v2087 = vpack.c.b16 %v1897, %v1895
        %v2088 = vpack.c.b16 %v1900, %v1898
        %v2089 = vpack.c.b16 %v1901, %v1899
        %v2090 = vpack.c.b16 %v1904, %v1902
        %v2091 = vpack.c.b16 %v1905, %v1903
        %v2092 = vpack.c.b16 %v1908, %v1906
        %v2093 = vpack.c.b16 %v1909, %v1907
        %v2094 = vpack.c.b16 %v1912, %v1910
        %v2095 = vpack.c.b16 %v1913, %v1911
        %v2096 = vpack.c.b16 %v1916, %v1914
        %v2097 = vpack.c.b16 %v1917, %v1915
        %v2098 = vpack.c.b16 %v1920, %v1918
        %v2099 = vpack.c.b16 %v1921, %v1919
        %v2100 = vpack.c.b16 %v1924, %v1922
        %v2101 = vpack.c.b16 %v1925, %v1923
        %v2102 = vpack.c.b16 %v1928, %v1926
        %v2103 = vpack.c.b16 %v1929, %v1927
        %v2104 = vpack.c.b16 %v1932, %v1930
        %v2105 = vpack.c.b16 %v1933, %v1931
        %v2106 = vpack.c.b16 %v1936, %v1934
        %v2107 = vpack.c.b16 %v1937, %v1935
        %v2108 = vpack.c.b16 %v1940, %v1938
        %v2109 = vpack.c.b16 %v1941, %v1939
        %v2110 = vpack.c.b16 %v1944, %v1942
        %v2111 = vpack.c.b16 %v1945, %v1943
        %v2112 = vpack.c.b16 %v1948, %v1946
        %v2113 = vpack.c.b16 %v1949, %v1947
        %v2114 = vpack.c.b16 %v1952, %v1950
        %v2115 = vpack.c.b16 %v1953, %v1951
        %v2116 = vpack.c.b16 %v1956, %v1954
        %v2117 = vpack.c.b16 %v1957, %v1955
        %v2118 = vpack.c.b16 %v1960, %v1958
        %v2119 = vpack.c.b16 %v1961, %v1959
        %v2120 = vpack.c.b16 %v1964, %v1962
        %v2121 = vpack.c.b16 %v1965, %v1963
        %v2122 = vpack.c.b16 %v1968, %v1966
        %v2123 = vpack.c.b16 %v1969, %v1967
        %v2124 = vpack.c.b16 %v1972, %v1970
        %v2125 = vpack.c.b16 %v1973, %v1971
        %v2126 = vpack.c.b16 %v1976, %v1974
        %v2127 = vpack.c.b16 %v1977, %v1975
        %v2128 = vpack.c.b16 %v1980, %v1978
        %v2129 = vpack.c.b16 %v1981, %v1979
        %v2130 = vpack.c.b16 %v1984, %v1982
        %v2131 = vpack.c.b16 %v1985, %v1983
        %v2132 = vpack.c.b16 %v1988, %v1986
        %v2133 = vpack.c.b16 %v1989, %v1987
        %v2134 = vpack.c.b16 %v1992, %v1990
        %v2135 = vpack.c.b16 %v1993, %v1991
        %v2136 = vpack.c.b16 %v1996, %v1994
        %v2137 = vpack.c.b16 %v1997, %v1995
        %v2138 = vpack.c.b16 %v2000, %v1998
        %v2139 = vpack.c.b16 %v2001, %v1999
        %v2140 = vpack.c.b16 %v2004, %v2002
        %v2141 = vpack.c.b16 %v2005, %v2003
        %v2142 = vpack.c.b16 %v2008, %v2006
        %v2143 = vpack.c.b16 %v2009, %v2007
        %v2144 = vpack.c.b16 %v2012, %v2010
        %v2145 = vpack.c.b16 %v2013, %v2011
        %v2146 = vpack.c.b16 %v2016, %v2014
        %v2147 = vpack.c.b16 %v2017, %v2015
        %v2148 = vpack.c.b16 %v2020, %v2018
        %v2149 = vpack.c.b16 %v2021, %v2019
        %2278 = vmatprep.subr.bf16.mxu0 %v2023
        %2279 = vmatpush1.bf16.msra.mxu0 %v2022
        %2280 = vmatprep.subr.bf16.mxu0 %v2025
        %2281 = vmatpush1.bf16.msra.mxu0 %v2024
        %2282 = vmatprep.subr.bf16.mxu0 %v2027
        %2283 = vmatpush1.bf16.msra.mxu0 %v2026
        %2284 = vmatprep.subr.bf16.mxu0 %v2029
        %2285 = vmatpush1.bf16.msra.mxu0 %v2028
        %2286 = vmatprep.subr.bf16.mxu0 %v2031
        %2287 = vmatpush1.bf16.msra.mxu0 %v2030
        %2288 = vmatprep.subr.bf16.mxu0 %v2033
        %2289 = vmatpush1.bf16.msra.mxu0 %v2032
        %2290 = vmatprep.subr.bf16.mxu0 %v2035
        %2291 = vmatpush1.bf16.msra.mxu0 %v2034
        %2292 = vmatprep.subr.bf16.mxu0 %v2037
        %2293 = vmatpush1.bf16.msra.mxu0 %v2036
        %2294 = vmatprep.subr.bf16.mxu0 %v2039
        %2295 = vmatpush1.bf16.msra.mxu0 %v2038
        %2296 = vmatprep.subr.bf16.mxu0 %v2041
        %2297 = vmatpush1.bf16.msra.mxu0 %v2040
        %2298 = vmatprep.subr.bf16.mxu0 %v2043
        %2299 = vmatpush1.bf16.msra.mxu0 %v2042
        %2300 = vmatprep.subr.bf16.mxu0 %v2045
        %2301 = vmatpush1.bf16.msra.mxu0 %v2044
        %2302 = vmatprep.subr.bf16.mxu0 %v2047
        %2303 = vmatpush1.bf16.msra.mxu0 %v2046
        %2304 = vmatprep.subr.bf16.mxu0 %v2049
        %2305 = vmatpush1.bf16.msra.mxu0 %v2048
        %2306 = vmatprep.subr.bf16.mxu0 %v2051
        %2307 = vmatpush1.bf16.msra.mxu0 %v2050
        %2308 = vmatprep.subr.bf16.mxu0 %v2053
        %2309 = vmatpush1.bf16.msra.mxu0 %v2052
        %2310 = vmatprep.mubr.bf16.mxu0 %v1557
        %2311 = vmatmul.mubr.bf16.gmra.mrb[0].mxu0 %v1545
        %v2312 = vpop.f32.mrb[0].mxu0
        %v2313 = vadd.f32 %v1526, %v2312
        %v2314 = vpop.f32.mrb[0].mxu0
        %v2315 = vadd.f32 %v1530, %v2314
        %v2316 = vpop.f32.mrb[0].mxu0
        %v2317 = vadd.f32 %v1526, %v2316
        %v2318 = vpop.f32.mrb[0].mxu0
        %v2319 = vadd.f32 %v1530, %v2318
        %2320 = vdwg.mxu0
        %2321 = vmatprep.subr.bf16.mxu0 %v2055
        %2322 = vmatpush1.bf16.msra.mxu0 %v2054
        %2323 = vmatprep.subr.bf16.mxu0 %v2057
        %2324 = vmatpush1.bf16.msra.mxu0 %v2056
        %2325 = vmatprep.subr.bf16.mxu0 %v2059
        %2326 = vmatpush1.bf16.msra.mxu0 %v2058
        %2327 = vmatprep.subr.bf16.mxu0 %v2061
        %2328 = vmatpush1.bf16.msra.mxu0 %v2060
        %2329 = vmatprep.subr.bf16.mxu0 %v2063
        %2330 = vmatpush1.bf16.msra.mxu0 %v2062
        %2331 = vmatprep.subr.bf16.mxu0 %v2065
        %2332 = vmatpush1.bf16.msra.mxu0 %v2064
        %2333 = vmatprep.subr.bf16.mxu0 %v2067
        %2334 = vmatpush1.bf16.msra.mxu0 %v2066
        %2335 = vmatprep.subr.bf16.mxu0 %v2069
        %2336 = vmatpush1.bf16.msra.mxu0 %v2068
        %2337 = vmatprep.subr.bf16.mxu0 %v2071
        %2338 = vmatpush1.bf16.msra.mxu0 %v2070
        %2339 = vmatprep.subr.bf16.mxu0 %v2073
        %2340 = vmatpush1.bf16.msra.mxu0 %v2072
        %2341 = vmatprep.subr.bf16.mxu0 %v2075
        %2342 = vmatpush1.bf16.msra.mxu0 %v2074
        %2343 = vmatprep.subr.bf16.mxu0 %v2077
        %2344 = vmatpush1.bf16.msra.mxu0 %v2076
        %2345 = vmatprep.subr.bf16.mxu0 %v2079
        %2346 = vmatpush1.bf16.msra.mxu0 %v2078
        %2347 = vmatprep.subr.bf16.mxu0 %v2081
        %2348 = vmatpush1.bf16.msra.mxu0 %v2080
        %2349 = vmatprep.subr.bf16.mxu0 %v2083
        %2350 = vmatpush1.bf16.msra.mxu0 %v2082
        %2351 = vmatprep.subr.bf16.mxu0 %v2085
        %2352 = vmatpush1.bf16.msra.mxu0 %v2084
        %2353 = vmatprep.mubr.bf16.mxu0 %v1581
        %2354 = vmatmul.mubr.bf16.gmra.mrb[0].mxu0 %v1569
        %v2355 = vpop.f32.mrb[0].mxu0
        %v2356 = vadd.f32 %v2313, %v2355
        %v2357 = vpop.f32.mrb[0].mxu0
        %v2358 = vadd.f32 %v2315, %v2357
        %v2359 = vpop.f32.mrb[0].mxu0
        %v2360 = vadd.f32 %v2317, %v2359
        %v2361 = vpop.f32.mrb[0].mxu0
        %v2362 = vadd.f32 %v2319, %v2361
        %2363 = vdwg.mxu0
        %2364 = vmatprep.subr.bf16.mxu0 %v2087
        %2365 = vmatpush1.bf16.msra.mxu0 %v2086
        %2366 = vmatprep.subr.bf16.mxu0 %v2089
        %2367 = vmatpush1.bf16.msra.mxu0 %v2088
        %2368 = vmatprep.subr.bf16.mxu0 %v2091
        %2369 = vmatpush1.bf16.msra.mxu0 %v2090
        %2370 = vmatprep.subr.bf16.mxu0 %v2093
        %2371 = vmatpush1.bf16.msra.mxu0 %v2092
        %2372 = vmatprep.subr.bf16.mxu0 %v2095
        %2373 = vmatpush1.bf16.msra.mxu0 %v2094
        %2374 = vmatprep.subr.bf16.mxu0 %v2097
        %2375 = vmatpush1.bf16.msra.mxu0 %v2096
        %2376 = vmatprep.subr.bf16.mxu0 %v2099
        %2377 = vmatpush1.bf16.msra.mxu0 %v2098
        %2378 = vmatprep.subr.bf16.mxu0 %v2101
        %2379 = vmatpush1.bf16.msra.mxu0 %v2100
        %2380 = vmatprep.subr.bf16.mxu0 %v2103
        %2381 = vmatpush1.bf16.msra.mxu0 %v2102
        %2382 = vmatprep.subr.bf16.mxu0 %v2105
        %2383 = vmatpush1.bf16.msra.mxu0 %v2104
        %2384 = vmatprep.subr.bf16.mxu0 %v2107
        %2385 = vmatpush1.bf16.msra.mxu0 %v2106
        %2386 = vmatprep.subr.bf16.mxu0 %v2109
        %2387 = vmatpush1.bf16.msra.mxu0 %v2108
        %2388 = vmatprep.subr.bf16.mxu0 %v2111
        %2389 = vmatpush1.bf16.msra.mxu0 %v2110
        %2390 = vmatprep.subr.bf16.mxu0 %v2113
        %2391 = vmatpush1.bf16.msra.mxu0 %v2112
        %2392 = vmatprep.subr.bf16.mxu0 %v2115
        %2393 = vmatpush1.bf16.msra.mxu0 %v2114
        %2394 = vmatprep.subr.bf16.mxu0 %v2117
        %2395 = vmatpush1.bf16.msra.mxu0 %v2116
        %2396 = vmatprep.mubr.bf16.mxu0 %v1605
        %2397 = vmatmul.mubr.bf16.gmra.mrb[0].mxu0 %v1593
        %v2398 = vpop.f32.mrb[0].mxu0
        %v2399 = vadd.f32 %v2356, %v2398
        %v2400 = vpop.f32.mrb[0].mxu0
        %v2401 = vadd.f32 %v2358, %v2400
        %v2402 = vpop.f32.mrb[0].mxu0
        %v2403 = vadd.f32 %v2360, %v2402
        %v2404 = vpop.f32.mrb[0].mxu0
        %v2405 = vadd.f32 %v2362, %v2404
        %2406 = vdwg.mxu0
        %2407 = vmatprep.subr.bf16.mxu0 %v2119
        %2408 = vmatpush1.bf16.msra.mxu0 %v2118
        %2409 = vmatprep.subr.bf16.mxu0 %v2121
        %2410 = vmatpush1.bf16.msra.mxu0 %v2120
        %2411 = vmatprep.subr.bf16.mxu0 %v2123
        %2412 = vmatpush1.bf16.msra.mxu0 %v2122
        %2413 = vmatprep.subr.bf16.mxu0 %v2125
        %2414 = vmatpush1.bf16.msra.mxu0 %v2124
        %2415 = vmatprep.subr.bf16.mxu0 %v2127
        %2416 = vmatpush1.bf16.msra.mxu0 %v2126
        %2417 = vmatprep.subr.bf16.mxu0 %v2129
        %2418 = vmatpush1.bf16.msra.mxu0 %v2128
        %2419 = vmatprep.subr.bf16.mxu0 %v2131
        %2420 = vmatpush1.bf16.msra.mxu0 %v2130
        %2421 = vmatprep.subr.bf16.mxu0 %v2133
        %2422 = vmatpush1.bf16.msra.mxu0 %v2132
        %2423 = vmatprep.subr.bf16.mxu0 %v2135
        %2424 = vmatpush1.bf16.msra.mxu0 %v2134
        %2425 = vmatprep.subr.bf16.mxu0 %v2137
        %2426 = vmatpush1.bf16.msra.mxu0 %v2136
        %2427 = vmatprep.subr.bf16.mxu0 %v2139
        %2428 = vmatpush1.bf16.msra.mxu0 %v2138
        %2429 = vmatprep.subr.bf16.mxu0 %v2141
        %2430 = vmatpush1.bf16.msra.mxu0 %v2140
        %2431 = vmatprep.subr.bf16.mxu0 %v2143
        %2432 = vmatpush1.bf16.msra.mxu0 %v2142
        %2433 = vmatprep.subr.bf16.mxu0 %v2145
        %2434 = vmatpush1.bf16.msra.mxu0 %v2144
        %2435 = vmatprep.subr.bf16.mxu0 %v2147
        %2436 = vmatpush1.bf16.msra.mxu0 %v2146
        %2437 = vmatprep.subr.bf16.mxu0 %v2149
        %2438 = vmatpush1.bf16.msra.mxu0 %v2148
        %2439 = vmatprep.mubr.bf16.mxu0 %v1629
        %2440 = vmatmul.mubr.bf16.gmra.mrb[0].mxu0 %v1617
        %v2441 = vpop.f32.mrb[0].mxu0
        %v2442 = vadd.f32 %v2399, %v2441
        %v2443 = vpop.f32.mrb[0].mxu0
        %v2444 = vadd.f32 %v2401, %v2443
        %v2445 = vpop.f32.mrb[0].mxu0
        %v2446 = vadd.f32 %v2403, %v2445
        %v2447 = vpop.f32.mrb[0].mxu0
        %v2448 = vadd.f32 %v2405, %v2447
        %2449 = vdwg.mxu0
        %v2450 = vmax.f32 %v2442, 0.0
        %v2451 = vmax.f32 %v2444, 0.0
        %v2452 = vmax.f32 %v2446, 0.0
        %v2453 = vmax.f32 %v2448, 0.0
        %vm2470 = vcmask 1046528
        %v2471 = vrot.slane %v1502, 1
        %v2472 = vrot.slane %v1510, 1
        %v2473 = vsel %vm2470, %v2471, %v2472
        %v2474 = vrot.slane %v1503, 1
        %v2475 = vrot.slane %v1511, 1
        %v2476 = vsel %vm2470, %v2474, %v2475
        %v2477 = vrot.slane %v1504, 1
        %v2478 = vrot.slane %v1512, 1
        %v2479 = vsel %vm2470, %v2477, %v2478
        %v2480 = vrot.slane %v1505, 1
        %v2481 = vrot.slane %v1513, 1
        %v2482 = vsel %vm2470, %v2480, %v2481
        %v2483 = vrot.slane %v1506, 1
        %v2484 = vrot.slane %v1518, 1
        %v2485 = vsel %vm2470, %v2483, %v2484
        %v2486 = vrot.slane %v1507, 1
        %v2487 = vrot.slane %v1519, 1
        %v2488 = vsel %vm2470, %v2486, %v2487
        %v2489 = vrot.slane %v1508, 1
        %v2490 = vrot.slane %v1520, 1
        %v2491 = vsel %vm2470, %v2489, %v2490
        %v2492 = vrot.slane %v1509, 1
        %v2493 = vrot.slane %v1521, 1
        %v2494 = vsel %vm2470, %v2492, %v2493
        %v2631 = vunpack.c.l.b16 %v1289
        %v2632 = vunpack.c.h.b16 %v1289
        %v2633 = vunpack.c.l.b16 %v1290
        %v2634 = vunpack.c.h.b16 %v1290
        %v2635 = vunpack.c.l.b16 %v1291
        %v2636 = vunpack.c.h.b16 %v1291
        %v2637 = vunpack.c.l.b16 %v1292
        %v2638 = vunpack.c.h.b16 %v1292
        %v2639 = vunpack.c.l.b16 %v1293
        %v2640 = vunpack.c.h.b16 %v1293
        %v2641 = vunpack.c.l.b16 %v1294
        %v2642 = vunpack.c.h.b16 %v1294
        %v2643 = vunpack.c.l.b16 %v1295
        %v2644 = vunpack.c.h.b16 %v1295
        %v2645 = vunpack.c.l.b16 %v1296
        %v2646 = vunpack.c.h.b16 %v1296
        %v2647 = vunpack.c.l.b16 %v1297
        %v2648 = vunpack.c.h.b16 %v1297
        %v2649 = vunpack.c.l.b16 %v1298
        %v2650 = vunpack.c.h.b16 %v1298
        %v2651 = vunpack.c.l.b16 %v1299
        %v2652 = vunpack.c.h.b16 %v1299
        %v2653 = vunpack.c.l.b16 %v1300
        %v2654 = vunpack.c.h.b16 %v1300
        %v2655 = vunpack.c.l.b16 %v1301
        %v2656 = vunpack.c.h.b16 %v1301
        %v2657 = vunpack.c.l.b16 %v1302
        %v2658 = vunpack.c.h.b16 %v1302
        %v2659 = vunpack.c.l.b16 %v1303
        %v2660 = vunpack.c.h.b16 %v1303
        %v2661 = vunpack.c.l.b16 %v1304
        %v2662 = vunpack.c.h.b16 %v1304
        %v2663 = vunpack.c.l.b16 %v1305
        %v2664 = vunpack.c.h.b16 %v1305
        %v2665 = vunpack.c.l.b16 %v1306
        %v2666 = vunpack.c.h.b16 %v1306
        %v2667 = vunpack.c.l.b16 %v1307
        %v2668 = vunpack.c.h.b16 %v1307
        %v2669 = vunpack.c.l.b16 %v1308
        %v2670 = vunpack.c.h.b16 %v1308
        %v2671 = vunpack.c.l.b16 %v1309
        %v2672 = vunpack.c.h.b16 %v1309
        %v2673 = vunpack.c.l.b16 %v1310
        %v2674 = vunpack.c.h.b16 %v1310
        %v2675 = vunpack.c.l.b16 %v1311
        %v2676 = vunpack.c.h.b16 %v1311
        %v2677 = vunpack.c.l.b16 %v1312
        %v2678 = vunpack.c.h.b16 %v1312
        %v2679 = vunpack.c.l.b16 %v1313
        %v2680 = vunpack.c.h.b16 %v1313
        %v2681 = vunpack.c.l.b16 %v1314
        %v2682 = vunpack.c.h.b16 %v1314
        %v2683 = vunpack.c.l.b16 %v1315
        %v2684 = vunpack.c.h.b16 %v1315
        %v2685 = vunpack.c.l.b16 %v1316
        %v2686 = vunpack.c.h.b16 %v1316
        %v2687 = vunpack.c.l.b16 %v1317
        %v2688 = vunpack.c.h.b16 %v1317
        %v2689 = vunpack.c.l.b16 %v1318
        %v2690 = vunpack.c.h.b16 %v1318
        %v2691 = vunpack.c.l.b16 %v1319
        %v2692 = vunpack.c.h.b16 %v1319
        %v2693 = vunpack.c.l.b16 %v1320
        %v2694 = vunpack.c.h.b16 %v1320
        %v2695 = vunpack.c.l.b16 %v1321
        %v2696 = vunpack.c.h.b16 %v1321
        %v2697 = vunpack.c.l.b16 %v1322
        %v2698 = vunpack.c.h.b16 %v1322
        %v2699 = vunpack.c.l.b16 %v1323
        %v2700 = vunpack.c.h.b16 %v1323
        %v2701 = vunpack.c.l.b16 %v1324
        %v2702 = vunpack.c.h.b16 %v1324
        %v2703 = vunpack.c.l.b16 %v1325
        %v2704 = vunpack.c.h.b16 %v1325
        %v2705 = vunpack.c.l.b16 %v1326
        %v2706 = vunpack.c.h.b16 %v1326
        %v2707 = vunpack.c.l.b16 %v1327
        %v2708 = vunpack.c.h.b16 %v1327
        %v2709 = vunpack.c.l.b16 %v1328
        %v2710 = vunpack.c.h.b16 %v1328
        %v2711 = vunpack.c.l.b16 %v1329
        %v2712 = vunpack.c.h.b16 %v1329
        %v2713 = vunpack.c.l.b16 %v1330
        %v2714 = vunpack.c.h.b16 %v1330
        %v2715 = vunpack.c.l.b16 %v1331
        %v2716 = vunpack.c.h.b16 %v1331
        %v2717 = vunpack.c.l.b16 %v1332
        %v2718 = vunpack.c.h.b16 %v1332
        %v2719 = vunpack.c.l.b16 %v1333
        %v2720 = vunpack.c.h.b16 %v1333
        %v2721 = vunpack.c.l.b16 %v1334
        %v2722 = vunpack.c.h.b16 %v1334
        %v2723 = vunpack.c.l.b16 %v1335
        %v2724 = vunpack.c.h.b16 %v1335
        %v2725 = vunpack.c.l.b16 %v1336
        %v2726 = vunpack.c.h.b16 %v1336
        %v2727 = vunpack.c.l.b16 %v1337
        %v2728 = vunpack.c.h.b16 %v1337
        %v2729 = vunpack.c.l.b16 %v1338
        %v2730 = vunpack.c.h.b16 %v1338
        %v2731 = vunpack.c.l.b16 %v1339
        %v2732 = vunpack.c.h.b16 %v1339
        %v2733 = vunpack.c.l.b16 %v1340
        %v2734 = vunpack.c.h.b16 %v1340
        %v2735 = vunpack.c.l.b16 %v1341
        %v2736 = vunpack.c.h.b16 %v1341
        %v2737 = vunpack.c.l.b16 %v1342
        %v2738 = vunpack.c.h.b16 %v1342
        %v2739 = vunpack.c.l.b16 %v1343
        %v2740 = vunpack.c.h.b16 %v1343
        %v2741 = vunpack.c.l.b16 %v1344
        %v2742 = vunpack.c.h.b16 %v1344
        %v2743 = vunpack.c.l.b16 %v1345
        %v2744 = vunpack.c.h.b16 %v1345
        %v2745 = vunpack.c.l.b16 %v1346
        %v2746 = vunpack.c.h.b16 %v1346
        %v2747 = vunpack.c.l.b16 %v1347
        %v2748 = vunpack.c.h.b16 %v1347
        %v2749 = vunpack.c.l.b16 %v1348
        %v2750 = vunpack.c.h.b16 %v1348
        %v2751 = vunpack.c.l.b16 %v1349
        %v2752 = vunpack.c.h.b16 %v1349
        %v2753 = vunpack.c.l.b16 %v1350
        %v2754 = vunpack.c.h.b16 %v1350
        %v2755 = vunpack.c.l.b16 %v1351
        %v2756 = vunpack.c.h.b16 %v1351
        %v2757 = vunpack.c.l.b16 %v1352
        %v2758 = vunpack.c.h.b16 %v1352
        %v2759 = vunpack.c.l.b16 %v1353
        %v2760 = vunpack.c.h.b16 %v1353
        %v2761 = vunpack.c.l.b16 %v1354
        %v2762 = vunpack.c.h.b16 %v1354
        %v2763 = vunpack.c.l.b16 %v1355
        %v2764 = vunpack.c.h.b16 %v1355
        %v2765 = vunpack.c.l.b16 %v1356
        %v2766 = vunpack.c.h.b16 %v1356
        %v2767 = vunpack.c.l.b16 %v1357
        %v2768 = vunpack.c.h.b16 %v1357
        %v2769 = vunpack.c.l.b16 %v1358
        %v2770 = vunpack.c.h.b16 %v1358
        %v2771 = vunpack.c.l.b16 %v1359
        %v2772 = vunpack.c.h.b16 %v1359
        %v2773 = vunpack.c.l.b16 %v1360
        %v2774 = vunpack.c.h.b16 %v1360
        %v2775 = vunpack.c.l.b16 %v1361
        %v2776 = vunpack.c.h.b16 %v1361
        %v2777 = vunpack.c.l.b16 %v1362
        %v2778 = vunpack.c.h.b16 %v1362
        %v2779 = vunpack.c.l.b16 %v1363
        %v2780 = vunpack.c.h.b16 %v1363
        %v2781 = vunpack.c.l.b16 %v1364
        %v2782 = vunpack.c.h.b16 %v1364
        %v2783 = vunpack.c.l.b16 %v1365
        %v2784 = vunpack.c.h.b16 %v1365
        %v2785 = vunpack.c.l.b16 %v1366
        %v2786 = vunpack.c.h.b16 %v1366
        %v2787 = vunpack.c.l.b16 %v1367
        %v2788 = vunpack.c.h.b16 %v1367
        %v2789 = vunpack.c.l.b16 %v1368
        %v2790 = vunpack.c.h.b16 %v1368
        %v2791 = vunpack.c.l.b16 %v1369
        %v2792 = vunpack.c.h.b16 %v1369
        %v2793 = vunpack.c.l.b16 %v1370
        %v2794 = vunpack.c.h.b16 %v1370
        %v2795 = vunpack.c.l.b16 %v1371
        %v2796 = vunpack.c.h.b16 %v1371
        %v2797 = vunpack.c.l.b16 %v1372
        %v2798 = vunpack.c.h.b16 %v1372
        %v2799 = vunpack.c.l.b16 %v1373
        %v2800 = vunpack.c.h.b16 %v1373
        %v2801 = vunpack.c.l.b16 %v1374
        %v2802 = vunpack.c.h.b16 %v1374
        %v2803 = vunpack.c.l.b16 %v1375
        %v2804 = vunpack.c.h.b16 %v1375
        %v2805 = vunpack.c.l.b16 %v1376
        %v2806 = vunpack.c.h.b16 %v1376
        %v2807 = vunpack.c.l.b16 %v1377
        %v2808 = vunpack.c.h.b16 %v1377
        %v2809 = vunpack.c.l.b16 %v1378
        %v2810 = vunpack.c.h.b16 %v1378
        %v2811 = vunpack.c.l.b16 %v1379
        %v2812 = vunpack.c.h.b16 %v1379
        %v2813 = vunpack.c.l.b16 %v1380
        %v2814 = vunpack.c.h.b16 %v1380
        %v2815 = vunpack.c.l.b16 %v1381
        %v2816 = vunpack.c.h.b16 %v1381
        %v2817 = vunpack.c.l.b16 %v1382
        %v2818 = vunpack.c.h.b16 %v1382
        %v2819 = vunpack.c.l.b16 %v1383
        %v2820 = vunpack.c.h.b16 %v1383
        %v2821 = vunpack.c.l.b16 %v1384
        %v2822 = vunpack.c.h.b16 %v1384
        %v2823 = vunpack.c.l.b16 %v1385
        %v2824 = vunpack.c.h.b16 %v1385
        %v2825 = vunpack.c.l.b16 %v1386
        %v2826 = vunpack.c.h.b16 %v1386
        %v2827 = vunpack.c.l.b16 %v1387
        %v2828 = vunpack.c.h.b16 %v1387
        %v2829 = vunpack.c.l.b16 %v1388
        %v2830 = vunpack.c.h.b16 %v1388
        %v2831 = vunpack.c.l.b16 %v1389
        %v2832 = vunpack.c.h.b16 %v1389
        %v2833 = vunpack.c.l.b16 %v1390
        %v2834 = vunpack.c.h.b16 %v1390
        %v2835 = vunpack.c.l.b16 %v1391
        %v2836 = vunpack.c.h.b16 %v1391
        %v2837 = vunpack.c.l.b16 %v1392
        %v2838 = vunpack.c.h.b16 %v1392
        %v2839 = vunpack.c.l.b16 %v1393
        %v2840 = vunpack.c.h.b16 %v1393
        %v2841 = vunpack.c.l.b16 %v1394
        %v2842 = vunpack.c.h.b16 %v1394
        %v2843 = vunpack.c.l.b16 %v1395
        %v2844 = vunpack.c.h.b16 %v1395
        %v2845 = vunpack.c.l.b16 %v1396
        %v2846 = vunpack.c.h.b16 %v1396
        %v2847 = vunpack.c.l.b16 %v1397
        %v2848 = vunpack.c.h.b16 %v1397
        %v2849 = vunpack.c.l.b16 %v1398
        %v2850 = vunpack.c.h.b16 %v1398
        %v2851 = vunpack.c.l.b16 %v1399
        %v2852 = vunpack.c.h.b16 %v1399
        %v2853 = vunpack.c.l.b16 %v1400
        %v2854 = vunpack.c.h.b16 %v1400
        %v2855 = vunpack.c.l.b16 %v1401
        %v2856 = vunpack.c.h.b16 %v1401
        %v2857 = vunpack.c.l.b16 %v1402
        %v2858 = vunpack.c.h.b16 %v1402
        %v2859 = vunpack.c.l.b16 %v1403
        %v2860 = vunpack.c.h.b16 %v1403
        %v2861 = vunpack.c.l.b16 %v1404
        %v2862 = vunpack.c.h.b16 %v1404
        %v2863 = vunpack.c.l.b16 %v1405
        %v2864 = vunpack.c.h.b16 %v1405
        %v2865 = vunpack.c.l.b16 %v1406
        %v2866 = vunpack.c.h.b16 %v1406
        %v2867 = vunpack.c.l.b16 %v1407
        %v2868 = vunpack.c.h.b16 %v1407
        %v2869 = vunpack.c.l.b16 %v1408
        %v2870 = vunpack.c.h.b16 %v1408
        %v2871 = vunpack.c.l.b16 %v1409
        %v2872 = vunpack.c.h.b16 %v1409
        %v2873 = vunpack.c.l.b16 %v1410
        %v2874 = vunpack.c.h.b16 %v1410
        %v2875 = vunpack.c.l.b16 %v1411
        %v2876 = vunpack.c.h.b16 %v1411
        %v2877 = vunpack.c.l.b16 %v1412
        %v2878 = vunpack.c.h.b16 %v1412
        %v2879 = vunpack.c.l.b16 %v1413
        %v2880 = vunpack.c.h.b16 %v1413
        %v2881 = vunpack.c.l.b16 %v1414
        %v2882 = vunpack.c.h.b16 %v1414
        %v2883 = vunpack.c.l.b16 %v1415
        %v2884 = vunpack.c.h.b16 %v1415
        %v2885 = vunpack.c.l.b16 %v1416
        %v2886 = vunpack.c.h.b16 %v1416
        %v2887 = vpack.c.b16 %v2633, %v2631
        %v2888 = vpack.c.b16 %v2634, %v2632
        %v2889 = vpack.c.b16 %v2637, %v2635
        %v2890 = vpack.c.b16 %v2638, %v2636
        %v2891 = vpack.c.b16 %v2641, %v2639
        %v2892 = vpack.c.b16 %v2642, %v2640
        %v2893 = vpack.c.b16 %v2645, %v2643
        %v2894 = vpack.c.b16 %v2646, %v2644
        %v2895 = vpack.c.b16 %v2649, %v2647
        %v2896 = vpack.c.b16 %v2650, %v2648
        %v2897 = vpack.c.b16 %v2653, %v2651
        %v2898 = vpack.c.b16 %v2654, %v2652
        %v2899 = vpack.c.b16 %v2657, %v2655
        %v2900 = vpack.c.b16 %v2658, %v2656
        %v2901 = vpack.c.b16 %v2661, %v2659
        %v2902 = vpack.c.b16 %v2662, %v2660
        %v2903 = vpack.c.b16 %v2665, %v2663
        %v2904 = vpack.c.b16 %v2666, %v2664
        %v2905 = vpack.c.b16 %v2669, %v2667
        %v2906 = vpack.c.b16 %v2670, %v2668
        %v2907 = vpack.c.b16 %v2673, %v2671
        %v2908 = vpack.c.b16 %v2674, %v2672
        %v2909 = vpack.c.b16 %v2677, %v2675
        %v2910 = vpack.c.b16 %v2678, %v2676
        %v2911 = vpack.c.b16 %v2681, %v2679
        %v2912 = vpack.c.b16 %v2682, %v2680
        %v2913 = vpack.c.b16 %v2685, %v2683
        %v2914 = vpack.c.b16 %v2686, %v2684
        %v2915 = vpack.c.b16 %v2689, %v2687
        %v2916 = vpack.c.b16 %v2690, %v2688
        %v2917 = vpack.c.b16 %v2693, %v2691
        %v2918 = vpack.c.b16 %v2694, %v2692
        %v2919 = vpack.c.b16 %v2697, %v2695
        %v2920 = vpack.c.b16 %v2698, %v2696
        %v2921 = vpack.c.b16 %v2701, %v2699
        %v2922 = vpack.c.b16 %v2702, %v2700
        %v2923 = vpack.c.b16 %v2705, %v2703
        %v2924 = vpack.c.b16 %v2706, %v2704
        %v2925 = vpack.c.b16 %v2709, %v2707
        %v2926 = vpack.c.b16 %v2710, %v2708
        %v2927 = vpack.c.b16 %v2713, %v2711
        %v2928 = vpack.c.b16 %v2714, %v2712
        %v2929 = vpack.c.b16 %v2717, %v2715
        %v2930 = vpack.c.b16 %v2718, %v2716
        %v2931 = vpack.c.b16 %v2721, %v2719
        %v2932 = vpack.c.b16 %v2722, %v2720
        %v2933 = vpack.c.b16 %v2725, %v2723
        %v2934 = vpack.c.b16 %v2726, %v2724
        %v2935 = vpack.c.b16 %v2729, %v2727
        %v2936 = vpack.c.b16 %v2730, %v2728
        %v2937 = vpack.c.b16 %v2733, %v2731
        %v2938 = vpack.c.b16 %v2734, %v2732
        %v2939 = vpack.c.b16 %v2737, %v2735
        %v2940 = vpack.c.b16 %v2738, %v2736
        %v2941 = vpack.c.b16 %v2741, %v2739
        %v2942 = vpack.c.b16 %v2742, %v2740
        %v2943 = vpack.c.b16 %v2745, %v2743
        %v2944 = vpack.c.b16 %v2746, %v2744
        %v2945 = vpack.c.b16 %v2749, %v2747
        %v2946 = vpack.c.b16 %v2750, %v2748
        %v2947 = vpack.c.b16 %v2753, %v2751
        %v2948 = vpack.c.b16 %v2754, %v2752
        %v2949 = vpack.c.b16 %v2757, %v2755
        %v2950 = vpack.c.b16 %v2758, %v2756
        %v2951 = vpack.c.b16 %v2761, %v2759
        %v2952 = vpack.c.b16 %v2762, %v2760
        %v2953 = vpack.c.b16 %v2765, %v2763
        %v2954 = vpack.c.b16 %v2766, %v2764
        %v2955 = vpack.c.b16 %v2769, %v2767
        %v2956 = vpack.c.b16 %v2770, %v2768
        %v2957 = vpack.c.b16 %v2773, %v2771
        %v2958 = vpack.c.b16 %v2774, %v2772
        %v2959 = vpack.c.b16 %v2777, %v2775
        %v2960 = vpack.c.b16 %v2778, %v2776
        %v2961 = vpack.c.b16 %v2781, %v2779
        %v2962 = vpack.c.b16 %v2782, %v2780
        %v2963 = vpack.c.b16 %v2785, %v2783
        %v2964 = vpack.c.b16 %v2786, %v2784
        %v2965 = vpack.c.b16 %v2789, %v2787
        %v2966 = vpack.c.b16 %v2790, %v2788
        %v2967 = vpack.c.b16 %v2793, %v2791
        %v2968 = vpack.c.b16 %v2794, %v2792
        %v2969 = vpack.c.b16 %v2797, %v2795
        %v2970 = vpack.c.b16 %v2798, %v2796
        %v2971 = vpack.c.b16 %v2801, %v2799
        %v2972 = vpack.c.b16 %v2802, %v2800
        %v2973 = vpack.c.b16 %v2805, %v2803
        %v2974 = vpack.c.b16 %v2806, %v2804
        %v2975 = vpack.c.b16 %v2809, %v2807
        %v2976 = vpack.c.b16 %v2810, %v2808
        %v2977 = vpack.c.b16 %v2813, %v2811
        %v2978 = vpack.c.b16 %v2814, %v2812
        %v2979 = vpack.c.b16 %v2817, %v2815
        %v2980 = vpack.c.b16 %v2818, %v2816
        %v2981 = vpack.c.b16 %v2821, %v2819
        %v2982 = vpack.c.b16 %v2822, %v2820
        %v2983 = vpack.c.b16 %v2825, %v2823
        %v2984 = vpack.c.b16 %v2826, %v2824
        %v2985 = vpack.c.b16 %v2829, %v2827
        %v2986 = vpack.c.b16 %v2830, %v2828
        %v2987 = vpack.c.b16 %v2833, %v2831
        %v2988 = vpack.c.b16 %v2834, %v2832
        %v2989 = vpack.c.b16 %v2837, %v2835
        %v2990 = vpack.c.b16 %v2838, %v2836
        %v2991 = vpack.c.b16 %v2841, %v2839
        %v2992 = vpack.c.b16 %v2842, %v2840
        %v2993 = vpack.c.b16 %v2845, %v2843
        %v2994 = vpack.c.b16 %v2846, %v2844
        %v2995 = vpack.c.b16 %v2849, %v2847
        %v2996 = vpack.c.b16 %v2850, %v2848
        %v2997 = vpack.c.b16 %v2853, %v2851
        %v2998 = vpack.c.b16 %v2854, %v2852
        %v2999 = vpack.c.b16 %v2857, %v2855
        %v3000 = vpack.c.b16 %v2858, %v2856
        %v3001 = vpack.c.b16 %v2861, %v2859
        %v3002 = vpack.c.b16 %v2862, %v2860
        %v3003 = vpack.c.b16 %v2865, %v2863
        %v3004 = vpack.c.b16 %v2866, %v2864
        %v3005 = vpack.c.b16 %v2869, %v2867
        %v3006 = vpack.c.b16 %v2870, %v2868
        %v3007 = vpack.c.b16 %v2873, %v2871
        %v3008 = vpack.c.b16 %v2874, %v2872
        %v3009 = vpack.c.b16 %v2877, %v2875
        %v3010 = vpack.c.b16 %v2878, %v2876
        %v3011 = vpack.c.b16 %v2881, %v2879
        %v3012 = vpack.c.b16 %v2882, %v2880
        %v3013 = vpack.c.b16 %v2885, %v2883
        %v3014 = vpack.c.b16 %v2886, %v2884
        %3143 = vmatprep.subr.bf16.mxu0 %v2888
        %3144 = vmatpush1.bf16.msra.mxu0 %v2887
        %3145 = vmatprep.subr.bf16.mxu0 %v2890
        %3146 = vmatpush1.bf16.msra.mxu0 %v2889
        %3147 = vmatprep.subr.bf16.mxu0 %v2892
        %3148 = vmatpush1.bf16.msra.mxu0 %v2891
        %3149 = vmatprep.subr.bf16.mxu0 %v2894
        %3150 = vmatpush1.bf16.msra.mxu0 %v2893
        %3151 = vmatprep.subr.bf16.mxu0 %v2896
        %3152 = vmatpush1.bf16.msra.mxu0 %v2895
        %3153 = vmatprep.subr.bf16.mxu0 %v2898
        %3154 = vmatpush1.bf16.msra.mxu0 %v2897
        %3155 = vmatprep.subr.bf16.mxu0 %v2900
        %3156 = vmatpush1.bf16.msra.mxu0 %v2899
        %3157 = vmatprep.subr.bf16.mxu0 %v2902
        %3158 = vmatpush1.bf16.msra.mxu0 %v2901
        %3159 = vmatprep.subr.bf16.mxu0 %v2904
        %3160 = vmatpush1.bf16.msra.mxu0 %v2903
        %3161 = vmatprep.subr.bf16.mxu0 %v2906
        %3162 = vmatpush1.bf16.msra.mxu0 %v2905
        %3163 = vmatprep.subr.bf16.mxu0 %v2908
        %3164 = vmatpush1.bf16.msra.mxu0 %v2907
        %3165 = vmatprep.subr.bf16.mxu0 %v2910
        %3166 = vmatpush1.bf16.msra.mxu0 %v2909
        %3167 = vmatprep.subr.bf16.mxu0 %v2912
        %3168 = vmatpush1.bf16.msra.mxu0 %v2911
        %3169 = vmatprep.subr.bf16.mxu0 %v2914
        %3170 = vmatpush1.bf16.msra.mxu0 %v2913
        %3171 = vmatprep.subr.bf16.mxu0 %v2916
        %3172 = vmatpush1.bf16.msra.mxu0 %v2915
        %3173 = vmatprep.subr.bf16.mxu0 %v2918
        %3174 = vmatpush1.bf16.msra.mxu0 %v2917
        %3175 = vmatprep.mubr.bf16.mxu0 %v2476
        %3176 = vmatmul.mubr.bf16.gmra.mrb[0].mxu0 %v2473
        %v3177 = vpop.f32.mrb[0].mxu0
        %v3178 = vadd.f32 %v1526, %v3177
        %v3179 = vpop.f32.mrb[0].mxu0
        %v3180 = vadd.f32 %v1530, %v3179
        %v3181 = vpop.f32.mrb[0].mxu0
        %v3182 = vadd.f32 %v1526, %v3181
        %v3183 = vpop.f32.mrb[0].mxu0
        %v3184 = vadd.f32 %v1530, %v3183
        %3185 = vdwg.mxu0
        %3186 = vmatprep.subr.bf16.mxu0 %v2920
        %3187 = vmatpush1.bf16.msra.mxu0 %v2919
        %3188 = vmatprep.subr.bf16.mxu0 %v2922
        %3189 = vmatpush1.bf16.msra.mxu0 %v2921
        %3190 = vmatprep.subr.bf16.mxu0 %v2924
        %3191 = vmatpush1.bf16.msra.mxu0 %v2923
        %3192 = vmatprep.subr.bf16.mxu0 %v2926
        %3193 = vmatpush1.bf16.msra.mxu0 %v2925
        %3194 = vmatprep.subr.bf16.mxu0 %v2928
        %3195 = vmatpush1.bf16.msra.mxu0 %v2927
        %3196 = vmatprep.subr.bf16.mxu0 %v2930
        %3197 = vmatpush1.bf16.msra.mxu0 %v2929
        %3198 = vmatprep.subr.bf16.mxu0 %v2932
        %3199 = vmatpush1.bf16.msra.mxu0 %v2931
        %3200 = vmatprep.subr.bf16.mxu0 %v2934
        %3201 = vmatpush1.bf16.msra.mxu0 %v2933
        %3202 = vmatprep.subr.bf16.mxu0 %v2936
        %3203 = vmatpush1.bf16.msra.mxu0 %v2935
        %3204 = vmatprep.subr.bf16.mxu0 %v2938
        %3205 = vmatpush1.bf16.msra.mxu0 %v2937
        %3206 = vmatprep.subr.bf16.mxu0 %v2940
        %3207 = vmatpush1.bf16.msra.mxu0 %v2939
        %3208 = vmatprep.subr.bf16.mxu0 %v2942
        %3209 = vmatpush1.bf16.msra.mxu0 %v2941
        %3210 = vmatprep.subr.bf16.mxu0 %v2944
        %3211 = vmatpush1.bf16.msra.mxu0 %v2943
        %3212 = vmatprep.subr.bf16.mxu0 %v2946
        %3213 = vmatpush1.bf16.msra.mxu0 %v2945
        %3214 = vmatprep.subr.bf16.mxu0 %v2948
        %3215 = vmatpush1.bf16.msra.mxu0 %v2947
        %3216 = vmatprep.subr.bf16.mxu0 %v2950
        %3217 = vmatpush1.bf16.msra.mxu0 %v2949
        %3218 = vmatprep.mubr.bf16.mxu0 %v2482
        %3219 = vmatmul.mubr.bf16.gmra.mrb[0].mxu0 %v2479
        %v3220 = vpop.f32.mrb[0].mxu0
        %v3221 = vadd.f32 %v3178, %v3220
        %v3222 = vpop.f32.mrb[0].mxu0
        %v3223 = vadd.f32 %v3180, %v3222
        %v3224 = vpop.f32.mrb[0].mxu0
        %v3225 = vadd.f32 %v3182, %v3224
        %v3226 = vpop.f32.mrb[0].mxu0
        %v3227 = vadd.f32 %v3184, %v3226
        %3228 = vdwg.mxu0
        %3229 = vmatprep.subr.bf16.mxu0 %v2952
        %3230 = vmatpush1.bf16.msra.mxu0 %v2951
        %3231 = vmatprep.subr.bf16.mxu0 %v2954
        %3232 = vmatpush1.bf16.msra.mxu0 %v2953
        %3233 = vmatprep.subr.bf16.mxu0 %v2956
        %3234 = vmatpush1.bf16.msra.mxu0 %v2955
        %3235 = vmatprep.subr.bf16.mxu0 %v2958
        %3236 = vmatpush1.bf16.msra.mxu0 %v2957
        %3237 = vmatprep.subr.bf16.mxu0 %v2960
        %3238 = vmatpush1.bf16.msra.mxu0 %v2959
        %3239 = vmatprep.subr.bf16.mxu0 %v2962
        %3240 = vmatpush1.bf16.msra.mxu0 %v2961
        %3241 = vmatprep.subr.bf16.mxu0 %v2964
        %3242 = vmatpush1.bf16.msra.mxu0 %v2963
        %3243 = vmatprep.subr.bf16.mxu0 %v2966
        %3244 = vmatpush1.bf16.msra.mxu0 %v2965
        %3245 = vmatprep.subr.bf16.mxu0 %v2968
        %3246 = vmatpush1.bf16.msra.mxu0 %v2967
        %3247 = vmatprep.subr.bf16.mxu0 %v2970
        %3248 = vmatpush1.bf16.msra.mxu0 %v2969
        %3249 = vmatprep.subr.bf16.mxu0 %v2972
        %3250 = vmatpush1.bf16.msra.mxu0 %v2971
        %3251 = vmatprep.subr.bf16.mxu0 %v2974
        %3252 = vmatpush1.bf16.msra.mxu0 %v2973
        %3253 = vmatprep.subr.bf16.mxu0 %v2976
        %3254 = vmatpush1.bf16.msra.mxu0 %v2975
        %3255 = vmatprep.subr.bf16.mxu0 %v2978
        %3256 = vmatpush1.bf16.msra.mxu0 %v2977
        %3257 = vmatprep.subr.bf16.mxu0 %v2980
        %3258 = vmatpush1.bf16.msra.mxu0 %v2979
        %3259 = vmatprep.subr.bf16.mxu0 %v2982
        %3260 = vmatpush1.bf16.msra.mxu0 %v2981
        %3261 = vmatprep.mubr.bf16.mxu0 %v2488
        %3262 = vmatmul.mubr.bf16.gmra.mrb[0].mxu0 %v2485
        %v3263 = vpop.f32.mrb[0].mxu0
        %v3264 = vadd.f32 %v3221, %v3263
        %v3265 = vpop.f32.mrb[0].mxu0
        %v3266 = vadd.f32 %v3223, %v3265
        %v3267 = vpop.f32.mrb[0].mxu0
        %v3268 = vadd.f32 %v3225, %v3267
        %v3269 = vpop.f32.mrb[0].mxu0
        %v3270 = vadd.f32 %v3227, %v3269
        %3271 = vdwg.mxu0
        %3272 = vmatprep.subr.bf16.mxu0 %v2984
        %3273 = vmatpush1.bf16.msra.mxu0 %v2983
        %3274 = vmatprep.subr.bf16.mxu0 %v2986
        %3275 = vmatpush1.bf16.msra.mxu0 %v2985
        %3276 = vmatprep.subr.bf16.mxu0 %v2988
        %3277 = vmatpush1.bf16.msra.mxu0 %v2987
        %3278 = vmatprep.subr.bf16.mxu0 %v2990
        %3279 = vmatpush1.bf16.msra.mxu0 %v2989
        %3280 = vmatprep.subr.bf16.mxu0 %v2992
        %3281 = vmatpush1.bf16.msra.mxu0 %v2991
        %3282 = vmatprep.subr.bf16.mxu0 %v2994
        %3283 = vmatpush1.bf16.msra.mxu0 %v2993
        %3284 = vmatprep.subr.bf16.mxu0 %v2996
        %3285 = vmatpush1.bf16.msra.mxu0 %v2995
        %3286 = vmatprep.subr.bf16.mxu0 %v2998
        %3287 = vmatpush1.bf16.msra.mxu0 %v2997
        %3288 = vmatprep.subr.bf16.mxu0 %v3000
        %3289 = vmatpush1.bf16.msra.mxu0 %v2999
        %3290 = vmatprep.subr.bf16.mxu0 %v3002
        %3291 = vmatpush1.bf16.msra.mxu0 %v3001
        %3292 = vmatprep.subr.bf16.mxu0 %v3004
        %3293 = vmatpush1.bf16.msra.mxu0 %v3003
        %3294 = vmatprep.subr.bf16.mxu0 %v3006
        %3295 = vmatpush1.bf16.msra.mxu0 %v3005
        %3296 = vmatprep.subr.bf16.mxu0 %v3008
        %3297 = vmatpush1.bf16.msra.mxu0 %v3007
        %3298 = vmatprep.subr.bf16.mxu0 %v3010
        %3299 = vmatpush1.bf16.msra.mxu0 %v3009
        %3300 = vmatprep.subr.bf16.mxu0 %v3012
        %3301 = vmatpush1.bf16.msra.mxu0 %v3011
        %3302 = vmatprep.subr.bf16.mxu0 %v3014
        %3303 = vmatpush1.bf16.msra.mxu0 %v3013
        %3304 = vmatprep.mubr.bf16.mxu0 %v2494
        %3305 = vmatmul.mubr.bf16.gmra.mrb[0].mxu0 %v2491
        %v3306 = vpop.f32.mrb[0].mxu0
        %v3307 = vadd.f32 %v3264, %v3306
        %v3308 = vpop.f32.mrb[0].mxu0
        %v3309 = vadd.f32 %v3266, %v3308
        %v3310 = vpop.f32.mrb[0].mxu0
        %v3311 = vadd.f32 %v3268, %v3310
        %v3312 = vpop.f32.mrb[0].mxu0
        %v3313 = vadd.f32 %v3270, %v3312
        %3314 = vdwg.mxu0
        %v3315 = vmax.f32 %v3307, 0.0
        %v3316 = vmax.f32 %v3309, 0.0
        %v3317 = vmax.f32 %v3311, 0.0
        %v3318 = vmax.f32 %v3313, 0.0
        %v3321 = vcombine.low %v2450, %v2451
        %v3323 = vunpack.c.l.s4 1966171168
        %v3324 = vunpack.c.0.s8 %v3323
        %v3325 = vlaneseq
        %v3326 = vshrl.u32 %v3325, 7
        %v3327 = vsub.s32 %v3324, %v3326
        %v3328 = vrot.slane %v3321, %v3327
        %v3330 = vunpack.c.l.s4 1966171168
        %v3331 = vunpack.c.0.s8 %v3330
        %v3332 = vlaneseq
        %v3333 = vshrl.u32 %v3332, 7
        %v3334 = vsub.s32 %v3331, %v3333
        %v3335 = vrot.slane %v3328, %v3334
        %vm3337 = vcmp.lt.s32.totalorder %v971, 256
        %vm3338 = vmand %vm972, %vm3337
        %3339 = vst.msk [vmem:[#allocation3] ss:$8 sm:$0x3] %vm3338, %v3335
        %3340 = vst.msk [vmem:[#allocation3] ss:$8 sm:$0x0] %vm3338, %v3335
        %v3343 = vcombine.low %v3315, %v3316
        %v3345 = vunpack.c.l.s4 1966171168
        %v3346 = vunpack.c.0.s8 %v3345
        %v3347 = vlaneseq
        %v3348 = vshrl.u32 %v3347, 7
        %v3349 = vsub.s32 %v3346, %v3348
        %v3350 = vrot.slane %v3343, %v3349
        %v3352 = vunpack.c.l.s4 1966171168
        %v3353 = vunpack.c.0.s8 %v3352
        %v3354 = vlaneseq
        %v3355 = vshrl.u32 %v3354, 7
        %v3356 = vsub.s32 %v3353, %v3355
        %v3357 = vrot.slane %v3350, %v3356
        %s3359 = scalar_lea.vmem [#allocation3], 1
        %3360 = vst.msk [vmem:[%s3359] ss:$8 sm:$0x3] %vm3338, %v3357
        %3361 = vst.msk [vmem:[%s3359] ss:$8 sm:$0x0] %vm3338, %v3357
        %v3362 = vcombine.high %v3328, %v3328
        %v3364 = vunpack.c.l.s4 1966171168
        %v3365 = vunpack.c.0.s8 %v3364
        %v3366 = vlaneseq
        %v3367 = vshrl.u32 %v3366, 7
        %v3368 = vsub.s32 %v3365, %v3367
        %v3369 = vrot.slane %v3362, %v3368
        %s3371 = scalar_lea.vmem [#allocation3], 2
        %3372 = vst.msk [vmem:[%s3371] ss:$8 sm:$0x3] %vm3338, %v3369
        %3373 = vst.msk [vmem:[%s3371] ss:$8 sm:$0x0] %vm3338, %v3369
        %v3374 = vcombine.high %v3350, %v3350
        %v3376 = vunpack.c.l.s4 1966171168
        %v3377 = vunpack.c.0.s8 %v3376
        %v3378 = vlaneseq
        %v3379 = vshrl.u32 %v3378, 7
        %v3380 = vsub.s32 %v3377, %v3379
        %v3381 = vrot.slane %v3374, %v3380
        %s3383 = scalar_lea.vmem [#allocation3], 3
        %3384 = vst.msk [vmem:[%s3383] ss:$8 sm:$0x3] %vm3338, %v3381
        %3385 = vst.msk [vmem:[%s3383] ss:$8 sm:$0x0] %vm3338, %v3381
        %v3386 = vcombine.high %v3335, %v3335
        %s3388 = scalar_lea.vmem [#allocation3], 4
        %3389 = vst.msk [vmem:[%s3388] ss:$8 sm:$0x3] %vm3338, %v3386
        %3390 = vst.msk [vmem:[%s3388] ss:$8 sm:$0x0] %vm3338, %v3386
        %v3391 = vcombine.high %v3357, %v3357
        %s3393 = scalar_lea.vmem [#allocation3], 5
        %3394 = vst.msk [vmem:[%s3393] ss:$8 sm:$0x3] %vm3338, %v3391
        %3395 = vst.msk [vmem:[%s3393] ss:$8 sm:$0x0] %vm3338, %v3391
        %v3396 = vcombine.high %v3369, %v3369
        %s3398 = scalar_lea.vmem [#allocation3], 6
        %3399 = vst.msk [vmem:[%s3398] ss:$8 sm:$0x3] %vm3338, %v3396
        %3400 = vst.msk [vmem:[%s3398] ss:$8 sm:$0x0] %vm3338, %v3396
        %v3401 = vcombine.high %v3381, %v3381
        %s3403 = scalar_lea.vmem [#allocation3], 7
        %3404 = vst.msk [vmem:[%s3403] ss:$8 sm:$0x3] %vm3338, %v3401
        %3405 = vst.msk [vmem:[%s3403] ss:$8 sm:$0x0] %vm3338, %v3401
        %v3406 = vcombine.high %v2450, %v2451
        %v3408 = vunpack.c.l.s4 1966171168
        %v3409 = vunpack.c.0.s8 %v3408
        %v3410 = vlaneseq
        %v3411 = vshrl.u32 %v3410, 7
        %v3412 = vsub.s32 %v3409, %v3411
        %v3413 = vrot.slane %v3406, %v3412
        %v3415 = vunpack.c.l.s4 1966171168
        %v3416 = vunpack.c.0.s8 %v3415
        %v3417 = vlaneseq
        %v3418 = vshrl.u32 %v3417, 7
        %v3419 = vsub.s32 %v3416, %v3418
        %v3420 = vrot.slane %v3413, %v3419
        %s3422 = scalar_lea.vmem [#allocation3], 16
        %3423 = vst.msk [vmem:[%s3422] ss:$8 sm:$0x3] %vm3338, %v3420
        %3424 = vst.msk [vmem:[%s3422] ss:$8 sm:$0x0] %vm3338, %v3420
        %v3425 = vcombine.high %v3315, %v3316
        %v3427 = vunpack.c.l.s4 1966171168
        %v3428 = vunpack.c.0.s8 %v3427
        %v3429 = vlaneseq
        %v3430 = vshrl.u32 %v3429, 7
        %v3431 = vsub.s32 %v3428, %v3430
        %v3432 = vrot.slane %v3425, %v3431
        %v3434 = vunpack.c.l.s4 1966171168
        %v3435 = vunpack.c.0.s8 %v3434
        %v3436 = vlaneseq
        %v3437 = vshrl.u32 %v3436, 7
        %v3438 = vsub.s32 %v3435, %v3437
        %v3439 = vrot.slane %v3432, %v3438
        %s3441 = scalar_lea.vmem [#allocation3], 17
        %3442 = vst.msk [vmem:[%s3441] ss:$8 sm:$0x3] %vm3338, %v3439
        %3443 = vst.msk [vmem:[%s3441] ss:$8 sm:$0x0] %vm3338, %v3439
        %v3444 = vcombine.high %v3413, %v3413
        %v3446 = vunpack.c.l.s4 1966171168
        %v3447 = vunpack.c.0.s8 %v3446
        %v3448 = vlaneseq
        %v3449 = vshrl.u32 %v3448, 7
        %v3450 = vsub.s32 %v3447, %v3449
        %v3451 = vrot.slane %v3444, %v3450
        %s3453 = scalar_lea.vmem [#allocation3], 18
        %3454 = vst.msk [vmem:[%s3453] ss:$8 sm:$0x3] %vm3338, %v3451
        %3455 = vst.msk [vmem:[%s3453] ss:$8 sm:$0x0] %vm3338, %v3451
        %v3456 = vcombine.high %v3432, %v3432
        %v3458 = vunpack.c.l.s4 1966171168
        %v3459 = vunpack.c.0.s8 %v3458
        %v3460 = vlaneseq
        %v3461 = vshrl.u32 %v3460, 7
        %v3462 = vsub.s32 %v3459, %v3461
        %v3463 = vrot.slane %v3456, %v3462
        %s3465 = scalar_lea.vmem [#allocation3], 19
        %3466 = vst.msk [vmem:[%s3465] ss:$8 sm:$0x3] %vm3338, %v3463
        %3467 = vst.msk [vmem:[%s3465] ss:$8 sm:$0x0] %vm3338, %v3463
        %v3468 = vcombine.high %v3420, %v3420
        %s3470 = scalar_lea.vmem [#allocation3], 20
        %3471 = vst.msk [vmem:[%s3470] ss:$8 sm:$0x3] %vm3338, %v3468
        %3472 = vst.msk [vmem:[%s3470] ss:$8 sm:$0x0] %vm3338, %v3468
        %v3473 = vcombine.high %v3439, %v3439
        %s3475 = scalar_lea.vmem [#allocation3], 21
        %3476 = vst.msk [vmem:[%s3475] ss:$8 sm:$0x3] %vm3338, %v3473
        %3477 = vst.msk [vmem:[%s3475] ss:$8 sm:$0x0] %vm3338, %v3473
        %v3478 = vcombine.high %v3451, %v3451
        %s3480 = scalar_lea.vmem [#allocation3], 22
        %3481 = vst.msk [vmem:[%s3480] ss:$8 sm:$0x3] %vm3338, %v3478
        %3482 = vst.msk [vmem:[%s3480] ss:$8 sm:$0x0] %vm3338, %v3478
        %v3483 = vcombine.high %v3463, %v3463
        %s3485 = scalar_lea.vmem [#allocation3], 23
        %3486 = vst.msk [vmem:[%s3485] ss:$8 sm:$0x3] %vm3338, %v3483
        %3487 = vst.msk [vmem:[%s3485] ss:$8 sm:$0x0] %vm3338, %v3483
        %v3490 = vcombine.low %v2452, %v2453
        %v3492 = vunpack.c.l.s4 1966171168
        %v3493 = vunpack.c.0.s8 %v3492
        %v3494 = vlaneseq
        %v3495 = vshrl.u32 %v3494, 7
        %v3496 = vsub.s32 %v3493, %v3495
        %v3497 = vrot.slane %v3490, %v3496
        %v3499 = vunpack.c.l.s4 1966171168
        %v3500 = vunpack.c.0.s8 %v3499
        %v3501 = vlaneseq
        %v3502 = vshrl.u32 %v3501, 7
        %v3503 = vsub.s32 %v3500, %v3502
        %v3504 = vrot.slane %v3497, %v3503
        %s3506 = scalar_lea.vmem [#allocation3], 32
        %3507 = vst.msk [vmem:[%s3506] ss:$8 sm:$0x3] %vm3338, %v3504
        %3508 = vst.msk [vmem:[%s3506] ss:$8 sm:$0x0] %vm3338, %v3504
        %v3511 = vcombine.low %v3317, %v3318
        %v3513 = vunpack.c.l.s4 1966171168
        %v3514 = vunpack.c.0.s8 %v3513
        %v3515 = vlaneseq
        %v3516 = vshrl.u32 %v3515, 7
        %v3517 = vsub.s32 %v3514, %v3516
        %v3518 = vrot.slane %v3511, %v3517
        %v3520 = vunpack.c.l.s4 1966171168
        %v3521 = vunpack.c.0.s8 %v3520
        %v3522 = vlaneseq
        %v3523 = vshrl.u32 %v3522, 7
        %v3524 = vsub.s32 %v3521, %v3523
        %v3525 = vrot.slane %v3518, %v3524
        %s3527 = scalar_lea.vmem [#allocation3], 33
        %3528 = vst.msk [vmem:[%s3527] ss:$8 sm:$0x3] %vm3338, %v3525
        %3529 = vst.msk [vmem:[%s3527] ss:$8 sm:$0x0] %vm3338, %v3525
        %v3530 = vcombine.high %v3497, %v3497
        %v3532 = vunpack.c.l.s4 1966171168
        %v3533 = vunpack.c.0.s8 %v3532
        %v3534 = vlaneseq
        %v3535 = vshrl.u32 %v3534, 7
        %v3536 = vsub.s32 %v3533, %v3535
        %v3537 = vrot.slane %v3530, %v3536
        %s3539 = scalar_lea.vmem [#allocation3], 34
        %3540 = vst.msk [vmem:[%s3539] ss:$8 sm:$0x3] %vm3338, %v3537
        %3541 = vst.msk [vmem:[%s3539] ss:$8 sm:$0x0] %vm3338, %v3537
        %v3542 = vcombine.high %v3518, %v3518
        %v3544 = vunpack.c.l.s4 1966171168
        %v3545 = vunpack.c.0.s8 %v3544
        %v3546 = vlaneseq
        %v3547 = vshrl.u32 %v3546, 7
        %v3548 = vsub.s32 %v3545, %v3547
        %v3549 = vrot.slane %v3542, %v3548
        %s3551 = scalar_lea.vmem [#allocation3], 35
        %3552 = vst.msk [vmem:[%s3551] ss:$8 sm:$0x3] %vm3338, %v3549
        %3553 = vst.msk [vmem:[%s3551] ss:$8 sm:$0x0] %vm3338, %v3549
        %v3554 = vcombine.high %v3504, %v3504
        %s3556 = scalar_lea.vmem [#allocation3], 36
        %3557 = vst.msk [vmem:[%s3556] ss:$8 sm:$0x3] %vm3338, %v3554
        %3558 = vst.msk [vmem:[%s3556] ss:$8 sm:$0x0] %vm3338, %v3554
        %v3559 = vcombine.high %v3525, %v3525
        %s3561 = scalar_lea.vmem [#allocation3], 37
        %3562 = vst.msk [vmem:[%s3561] ss:$8 sm:$0x3] %vm3338, %v3559
        %3563 = vst.msk [vmem:[%s3561] ss:$8 sm:$0x0] %vm3338, %v3559
        %v3564 = vcombine.high %v3537, %v3537
        %s3566 = scalar_lea.vmem [#allocation3], 38
        %3567 = vst.msk [vmem:[%s3566] ss:$8 sm:$0x3] %vm3338, %v3564
        %3568 = vst.msk [vmem:[%s3566] ss:$8 sm:$0x0] %vm3338, %v3564
        %v3569 = vcombine.high %v3549, %v3549
        %s3571 = scalar_lea.vmem [#allocation3], 39
        %3572 = vst.msk [vmem:[%s3571] ss:$8 sm:$0x3] %vm3338, %v3569
        %3573 = vst.msk [vmem:[%s3571] ss:$8 sm:$0x0] %vm3338, %v3569
        %v3574 = vcombine.high %v2452, %v2453
        %v3576 = vunpack.c.l.s4 1966171168
        %v3577 = vunpack.c.0.s8 %v3576
        %v3578 = vlaneseq
        %v3579 = vshrl.u32 %v3578, 7
        %v3580 = vsub.s32 %v3577, %v3579
        %v3581 = vrot.slane %v3574, %v3580
        %v3583 = vunpack.c.l.s4 1966171168
        %v3584 = vunpack.c.0.s8 %v3583
        %v3585 = vlaneseq
        %v3586 = vshrl.u32 %v3585, 7
        %v3587 = vsub.s32 %v3584, %v3586
        %v3588 = vrot.slane %v3581, %v3587
        %s3590 = scalar_lea.vmem [#allocation3], 48
        %3591 = vst.msk [vmem:[%s3590] ss:$8 sm:$0x3] %vm3338, %v3588
        %3592 = vst.msk [vmem:[%s3590] ss:$8 sm:$0x0] %vm3338, %v3588
        %v3593 = vcombine.high %v3317, %v3318
        %v3595 = vunpack.c.l.s4 1966171168
        %v3596 = vunpack.c.0.s8 %v3595
        %v3597 = vlaneseq
        %v3598 = vshrl.u32 %v3597, 7
        %v3599 = vsub.s32 %v3596, %v3598
        %v3600 = vrot.slane %v3593, %v3599
        %v3602 = vunpack.c.l.s4 1966171168
        %v3603 = vunpack.c.0.s8 %v3602
        %v3604 = vlaneseq
        %v3605 = vshrl.u32 %v3604, 7
        %v3606 = vsub.s32 %v3603, %v3605
        %v3607 = vrot.slane %v3600, %v3606
        %s3609 = scalar_lea.vmem [#allocation3], 49
        %3610 = vst.msk [vmem:[%s3609] ss:$8 sm:$0x3] %vm3338, %v3607
        %3611 = vst.msk [vmem:[%s3609] ss:$8 sm:$0x0] %vm3338, %v3607
        %v3612 = vcombine.high %v3581, %v3581
        %v3614 = vunpack.c.l.s4 1966171168
        %v3615 = vunpack.c.0.s8 %v3614
        %v3616 = vlaneseq
        %v3617 = vshrl.u32 %v3616, 7
        %v3618 = vsub.s32 %v3615, %v3617
        %v3619 = vrot.slane %v3612, %v3618
        %s3621 = scalar_lea.vmem [#allocation3], 50
        %3622 = vst.msk [vmem:[%s3621] ss:$8 sm:$0x3] %vm3338, %v3619
        %3623 = vst.msk [vmem:[%s3621] ss:$8 sm:$0x0] %vm3338, %v3619
        %v3624 = vcombine.high %v3600, %v3600
        %v3626 = vunpack.c.l.s4 1966171168
        %v3627 = vunpack.c.0.s8 %v3626
        %v3628 = vlaneseq
        %v3629 = vshrl.u32 %v3628, 7
        %v3630 = vsub.s32 %v3627, %v3629
        %v3631 = vrot.slane %v3624, %v3630
        %s3633 = scalar_lea.vmem [#allocation3], 51
        %3634 = vst.msk [vmem:[%s3633] ss:$8 sm:$0x3] %vm3338, %v3631
        %3635 = vst.msk [vmem:[%s3633] ss:$8 sm:$0x0] %vm3338, %v3631
        %v3636 = vcombine.high %v3588, %v3588
        %s3638 = scalar_lea.vmem [#allocation3], 52
        %3639 = vst.msk [vmem:[%s3638] ss:$8 sm:$0x3] %vm3338, %v3636
        %3640 = vst.msk [vmem:[%s3638] ss:$8 sm:$0x0] %vm3338, %v3636
        %v3641 = vcombine.high %v3607, %v3607
        %s3643 = scalar_lea.vmem [#allocation3], 53
        %3644 = vst.msk [vmem:[%s3643] ss:$8 sm:$0x3] %vm3338, %v3641
        %3645 = vst.msk [vmem:[%s3643] ss:$8 sm:$0x0] %vm3338, %v3641
        %v3646 = vcombine.high %v3619, %v3619
        %s3648 = scalar_lea.vmem [#allocation3], 54
        %3649 = vst.msk [vmem:[%s3648] ss:$8 sm:$0x3] %vm3338, %v3646
        %3650 = vst.msk [vmem:[%s3648] ss:$8 sm:$0x0] %vm3338, %v3646
        %v3651 = vcombine.high %v3631, %v3631
        %s3653 = scalar_lea.vmem [#allocation3], 55
        %3654 = vst.msk [vmem:[%s3653] ss:$8 sm:$0x3] %vm3338, %v3651
        %3655 = vst.msk [vmem:[%s3653] ss:$8 sm:$0x0] %vm3338, %v3651
        %v3656 = vld [vmem:[#allocation3] sm:$0xff]
        %v3657 = vld [vmem:[#allocation3 + $0x8] sm:$0xff]
        %v3658 = vld [vmem:[#allocation3 + $0x10] sm:$0xff]
        %v3659 = vld [vmem:[#allocation3 + $0x18] sm:$0xff]
        %v3660 = vld [vmem:[#allocation3 + $0x20] sm:$0xff]
        %v3661 = vld [vmem:[#allocation3 + $0x28] sm:$0xff]
        %v3662 = vld [vmem:[#allocation3 + $0x30] sm:$0xff]
        %v3663 = vld [vmem:[#allocation3 + $0x38] sm:$0xff]
        %vm3672 = vcmask 1046528
        %v3673 = vrot.slane %v3656, 1
        %v3674 = vrot.slane %v3658, 1
        %v3675 = vsel %vm3672, %v3673, %v3674
        %v3676 = vrot.slane %v3657, 1
        %v3677 = vrot.slane %v3659, 1
        %v3678 = vsel %vm3672, %v3676, %v3677
        %v3679 = vrot.slane %v3660, 1
        %v3680 = vsel %vm3672, %v3674, %v3679
        %v3681 = vrot.slane %v3661, 1
        %v3682 = vsel %vm3672, %v3677, %v3681
        %v3683 = vrot.slane %v3662, 1
        %v3684 = vsel %vm3672, %v3679, %v3683
        %v3685 = vrot.slane %v3663, 1
        %v3686 = vsel %vm3672, %v3681, %v3685
        %v3695 = vpack.c.bf16 %v3658, %v3656
        %v3696 = vpack.c.bf16 %v3659, %v3657
        %v3697 = vpack.c.bf16 %v3680, %v3675
        %v3698 = vpack.c.bf16 %v3682, %v3678
        %v3699 = vpack.c.bf16 %v3662, %v3660
        %v3700 = vpack.c.bf16 %v3663, %v3661
        %v3701 = vpack.c.bf16 %v3683, %v3684
        %v3702 = vpack.c.bf16 %v3685, %v3686
        %v3703 = vld [vmem:[%s7] sm:$0xf]
        %v3704 = vld [vmem:[%s7 + $0x4] sm:$0xf]
        %v3705 = vld [vmem:[%s7 + $0x8] sm:$0xf]
        %v3706 = vld [vmem:[%s7 + $0xc] sm:$0xf]
        %v3707 = vld [vmem:[%s7 + $0x10] sm:$0xf]
        %v3708 = vld [vmem:[%s7 + $0x14] sm:$0xf]
        %v3709 = vld [vmem:[%s7 + $0x18] sm:$0xf]
        %v3710 = vld [vmem:[%s7 + $0x1c] sm:$0xf]
        %v3711 = vld [vmem:[%s7 + $0x20] sm:$0xf]
        %v3712 = vld [vmem:[%s7 + $0x24] sm:$0xf]
        %v3713 = vld [vmem:[%s7 + $0x28] sm:$0xf]
        %v3714 = vld [vmem:[%s7 + $0x2c] sm:$0xf]
        %v3715 = vld [vmem:[%s7 + $0x30] sm:$0xf]
        %v3716 = vld [vmem:[%s7 + $0x34] sm:$0xf]
        %v3717 = vld [vmem:[%s7 + $0x38] sm:$0xf]
        %v3718 = vld [vmem:[%s7 + $0x3c] sm:$0xf]
        %v3719 = vld [vmem:[%s7 + $0x40] sm:$0xf]
        %v3720 = vld [vmem:[%s7 + $0x44] sm:$0xf]
        %v3721 = vld [vmem:[%s7 + $0x48] sm:$0xf]
        %v3722 = vld [vmem:[%s7 + $0x4c] sm:$0xf]
        %v3723 = vld [vmem:[%s7 + $0x50] sm:$0xf]
        %v3724 = vld [vmem:[%s7 + $0x54] sm:$0xf]
        %v3725 = vld [vmem:[%s7 + $0x58] sm:$0xf]
        %v3726 = vld [vmem:[%s7 + $0x5c] sm:$0xf]
        %v3727 = vld [vmem:[%s7 + $0x60] sm:$0xf]
        %v3728 = vld [vmem:[%s7 + $0x64] sm:$0xf]
        %v3729 = vld [vmem:[%s7 + $0x68] sm:$0xf]
        %v3730 = vld [vmem:[%s7 + $0x6c] sm:$0xf]
        %v3731 = vld [vmem:[%s7 + $0x70] sm:$0xf]
        %v3732 = vld [vmem:[%s7 + $0x74] sm:$0xf]
        %v3733 = vld [vmem:[%s7 + $0x78] sm:$0xf]
        %v3734 = vld [vmem:[%s7 + $0x7c] sm:$0xf]
        %v3735 = vld [vmem:[%s7 + $0x80] sm:$0xf]
        %v3736 = vld [vmem:[%s7 + $0x84] sm:$0xf]
        %v3737 = vld [vmem:[%s7 + $0x88] sm:$0xf]
        %v3738 = vld [vmem:[%s7 + $0x8c] sm:$0xf]
        %v3739 = vld [vmem:[%s7 + $0x90] sm:$0xf]
        %v3740 = vld [vmem:[%s7 + $0x94] sm:$0xf]
        %v3741 = vld [vmem:[%s7 + $0x98] sm:$0xf]
        %v3742 = vld [vmem:[%s7 + $0x9c] sm:$0xf]
        %v3743 = vld [vmem:[%s7 + $0xa0] sm:$0xf]
        %v3744 = vld [vmem:[%s7 + $0xa4] sm:$0xf]
        %v3745 = vld [vmem:[%s7 + $0xa8] sm:$0xf]
        %v3746 = vld [vmem:[%s7 + $0xac] sm:$0xf]
        %v3747 = vld [vmem:[%s7 + $0xb0] sm:$0xf]
        %v3748 = vld [vmem:[%s7 + $0xb4] sm:$0xf]
        %v3749 = vld [vmem:[%s7 + $0xb8] sm:$0xf]
        %v3750 = vld [vmem:[%s7 + $0xbc] sm:$0xf]
        %v3751 = vld [vmem:[%s7 + $0xc0] sm:$0xf]
        %v3752 = vld [vmem:[%s7 + $0xc4] sm:$0xf]
        %v3753 = vld [vmem:[%s7 + $0xc8] sm:$0xf]
        %v3754 = vld [vmem:[%s7 + $0xcc] sm:$0xf]
        %v3755 = vld [vmem:[%s7 + $0xd0] sm:$0xf]
        %v3756 = vld [vmem:[%s7 + $0xd4] sm:$0xf]
        %v3757 = vld [vmem:[%s7 + $0xd8] sm:$0xf]
        %v3758 = vld [vmem:[%s7 + $0xdc] sm:$0xf]
        %v3759 = vld [vmem:[%s7 + $0xe0] sm:$0xf]
        %v3760 = vld [vmem:[%s7 + $0xe4] sm:$0xf]
        %v3761 = vld [vmem:[%s7 + $0xe8] sm:$0xf]
        %v3762 = vld [vmem:[%s7 + $0xec] sm:$0xf]
        %v3763 = vld [vmem:[%s7 + $0xf0] sm:$0xf]
        %v3764 = vld [vmem:[%s7 + $0xf4] sm:$0xf]
        %v3765 = vld [vmem:[%s7 + $0xf8] sm:$0xf]
        %v3766 = vld [vmem:[%s7 + $0xfc] sm:$0xf]
        %v3767 = vld [vmem:[%s8] sm:$0x1]
        %v3769 = vlaneseq
        %v3770 = vshrl.u32 %v3769, 7
        %v3771 = vsub.s32 0, %v3770
        %v3772 = vrot.slane %v3767, %v3771
        %v3838 = vunpack.c.l.b16 %v3703
        %v3839 = vunpack.c.l.b16 %v3704
        %v3840 = vunpack.c.l.b16 %v3705
        %v3841 = vunpack.c.l.b16 %v3706
        %v3842 = vunpack.c.l.b16 %v3707
        %v3843 = vunpack.c.l.b16 %v3708
        %v3844 = vunpack.c.l.b16 %v3709
        %v3845 = vunpack.c.l.b16 %v3710
        %v3846 = vunpack.c.l.b16 %v3711
        %v3847 = vunpack.c.l.b16 %v3712
        %v3848 = vunpack.c.l.b16 %v3713
        %v3849 = vunpack.c.l.b16 %v3714
        %v3850 = vunpack.c.l.b16 %v3715
        %v3851 = vunpack.c.l.b16 %v3716
        %v3852 = vunpack.c.l.b16 %v3717
        %v3853 = vunpack.c.l.b16 %v3718
        %v3854 = vunpack.c.l.b16 %v3719
        %v3855 = vunpack.c.l.b16 %v3720
        %v3856 = vunpack.c.l.b16 %v3721
        %v3857 = vunpack.c.l.b16 %v3722
        %v3858 = vunpack.c.l.b16 %v3723
        %v3859 = vunpack.c.l.b16 %v3724
        %v3860 = vunpack.c.l.b16 %v3725
        %v3861 = vunpack.c.l.b16 %v3726
        %v3862 = vunpack.c.l.b16 %v3727
        %v3863 = vunpack.c.l.b16 %v3728
        %v3864 = vunpack.c.l.b16 %v3729
        %v3865 = vunpack.c.l.b16 %v3730
        %v3866 = vunpack.c.l.b16 %v3731
        %v3867 = vunpack.c.l.b16 %v3732
        %v3868 = vunpack.c.l.b16 %v3733
        %v3869 = vunpack.c.l.b16 %v3734
        %v3870 = vunpack.c.l.b16 %v3735
        %v3871 = vunpack.c.l.b16 %v3736
        %v3872 = vunpack.c.l.b16 %v3737
        %v3873 = vunpack.c.l.b16 %v3738
        %v3874 = vunpack.c.l.b16 %v3739
        %v3875 = vunpack.c.l.b16 %v3740
        %v3876 = vunpack.c.l.b16 %v3741
        %v3877 = vunpack.c.l.b16 %v3742
        %v3878 = vunpack.c.l.b16 %v3743
        %v3879 = vunpack.c.l.b16 %v3744
        %v3880 = vunpack.c.l.b16 %v3745
        %v3881 = vunpack.c.l.b16 %v3746
        %v3882 = vunpack.c.l.b16 %v3747
        %v3883 = vunpack.c.l.b16 %v3748
        %v3884 = vunpack.c.l.b16 %v3749
        %v3885 = vunpack.c.l.b16 %v3750
        %v3886 = vunpack.c.l.b16 %v3751
        %v3887 = vunpack.c.l.b16 %v3752
        %v3888 = vunpack.c.l.b16 %v3753
        %v3889 = vunpack.c.l.b16 %v3754
        %v3890 = vunpack.c.l.b16 %v3755
        %v3891 = vunpack.c.l.b16 %v3756
        %v3892 = vunpack.c.l.b16 %v3757
        %v3893 = vunpack.c.l.b16 %v3758
        %v3894 = vunpack.c.l.b16 %v3759
        %v3895 = vunpack.c.l.b16 %v3760
        %v3896 = vunpack.c.l.b16 %v3761
        %v3897 = vunpack.c.l.b16 %v3762
        %v3898 = vunpack.c.l.b16 %v3763
        %v3899 = vunpack.c.l.b16 %v3764
        %v3900 = vunpack.c.l.b16 %v3765
        %v3901 = vunpack.c.l.b16 %v3766
        %v3902 = vpack.c.b16 %v3839, %v3838
        %v3903 = vpack.c.b16 %v3841, %v3840
        %v3904 = vpack.c.b16 %v3843, %v3842
        %v3905 = vpack.c.b16 %v3845, %v3844
        %v3906 = vpack.c.b16 %v3847, %v3846
        %v3907 = vpack.c.b16 %v3849, %v3848
        %v3908 = vpack.c.b16 %v3851, %v3850
        %v3909 = vpack.c.b16 %v3853, %v3852
        %v3910 = vpack.c.b16 %v3855, %v3854
        %v3911 = vpack.c.b16 %v3857, %v3856
        %v3912 = vpack.c.b16 %v3859, %v3858
        %v3913 = vpack.c.b16 %v3861, %v3860
        %v3914 = vpack.c.b16 %v3863, %v3862
        %v3915 = vpack.c.b16 %v3865, %v3864
        %v3916 = vpack.c.b16 %v3867, %v3866
        %v3917 = vpack.c.b16 %v3869, %v3868
        %v3918 = vpack.c.b16 %v3871, %v3870
        %v3919 = vpack.c.b16 %v3873, %v3872
        %v3920 = vpack.c.b16 %v3875, %v3874
        %v3921 = vpack.c.b16 %v3877, %v3876
        %v3922 = vpack.c.b16 %v3879, %v3878
        %v3923 = vpack.c.b16 %v3881, %v3880
        %v3924 = vpack.c.b16 %v3883, %v3882
        %v3925 = vpack.c.b16 %v3885, %v3884
        %v3926 = vpack.c.b16 %v3887, %v3886
        %v3927 = vpack.c.b16 %v3889, %v3888
        %v3928 = vpack.c.b16 %v3891, %v3890
        %v3929 = vpack.c.b16 %v3893, %v3892
        %v3930 = vpack.c.b16 %v3895, %v3894
        %v3931 = vpack.c.b16 %v3897, %v3896
        %v3932 = vpack.c.b16 %v3899, %v3898
        %v3933 = vpack.c.b16 %v3901, %v3900
        %3966 = vmatprep.subr.bf16.mxu0 0
        %3967 = vmatpush1.bf16.msra.mxu0 %v3902
        %3968 = vmatprep.subr.bf16.mxu0 0
        %3969 = vmatpush1.bf16.msra.mxu0 %v3903
        %3970 = vmatprep.subr.bf16.mxu0 0
        %3971 = vmatpush1.bf16.msra.mxu0 %v3904
        %3972 = vmatprep.subr.bf16.mxu0 0
        %3973 = vmatpush1.bf16.msra.mxu0 %v3905
        %3974 = vmatprep.subr.bf16.mxu0 0
        %3975 = vmatpush1.bf16.msra.mxu0 %v3906
        %3976 = vmatprep.subr.bf16.mxu0 0
        %3977 = vmatpush1.bf16.msra.mxu0 %v3907
        %3978 = vmatprep.subr.bf16.mxu0 0
        %3979 = vmatpush1.bf16.msra.mxu0 %v3908
        %3980 = vmatprep.subr.bf16.mxu0 0
        %3981 = vmatpush1.bf16.msra.mxu0 %v3909
        %3982 = vmatprep.subr.bf16.mxu0 0
        %3983 = vmatpush1.bf16.msra.mxu0 %v3910
        %3984 = vmatprep.subr.bf16.mxu0 0
        %3985 = vmatpush1.bf16.msra.mxu0 %v3911
        %3986 = vmatprep.subr.bf16.mxu0 0
        %3987 = vmatpush1.bf16.msra.mxu0 %v3912
        %3988 = vmatprep.subr.bf16.mxu0 0
        %3989 = vmatpush1.bf16.msra.mxu0 %v3913
        %3990 = vmatprep.subr.bf16.mxu0 0
        %3991 = vmatpush1.bf16.msra.mxu0 %v3914
        %3992 = vmatprep.subr.bf16.mxu0 0
        %3993 = vmatpush1.bf16.msra.mxu0 %v3915
        %3994 = vmatprep.subr.bf16.mxu0 0
        %3995 = vmatpush1.bf16.msra.mxu0 %v3916
        %3996 = vmatprep.subr.bf16.mxu0 0
        %3997 = vmatpush1.bf16.msra.mxu0 %v3917
        %3998 = vmatprep.mubr.bf16.mxu0 %v3696
        %3999 = vmatmul.mubr.bf16.gmra.mrb[0].mxu0 %v3695
        %v4000 = vpop.f32.mrb[0].mxu0
        %v4001 = vadd.f32 %v3772, %v4000
        %v4002 = vpop.f32.mrb[0].mxu0
        %v4003 = vpop.f32.mrb[0].mxu0
        %v4004 = vadd.f32 %v3772, %v4003
        %v4005 = vpop.f32.mrb[0].mxu0
        %4006 = vmatprep.mubr.bf16.mxu0 %v3700
        %4007 = vmatmul.mubr.bf16.gmra.mrb[0].mxu0 %v3699
        %v4008 = vpop.f32.mrb[0].mxu0
        %v4009 = vadd.f32 %v3772, %v4008
        %v4010 = vpop.f32.mrb[0].mxu0
        %v4011 = vpop.f32.mrb[0].mxu0
        %v4012 = vadd.f32 %v3772, %v4011
        %v4013 = vpop.f32.mrb[0].mxu0
        %4014 = vdwg.mxu0
        %4015 = vmatprep.subr.bf16.mxu0 0
        %4016 = vmatpush1.bf16.msra.mxu0 %v3918
        %4017 = vmatprep.subr.bf16.mxu0 0
        %4018 = vmatpush1.bf16.msra.mxu0 %v3919
        %4019 = vmatprep.subr.bf16.mxu0 0
        %4020 = vmatpush1.bf16.msra.mxu0 %v3920
        %4021 = vmatprep.subr.bf16.mxu0 0
        %4022 = vmatpush1.bf16.msra.mxu0 %v3921
        %4023 = vmatprep.subr.bf16.mxu0 0
        %4024 = vmatpush1.bf16.msra.mxu0 %v3922
        %4025 = vmatprep.subr.bf16.mxu0 0
        %4026 = vmatpush1.bf16.msra.mxu0 %v3923
        %4027 = vmatprep.subr.bf16.mxu0 0
        %4028 = vmatpush1.bf16.msra.mxu0 %v3924
        %4029 = vmatprep.subr.bf16.mxu0 0
        %4030 = vmatpush1.bf16.msra.mxu0 %v3925
        %4031 = vmatprep.subr.bf16.mxu0 0
        %4032 = vmatpush1.bf16.msra.mxu0 %v3926
        %4033 = vmatprep.subr.bf16.mxu0 0
        %4034 = vmatpush1.bf16.msra.mxu0 %v3927
        %4035 = vmatprep.subr.bf16.mxu0 0
        %4036 = vmatpush1.bf16.msra.mxu0 %v3928
        %4037 = vmatprep.subr.bf16.mxu0 0
        %4038 = vmatpush1.bf16.msra.mxu0 %v3929
        %4039 = vmatprep.subr.bf16.mxu0 0
        %4040 = vmatpush1.bf16.msra.mxu0 %v3930
        %4041 = vmatprep.subr.bf16.mxu0 0
        %4042 = vmatpush1.bf16.msra.mxu0 %v3931
        %4043 = vmatprep.subr.bf16.mxu0 0
        %4044 = vmatpush1.bf16.msra.mxu0 %v3932
        %4045 = vmatprep.subr.bf16.mxu0 0
        %4046 = vmatpush1.bf16.msra.mxu0 %v3933
        %4047 = vmatprep.mubr.bf16.mxu0 %v3698
        %4048 = vmatmul.mubr.bf16.gmra.mrb[0].mxu0 %v3697
        %v4049 = vpop.f32.mrb[0].mxu0
        %v4050 = vadd.f32 %v4001, %v4049
        %v4051 = vpop.f32.mrb[0].mxu0
        %v4052 = vpop.f32.mrb[0].mxu0
        %v4053 = vadd.f32 %v4004, %v4052
        %v4054 = vpop.f32.mrb[0].mxu0
        %4055 = vmatprep.mubr.bf16.mxu0 %v3702
        %4056 = vmatmul.mubr.bf16.gmra.mrb[0].mxu0 %v3701
        %v4057 = vpop.f32.mrb[0].mxu0
        %v4058 = vadd.f32 %v4009, %v4057
        %v4059 = vpop.f32.mrb[0].mxu0
        %v4060 = vpop.f32.mrb[0].mxu0
        %v4061 = vadd.f32 %v4012, %v4060
        %v4062 = vpop.f32.mrb[0].mxu0
        %4063 = vdwg.mxu0
        %vm4064 = vcmask 26624
        %4065 = vst.msk [vmem:[#allocation4 + $0x5d] sm:$0x7] %vm4064, 0.0
        %vm4066 = vcmask 24576
        %4067 = vst.msk [vmem:[#allocation4] sm:$0x1] %vm4066, %v4050
        %vm4068 = vcmask 25601
        %4069 = vst.msk [vmem:[#allocation4 + $0x2] sm:$0x2] %vm4068, %v4050
        %vm4070 = vcmask 26626
        %4071 = vst.msk [vmem:[#allocation4 + $0x4] sm:$0x4] %vm4070, %v4050
        %vm4072 = vcmask 27651
        %4073 = vst.msk [vmem:[#allocation4 + $0x6] sm:$0x8] %vm4072, %v4050
        %vm4074 = vcmask 28676
        %4075 = vst.msk [vmem:[#allocation4 + $0x8] sm:$0x10] %vm4074, %v4050
        %vm4076 = vcmask 29701
        %4077 = vst.msk [vmem:[#allocation4 + $0xa] sm:$0x20] %vm4076, %v4050
        %vm4078 = vcmask 30726
        %4079 = vst.msk [vmem:[#allocation4 + $0xc] sm:$0x40] %vm4078, %v4050
        %vm4080 = vcmask 31751
        %4081 = vst.msk [vmem:[#allocation4 + $0xe] sm:$0x80] %vm4080, %v4050
        %4082 = vst.msk [vmem:[#allocation4 + $0x18] sm:$0x1] %vm4066, %v4053
        %4083 = vst.msk [vmem:[#allocation4 + $0x1a] sm:$0x2] %vm4068, %v4053
        %4084 = vst.msk [vmem:[#allocation4 + $0x1c] sm:$0x4] %vm4070, %v4053
        %4085 = vst.msk [vmem:[#allocation4 + $0x1e] sm:$0x8] %vm4072, %v4053
        %4086 = vst.msk [vmem:[#allocation4 + $0x20] sm:$0x10] %vm4074, %v4053
        %4087 = vst.msk [vmem:[#allocation4 + $0x22] sm:$0x20] %vm4076, %v4053
        %4088 = vst.msk [vmem:[#allocation4 + $0x24] sm:$0x40] %vm4078, %v4053
        %4089 = vst.msk [vmem:[#allocation4 + $0x26] sm:$0x80] %vm4080, %v4053
        %4090 = vst.msk [vmem:[#allocation4 + $0x30] sm:$0x1] %vm4066, %v4058
        %4091 = vst.msk [vmem:[#allocation4 + $0x32] sm:$0x2] %vm4068, %v4058
        %4092 = vst.msk [vmem:[#allocation4 + $0x34] sm:$0x4] %vm4070, %v4058
        %4093 = vst.msk [vmem:[#allocation4 + $0x36] sm:$0x8] %vm4072, %v4058
        %4094 = vst.msk [vmem:[#allocation4 + $0x38] sm:$0x10] %vm4074, %v4058
        %4095 = vst.msk [vmem:[#allocation4 + $0x3a] sm:$0x20] %vm4076, %v4058
        %4096 = vst.msk [vmem:[#allocation4 + $0x3c] sm:$0x40] %vm4078, %v4058
        %4097 = vst.msk [vmem:[#allocation4 + $0x3e] sm:$0x80] %vm4080, %v4058
        %4098 = vst.msk [vmem:[#allocation4 + $0x48] sm:$0x1] %vm4066, %v4061
        %4099 = vst.msk [vmem:[#allocation4 + $0x4a] sm:$0x2] %vm4068, %v4061
        %4100 = vst.msk [vmem:[#allocation4 + $0x4c] sm:$0x4] %vm4070, %v4061
        %4101 = vst.msk [vmem:[#allocation4 + $0x4e] sm:$0x8] %vm4072, %v4061
        %4102 = vst.msk [vmem:[#allocation4 + $0x50] sm:$0x10] %vm4074, %v4061
        %4103 = vst.msk [vmem:[#allocation4 + $0x52] sm:$0x20] %vm4076, %v4061
        %4104 = vst.msk [vmem:[#allocation4 + $0x54] sm:$0x40] %vm4078, %v4061
        %4106 = vrot.lane.b32.xlu0 %v4050, 124
        %v4107 = vpop.permute.xlu0 %4106
        %4109 = vst.msk [vmem:[#allocation4 + $0x1] sm:$0x1] %vm4066, %v4107
        %4110 = vst.msk [vmem:[#allocation4 + $0x3] sm:$0x2] %vm4068, %v4107
        %4111 = vst.msk [vmem:[#allocation4 + $0x5] sm:$0x4] %vm4070, %v4107
        %4112 = vst.msk [vmem:[#allocation4 + $0x7] sm:$0x8] %vm4072, %v4107
        %4113 = vst.msk [vmem:[#allocation4 + $0x9] sm:$0x10] %vm4074, %v4107
        %4114 = vst.msk [vmem:[#allocation4 + $0xb] sm:$0x20] %vm4076, %v4107
        %4115 = vst.msk [vmem:[#allocation4 + $0xd] sm:$0x40] %vm4078, %v4107
        %4116 = vst.msk [vmem:[#allocation4 + $0xf] sm:$0x80] %vm4080, %v4107
        %4118 = vrot.lane.b32.xlu0 %v4053, 124
        %v4119 = vpop.permute.xlu0 %4118
        %4121 = vst.msk [vmem:[#allocation4 + $0x19] sm:$0x1] %vm4066, %v4119
        %4122 = vst.msk [vmem:[#allocation4 + $0x1b] sm:$0x2] %vm4068, %v4119
        %4123 = vst.msk [vmem:[#allocation4 + $0x1d] sm:$0x4] %vm4070, %v4119
        %4124 = vst.msk [vmem:[#allocation4 + $0x1f] sm:$0x8] %vm4072, %v4119
        %4125 = vst.msk [vmem:[#allocation4 + $0x21] sm:$0x10] %vm4074, %v4119
        %4126 = vst.msk [vmem:[#allocation4 + $0x23] sm:$0x20] %vm4076, %v4119
        %4127 = vst.msk [vmem:[#allocation4 + $0x25] sm:$0x40] %vm4078, %v4119
        %4128 = vst.msk [vmem:[#allocation4 + $0x27] sm:$0x80] %vm4080, %v4119
        %4130 = vrot.lane.b32.xlu0 %v4058, 124
        %v4131 = vpop.permute.xlu0 %4130
        %4133 = vst.msk [vmem:[#allocation4 + $0x31] sm:$0x1] %vm4066, %v4131
        %4134 = vst.msk [vmem:[#allocation4 + $0x33] sm:$0x2] %vm4068, %v4131
        %4135 = vst.msk [vmem:[#allocation4 + $0x35] sm:$0x4] %vm4070, %v4131
        %4136 = vst.msk [vmem:[#allocation4 + $0x37] sm:$0x8] %vm4072, %v4131
        %4137 = vst.msk [vmem:[#allocation4 + $0x39] sm:$0x10] %vm4074, %v4131
        %4138 = vst.msk [vmem:[#allocation4 + $0x3b] sm:$0x20] %vm4076, %v4131
        %4139 = vst.msk [vmem:[#allocation4 + $0x3d] sm:$0x40] %vm4078, %v4131
        %4140 = vst.msk [vmem:[#allocation4 + $0x3f] sm:$0x80] %vm4080, %v4131
        %4142 = vrot.lane.b32.xlu0 %v4061, 124
        %v4143 = vpop.permute.xlu0 %4142
        %4145 = vst.msk [vmem:[#allocation4 + $0x49] sm:$0x1] %vm4066, %v4143
        %4146 = vst.msk [vmem:[#allocation4 + $0x4b] sm:$0x2] %vm4068, %v4143
        %4147 = vst.msk [vmem:[#allocation4 + $0x4d] sm:$0x4] %vm4070, %v4143
        %4148 = vst.msk [vmem:[#allocation4 + $0x4f] sm:$0x8] %vm4072, %v4143
        %4149 = vst.msk [vmem:[#allocation4 + $0x51] sm:$0x10] %vm4074, %v4143
        %4150 = vst.msk [vmem:[#allocation4 + $0x53] sm:$0x20] %vm4076, %v4143
        %4151 = vst.msk [vmem:[#allocation4 + $0x55] sm:$0x40] %vm4078, %v4143
        %4152 = vrot.lane.b32.xlu0 %v4050, 120
        %v4153 = vpop.permute.xlu0 %4152
        %4155 = vst.msk [vmem:[#allocation4 + $0x2] sm:$0x1] %vm4066, %v4153
        %4156 = vst.msk [vmem:[#allocation4 + $0x4] sm:$0x2] %vm4068, %v4153
        %4157 = vst.msk [vmem:[#allocation4 + $0x6] sm:$0x4] %vm4070, %v4153
        %4158 = vst.msk [vmem:[#allocation4 + $0x8] sm:$0x8] %vm4072, %v4153
        %4159 = vst.msk [vmem:[#allocation4 + $0xa] sm:$0x10] %vm4074, %v4153
        %4160 = vst.msk [vmem:[#allocation4 + $0xc] sm:$0x20] %vm4076, %v4153
        %4161 = vst.msk [vmem:[#allocation4 + $0xe] sm:$0x40] %vm4078, %v4153
        %4162 = vst.msk [vmem:[#allocation4 + $0x10] sm:$0x80] %vm4080, %v4153
        %4163 = vrot.lane.b32.xlu0 %v4053, 120
        %v4164 = vpop.permute.xlu0 %4163
        %4166 = vst.msk [vmem:[#allocation4 + $0x1a] sm:$0x1] %vm4066, %v4164
        %4167 = vst.msk [vmem:[#allocation4 + $0x1c] sm:$0x2] %vm4068, %v4164
        %4168 = vst.msk [vmem:[#allocation4 + $0x1e] sm:$0x4] %vm4070, %v4164
        %4169 = vst.msk [vmem:[#allocation4 + $0x20] sm:$0x8] %vm4072, %v4164
        %4170 = vst.msk [vmem:[#allocation4 + $0x22] sm:$0x10] %vm4074, %v4164
        %4171 = vst.msk [vmem:[#allocation4 + $0x24] sm:$0x20] %vm4076, %v4164
        %4172 = vst.msk [vmem:[#allocation4 + $0x26] sm:$0x40] %vm4078, %v4164
        %4173 = vst.msk [vmem:[#allocation4 + $0x28] sm:$0x80] %vm4080, %v4164
        %4174 = vrot.lane.b32.xlu0 %v4058, 120
        %v4175 = vpop.permute.xlu0 %4174
        %4177 = vst.msk [vmem:[#allocation4 + $0x32] sm:$0x1] %vm4066, %v4175
        %4178 = vst.msk [vmem:[#allocation4 + $0x34] sm:$0x2] %vm4068, %v4175
        %4179 = vst.msk [vmem:[#allocation4 + $0x36] sm:$0x4] %vm4070, %v4175
        %4180 = vst.msk [vmem:[#allocation4 + $0x38] sm:$0x8] %vm4072, %v4175
        %4181 = vst.msk [vmem:[#allocation4 + $0x3a] sm:$0x10] %vm4074, %v4175
        %4182 = vst.msk [vmem:[#allocation4 + $0x3c] sm:$0x20] %vm4076, %v4175
        %4183 = vst.msk [vmem:[#allocation4 + $0x3e] sm:$0x40] %vm4078, %v4175
        %4184 = vst.msk [vmem:[#allocation4 + $0x40] sm:$0x80] %vm4080, %v4175
        %4185 = vrot.lane.b32.xlu0 %v4061, 120
        %v4186 = vpop.permute.xlu0 %4185
        %4188 = vst.msk [vmem:[#allocation4 + $0x4a] sm:$0x1] %vm4066, %v4186
        %4189 = vst.msk [vmem:[#allocation4 + $0x4c] sm:$0x2] %vm4068, %v4186
        %4190 = vst.msk [vmem:[#allocation4 + $0x4e] sm:$0x4] %vm4070, %v4186
        %4191 = vst.msk [vmem:[#allocation4 + $0x50] sm:$0x8] %vm4072, %v4186
        %4192 = vst.msk [vmem:[#allocation4 + $0x52] sm:$0x10] %vm4074, %v4186
        %4193 = vst.msk [vmem:[#allocation4 + $0x54] sm:$0x20] %vm4076, %v4186
        %4194 = vst.msk [vmem:[#allocation4 + $0x56] sm:$0x40] %vm4078, %v4186
        %v4195 = vld [vmem:[#allocation4] sm:$0xff]
        %v4196 = vld [vmem:[#allocation4 + $0x8] sm:$0xff]
        %v4197 = vld [vmem:[#allocation4 + $0x10] sm:$0xff]
        %v4198 = vld [vmem:[#allocation4 + $0x18] sm:$0xff]
        %v4199 = vld [vmem:[#allocation4 + $0x20] sm:$0xff]
        %v4200 = vld [vmem:[#allocation4 + $0x28] sm:$0xff]
        %v4201 = vld [vmem:[#allocation4 + $0x30] sm:$0xff]
        %v4202 = vld [vmem:[#allocation4 + $0x38] sm:$0xff]
        %v4203 = vld [vmem:[#allocation4 + $0x40] sm:$0xff]
        %v4204 = vld [vmem:[#allocation4 + $0x48] sm:$0xff]
        %v4205 = vld [vmem:[#allocation4 + $0x50] sm:$0xff]
        %v4206 = vld [vmem:[#allocation4 + $0x58] sm:$0xff]
        %4207 = vxpose.xlu0.b32.start [1/16] %v4195, 128
        %4208 = vxpose.xlu0.b32.cont [2/16] %v4196, 128
        %4209 = vxpose.xlu0.b32.cont [3/16] %v4197, 128
        %4210 = vxpose.xlu0.b32.cont [4/16] %v4198, 128
        %4211 = vxpose.xlu0.b32.cont [5/16] %v4199, 128
        %4212 = vxpose.xlu0.b32.cont [6/16] %v4200, 128
        %4213 = vxpose.xlu0.b32.cont [7/16] %v4201, 128
        %4214 = vxpose.xlu0.b32.cont [8/16] %v4202, 128
        %4215 = vxpose.xlu0.b32.cont [9/16] %v4203, 128
        %4216 = vxpose.xlu0.b32.cont [10/16] %v4204, 128
        %4217 = vxpose.xlu0.b32.cont [11/16] %v4205, 128
        %4218 = vxpose.xlu0.b32.cont [12/16] %v4206, 128
        %4219 = vxpose.xlu0.b32.cont [13/16] 0.0, 128
        %4220 = vxpose.xlu0.b32.cont [14/16] 0.0, 128
        %4221 = vxpose.xlu0.b32.cont [15/16] 0.0, 128
        %4222 = vxpose.xlu0.b32.end [16/16] 0.0, 128
        %v4223 = vpop.trf.xlu0
        %v4224 = vpop.trf.xlu0
        %v4225 = vpop.trf.xlu0
        %v4226 = vpop.trf.xlu0
        %v4227 = vpop.trf.xlu0
        %v4228 = vpop.trf.xlu0
        %v4229 = vpop.trf.xlu0
        %v4230 = vpop.trf.xlu0
        %v4231 = vpop.trf.xlu0
        %v4232 = vpop.trf.xlu0
        %v4233 = vpop.trf.xlu0
        %v4234 = vpop.trf.xlu0
        %v4235 = vpop.trf.xlu0
        %v4236 = vpop.trf.xlu0
        %v4237 = vpop.trf.xlu0
        %v4238 = vpop.trf.xlu0
        %vm4239 = vcmask 781312
        %4240 = vst.msk [vmem:[%s323] sm:$0xf] %vm4239, %v4223
        %s4241 = sand.u32 %s225, 1
        %s4242 = scalar_lea.sflag [#allocation6], %s4241
        %s4243 = sand.u32 %s225, 1
        %s4244 = smul.addr %s4243, 4
        %s4245 = scalar_lea.vmem [#allocation5], %s4244
        // Predicated region
        $region57: #{decoder_forward.1} parent=55 // pred_check
          %p4246 = pneg %p235
        $region58: #{decoder_forward.1} parent=55 // pred_check_branch
          %4248 = sbr.rel (%p4246) target = $region60
        $region59: #{decoder_forward.1} parent=55 // pred_region
          %s4250 = ssub.s32 64, 64
          %4251 = vsyncadd %s4242, %s4250
          %s4252 = smul.addr %s23, 64
          %s4253 = scalar_lea.hbm %s9, %s4252
          %s4255 = sshll.u32 %s4245, 4
          %s4256 = int_to_ptr.vmem [resolvable:$true] %s4255
          %4258 = dma.vmem_to_hbm [thread:$0]  %s4256, 64, %s4253, %s4242
        $region60: #{decoder_forward.1} parent=55 // pred_fallthru
          _
      $region56: #{decoder_forward.1} parent=5 // pred_fallthru
        _
      %p4259 = scmp.le.s32.totalorder 2, %s18
      // Predicated region
      $region61: #{decoder_forward.1} parent=5 // pred_check
        %p4260 = pneg %p4259
      $region62: #{decoder_forward.1} parent=5 // pred_check_branch
        %4262 = sbr.rel (%p4260) target = $region64
      $region63: #{decoder_forward.1} parent=5 // pred_region
        %s4263 = ssub.s32 %s18, 2
        // Predicated region
        $region65: #{decoder_forward.1} parent=63 // pred_check
          %p4264 = pneg %p241
        $region66: #{decoder_forward.1} parent=63 // pred_check_branch
          %4266 = sbr.rel (%p4264) target = $region68
        $region67: #{decoder_forward.1} parent=63 // pred_region
          %s4267 = sand.u32 %s226, 1
          %s4268 = scalar_lea.sflag [#allocation6], %s4267
          %s4269 = sand.u32 %s226, 1
          %s4270 = smul.addr %s4269, 4
          %s4271 = scalar_lea.vmem [#allocation5], %s4270
          %4272 = dma.done %s4268, 64
        $region68: #{decoder_forward.1} parent=63 // pred_fallthru
          _
      $region64: #{decoder_forward.1} parent=5 // pred_fallthru
        _
    $region6: #{decoder_forward.1} parent=1 // loop_footer
      %s22 = sadd.s32 1, %s18
    $region7: #{decoder_forward.1} parent=1 // loop_footer_branch
      %17 = sbr.rel target = $region3
    $region8: #{decoder_forward.1} parent=1 // loop_exit
      _
    %4273 = vsyncpa [#allocation6], 1
    %s4274 = scalar_lea.sflag [#allocation6], 1
    %4275 = vsyncpa %s4274, 1

</llo_original>
